<compile_context>
chip_gen: v6e
topology: v6e:2x2x1
jax: 0.10.0
libtpu: 0.0.40
codegen_flags: <defaults>
</compile_context>

<pallas_src>
import math
import numpy as np
import jax
import jax.numpy as jnp
from jax import lax
from jax.experimental import pallas as pl
from jax.experimental.pallas import tpu as pltpu


# ----------------------------- irreps utilities (O(3), l <= 1) -----------------------------

def irrep_dim(l):
    return 2 * l + 1


def irreps_dim(irreps):
    return sum(mul * irrep_dim(l) for (mul, l, p) in irreps)


def wigner_3j(l1, l2, l3):
    """Real-basis Wigner-3j coefficients with Frobenius norm 1 (e3nn convention), l <= 1."""
    key = (l1, l2, l3)
    if key == (0, 0, 0):
        return np.ones((1, 1, 1), np.float64)
    if key == (1, 1, 0):
        return np.eye(3)[:, :, None] / math.sqrt(3.0)
    if key == (0, 1, 1):
        return np.eye(3)[None, :, :] / math.sqrt(3.0)
    if key == (1, 0, 1):
        return np.eye(3)[:, None, :] / math.sqrt(3.0)
    if key == (1, 1, 1):
        eps = np.zeros((3, 3, 3), np.float64)
        eps[0, 1, 2] = eps[1, 2, 0] = eps[2, 0, 1] = 1.0
        eps[0, 2, 1] = eps[2, 1, 0] = eps[1, 0, 2] = -1.0
        return eps / math.sqrt(6.0)
    # TODO(synk): general-l Wigner 3j (only l<=1 needed for this synthetic config).
    raise NotImplementedError(key)


def fc_paths(irreps1, irreps2, irreps_out):
    """All fully-connected paths (selection rules: parity and triangle inequality)."""
    paths = []
    for i1, (mul1, l1, p1) in enumerate(irreps1):
        for i2, (mul2, l2, p2) in enumerate(irreps2):
            for io, (mulo, lo, po) in enumerate(irreps_out):
                if po == p1 * p2 and abs(l1 - l2) <= lo <= l1 + l2:
                    paths.append((i1, i2, io))
    return paths


def fc_weight_numel(irreps1, irreps2, irreps_out):
    return sum(irreps1[i1][0] * irreps2[i2][0] * irreps_out[io][0]
               for (i1, i2, io) in fc_paths(irreps1, irreps2, irreps_out))


def build_combined_matrix(irreps1, irreps2, irreps_out, weight_flat):
    """Fold shared weights + CG coefficients + normalization into m3[dim1, dim2, dim_out]."""
    def offsets(irreps):
        off, out = 0, []
        for (mul, l, p) in irreps:
            out.append(off)
            off += mul * irrep_dim(l)
        return out, off

    off1, d1_tot = offsets(irreps1)
    off2, d2_tot = offsets(irreps2)
    offo, do_tot = offsets(irreps_out)
    paths = fc_paths(irreps1, irreps2, irreps_out)

    # "element" path normalization: fan-in per output segment is sum of mul1*mul2.
    fan = {}
    for (i1, i2, io) in paths:
        fan[io] = fan.get(io, 0) + irreps1[i1][0] * irreps2[i2][0]

    m3 = np.zeros((d1_tot, d2_tot, do_tot), np.float64)
    woff = 0
    for (i1, i2, io) in paths:
        mul1, l1, _ = irreps1[i1]
        mul2, l2, _ = irreps2[i2]
        mulo, lo, _ = irreps_out[io]
        d1, d2, do = irrep_dim(l1), irrep_dim(l2), irrep_dim(lo)
        n = mul1 * mul2 * mulo
        w = np.asarray(weight_flat[woff:woff + n], np.float64).reshape(mul1, mul2, mulo)
        woff += n
        c = wigner_3j(l1, l2, lo)
        pw = math.sqrt(irrep_dim(lo) / fan[io])  # "component" irrep norm / "element" path norm
        blk = pw * np.einsum('uvw,ijk->uivjwk', w, c).reshape(mul1 * d1, mul2 * d2, mulo * do)
        m3[off1[i1]:off1[i1] + mul1 * d1,
           off2[i2]:off2[i2] + mul2 * d2,
           offo[io]:offo[io] + mulo * do] += blk
    assert woff == len(weight_flat)
    return m3


# ----------------------------------- Pallas TPU kernel --------------------------------------

def fully_connected_tp(x1, x2, a_mat, *, d2, dout, tile_b=None, chunk=128, max_tile_b=8192):
    """out[b, k] = sum_{p,q} x1[b, p] * x2[b, q] * m3[p, q, k], a_mat = m3.reshape(d1, d2*dout).

    Natural (batch, feature) layout end to end; one grid axis over big batch tiles with an
    inner chunk loop so all intermediates stay register-resident.
    """
    B, d1 = x1.shape
    assert x2.shape == (B, d2)
    assert a_mat.shape == (d1, d2 * dout)

    # --- batch tiling -------------------------------------------------------------------
    # Big tiles amortize the ~0.35 us per-grid-step overhead; keep >= 2 grid steps when the
    # batch allows (v7x has 2 TensorCores).  Worst-case VMEM at max_tile_b=8192 is
    # ~3 arrays * 2 buffers * 4 MiB ~= 24 MiB (lane-padded narrow blocks), well under the
    # 48 MiB limit requested below on every generation (v7x physical VMEM is 64 MiB).
    if tile_b is None:
        if B >= 2 * chunk:
            tile_b = min(max_tile_b, max(chunk, (B // 2) // chunk * chunk))
        else:
            tile_b = chunk
    tile_b = max(chunk, (tile_b // chunk) * chunk)
    n_tiles = pl.cdiv(B, tile_b)
    bp = n_tiles * tile_b
    if bp != B:
        # Ragged batch only: one zero-pad pass (avoided whenever tile_b divides B).
        x1 = jnp.pad(x1, ((0, bp - B), (0, 0)))
        x2 = jnp.pad(x2, ((0, bp - B), (0, 0)))
    n_chunks = tile_b // chunk

    def kernel(x1_ref, x2_ref, a_ref, o_ref):
        a = a_ref[...]                                          # (d1, d2*dout), grid-invariant

        def body(c, carry):
            off = pl.multiple_of(c * chunk, chunk)
            x1c = x1_ref[pl.ds(off, chunk), :]                  # (chunk, d1)
            x2c = x2_ref[pl.ds(off, chunk), :]                  # (chunk, d2)
            # One small MXU contraction over the first operand's features.
            t = jnp.dot(x1c, a, preferred_element_type=jnp.float32)   # (chunk, d2*dout) f32
            # Contract the second operand's features on the VPU (d2 is tiny; static slices
            # and a 1-lane broadcast per term -> everything stays in vregs).
            oc = t[:, 0:dout] * x2c[:, 0:1]
            for q in range(1, d2):
                oc = oc + t[:, q * dout:(q + 1) * dout] * x2c[:, q:q + 1]
            o_ref[pl.ds(off, chunk), :] = oc.astype(o_ref.dtype)
            return carry

        lax.fori_loop(0, n_chunks, body, 0, unroll=n_chunks <= 16)

    flops = bp * (2 * d1 * d2 * dout + 2 * d2 * dout)
    bytes_accessed = (x1.dtype.itemsize * bp * (d1 + d2)
                      + x1.dtype.itemsize * bp * dout
                      + 4 * d1 * d2 * dout)

    out = pl.pallas_call(
        kernel,
        out_shape=jax.ShapeDtypeStruct((bp, dout), x1.dtype),
        grid=(n_tiles,),
        in_specs=[
            pl.BlockSpec((tile_b, d1), lambda b: (b, 0)),
            pl.BlockSpec((tile_b, d2), lambda b: (b, 0)),      # true width: no padded q rows over HBM
            # Tiny folded-weight constant; same block every step -> fetched once, stays in VMEM.
            pl.BlockSpec((d1, d2 * dout), lambda b: (0, 0)),
        ],
        out_specs=pl.BlockSpec((tile_b, dout), lambda b: (b, 0)),
        compiler_params=pltpu.CompilerParams(
            dimension_semantics=("parallel",),
            vmem_limit_bytes=48 * 1024 * 1024),
        cost_estimate=pl.CostEstimate(
            flops=flops, transcendentals=0, bytes_accessed=bytes_accessed),
    )(x1, x2, a_mat)

    return out[:B] if bp != B else out


# --------------------------------------- driver ---------------------------------------------

if __name__ == "__main__":
    # irreps_in1 = "2x0e + 2x1o", irreps_in2 = "3x0e + 1x1o", irreps_out = "2x0e + 2x1o"
    irreps_in1 = [(2, 0, +1), (2, 1, -1)]
    irreps_in2 = [(3, 0, +1), (1, 1, -1)]
    irreps_out = [(2, 0, +1), (2, 1, -1)]

    D1 = irreps_dim(irreps_in1)        # 8
    D2 = irreps_dim(irreps_in2)        # 6
    DOUT = irreps_dim(irreps_out)      # 8
    weight_numel = fc_weight_numel(irreps_in1, irreps_in2, irreps_out)  # 32

    key = jax.random.PRNGKey(0)
    kw, k1, k2 = jax.random.split(key, 3)

    # internal_weights=True, shared_weights=True -> weight shape (1, weight_numel)
    weight = jax.random.normal(kw, (1, weight_numel), jnp.float32)

    B = 1024                 # -> 2 parallel grid steps of 512 rows, 4 inner chunks each
    x1 = jax.random.normal(k1, (B, D1), jnp.float32)
    x2 = jax.random.normal(k2, (B, D2), jnp.float32)

    # Host-side fold of shared weights * CG * normalization into the bilinear matrix
    # m3[p, q, k], reshaped to A[p, q*DOUT + k] for the in-kernel contraction.
    m3 = build_combined_matrix(irreps_in1, irreps_in2, irreps_out, np.asarray(weight[0]))
    a_mat = jnp.asarray(m3.reshape(D1, D2 * DOUT), jnp.float32)

    out = fully_connected_tp(x1, x2, a_mat, d2=D2, dout=DOUT)
    out = jax.block_until_ready(out)

    # Reference check against a plain-JAX bilinear contraction over the same folded m3.
    # TODO(synk): one-time numerical cross-check of the weight/CG/normalization fold against
    # the actual cuequivariance_torch module (component irrep norm / element path norm).
    ref = jnp.einsum('bp,bq,pqo->bo', x1, x2, jnp.asarray(m3, jnp.float32))
    assert out.shape == (B, DOUT)
    assert bool(jnp.allclose(out, ref, atol=5e-4, rtol=5e-4))

    print("KERNEL_OK")
</pallas_src>

<mosaic_0001>
module attributes {stable_mosaic.version = 11 : i64} {
  func.func @kernel(%arg0: i32, %arg1: memref<512x8xf32, #tpu.memory_space<vmem>>, %arg2: memref<512x6xf32, #tpu.memory_space<vmem>>, %arg3: memref<8x48xf32, #tpu.memory_space<vmem>>, %arg4: memref<512x8xf32, #tpu.memory_space<vmem>>) attributes {dimension_semantics = [#tpu.dimension_semantics<parallel>], iteration_bounds = array<i64: 2>, scalar_prefetch = 0 : i64, scratch_operands = 0 : i64, tpu.core_type = #tpu.core_type<tc>, window_params = [{transform_indices = @transform_0, window_bounds = array<i64: 512, 8>}, {transform_indices = @transform_1, window_bounds = array<i64: 512, 6>}, {pipeline_mode = #tpu.pipeline_mode<synchronous>, transform_indices = @transform_2, window_bounds = array<i64: 8, 48>}, {transform_indices = @transform_3, window_bounds = array<i64: 512, 8>}]} {
    %c0 = arith.constant 0 : index
    %c0_0 = arith.constant 0 : index
    %0 = vector.load %arg3[%c0, %c0_0] : memref<8x48xf32, #tpu.memory_space<vmem>>, vector<8x48xf32>
    %c0_i32 = arith.constant 0 : i32
    %c128_i32 = arith.constant 128 : i32
    %1 = arith.muli %c0_i32, %c128_i32 : i32
    %2 = tpu.assume_multiple %1, 128 : i32
    %3 = arith.index_cast %2 : i32 to index
    %c0_1 = arith.constant 0 : index
    %4 = vector.load %arg1[%3, %c0_1] : memref<512x8xf32, #tpu.memory_space<vmem>>, vector<128x8xf32>
    %5 = arith.index_cast %2 : i32 to index
    %c0_2 = arith.constant 0 : index
    %6 = vector.load %arg2[%5, %c0_2] : memref<512x6xf32, #tpu.memory_space<vmem>>, vector<128x6xf32>
    %cst = arith.constant dense<0.000000e+00> : vector<128x48xf32>
    %7 = tpu.matmul %4, %0, %cst {dimension_numbers = #tpu.dot_dimension_numbers<[1], [0], [0], [1], [0, 0, 1, 1], [], []>} : vector<128x8xf32>, vector<8x48xf32>, vector<128x48xf32> -> vector<128x48xf32>
    %8 = vector.extract_strided_slice %7 {offsets = [0, 0], sizes = [128, 8], strides = [1, 1]} : vector<128x48xf32> to vector<128x8xf32>
    %9 = vector.extract_strided_slice %6 {offsets = [0, 0], sizes = [128, 1], strides = [1, 1]} : vector<128x6xf32> to vector<128x1xf32>
    %10 = vector.broadcast %9 : vector<128x1xf32> to vector<128x8xf32>
    %11 = arith.mulf %8, %10 : vector<128x8xf32>
    %12 = vector.extract_strided_slice %7 {offsets = [0, 8], sizes = [128, 8], strides = [1, 1]} : vector<128x48xf32> to vector<128x8xf32>
    %13 = vector.extract_strided_slice %6 {offsets = [0, 1], sizes = [128, 1], strides = [1, 1]} : vector<128x6xf32> to vector<128x1xf32>
    %14 = vector.broadcast %13 : vector<128x1xf32> to vector<128x8xf32>
    %15 = arith.mulf %12, %14 : vector<128x8xf32>
    %16 = arith.addf %11, %15 : vector<128x8xf32>
    %17 = vector.extract_strided_slice %7 {offsets = [0, 16], sizes = [128, 8], strides = [1, 1]} : vector<128x48xf32> to vector<128x8xf32>
    %18 = vector.extract_strided_slice %6 {offsets = [0, 2], sizes = [128, 1], strides = [1, 1]} : vector<128x6xf32> to vector<128x1xf32>
    %19 = vector.broadcast %18 : vector<128x1xf32> to vector<128x8xf32>
    %20 = arith.mulf %17, %19 : vector<128x8xf32>
    %21 = arith.addf %16, %20 : vector<128x8xf32>
    %22 = vector.extract_strided_slice %7 {offsets = [0, 24], sizes = [128, 8], strides = [1, 1]} : vector<128x48xf32> to vector<128x8xf32>
    %23 = vector.extract_strided_slice %6 {offsets = [0, 3], sizes = [128, 1], strides = [1, 1]} : vector<128x6xf32> to vector<128x1xf32>
    %24 = vector.broadcast %23 : vector<128x1xf32> to vector<128x8xf32>
    %25 = arith.mulf %22, %24 : vector<128x8xf32>
    %26 = arith.addf %21, %25 : vector<128x8xf32>
    %27 = vector.extract_strided_slice %7 {offsets = [0, 32], sizes = [128, 8], strides = [1, 1]} : vector<128x48xf32> to vector<128x8xf32>
    %28 = vector.extract_strided_slice %6 {offsets = [0, 4], sizes = [128, 1], strides = [1, 1]} : vector<128x6xf32> to vector<128x1xf32>
    %29 = vector.broadcast %28 : vector<128x1xf32> to vector<128x8xf32>
    %30 = arith.mulf %27, %29 : vector<128x8xf32>
    %31 = arith.addf %26, %30 : vector<128x8xf32>
    %32 = vector.extract_strided_slice %7 {offsets = [0, 40], sizes = [128, 8], strides = [1, 1]} : vector<128x48xf32> to vector<128x8xf32>
    %33 = vector.extract_strided_slice %6 {offsets = [0, 5], sizes = [128, 1], strides = [1, 1]} : vector<128x6xf32> to vector<128x1xf32>
    %34 = vector.broadcast %33 : vector<128x1xf32> to vector<128x8xf32>
    %35 = arith.mulf %32, %34 : vector<128x8xf32>
    %36 = arith.addf %31, %35 : vector<128x8xf32>
    %37 = arith.index_cast %2 : i32 to index
    %c0_3 = arith.constant 0 : index
    %38 = vector.load %arg4[%37, %c0_3] : memref<512x8xf32, #tpu.memory_space<vmem>>, vector<128x8xf32>
    tpu.vector_store %arg4[%37, %c0_3], %36 {strides = array<i32>} : memref<512x8xf32, #tpu.memory_space<vmem>>, vector<128x8xf32>,
    %c1_i32 = arith.constant 1 : i32
    %c128_i32_4 = arith.constant 128 : i32
    %39 = arith.muli %c1_i32, %c128_i32_4 : i32
    %40 = tpu.assume_multiple %39, 128 : i32
    %41 = arith.index_cast %40 : i32 to index
    %c0_5 = arith.constant 0 : index
    %42 = vector.load %arg1[%41, %c0_5] : memref<512x8xf32, #tpu.memory_space<vmem>>, vector<128x8xf32>
    %43 = arith.index_cast %40 : i32 to index
    %c0_6 = arith.constant 0 : index
    %44 = vector.load %arg2[%43, %c0_6] : memref<512x6xf32, #tpu.memory_space<vmem>>, vector<128x6xf32>
    %cst_7 = arith.constant dense<0.000000e+00> : vector<128x48xf32>
    %45 = tpu.matmul %42, %0, %cst_7 {dimension_numbers = #tpu.dot_dimension_numbers<[1], [0], [0], [1], [0, 0, 1, 1], [], []>} : vector<128x8xf32>, vector<8x48xf32>, vector<128x48xf32> -> vector<128x48xf32>
    %46 = vector.extract_strided_slice %45 {offsets = [0, 0], sizes = [128, 8], strides = [1, 1]} : vector<128x48xf32> to vector<128x8xf32>
    %47 = vector.extract_strided_slice %44 {offsets = [0, 0], sizes = [128, 1], strides = [1, 1]} : vector<128x6xf32> to vector<128x1xf32>
    %48 = vector.broadcast %47 : vector<128x1xf32> to vector<128x8xf32>
    %49 = arith.mulf %46, %48 : vector<128x8xf32>
    %50 = vector.extract_strided_slice %45 {offsets = [0, 8], sizes = [128, 8], strides = [1, 1]} : vector<128x48xf32> to vector<128x8xf32>
    %51 = vector.extract_strided_slice %44 {offsets = [0, 1], sizes = [128, 1], strides = [1, 1]} : vector<128x6xf32> to vector<128x1xf32>
    %52 = vector.broadcast %51 : vector<128x1xf32> to vector<128x8xf32>
    %53 = arith.mulf %50, %52 : vector<128x8xf32>
    %54 = arith.addf %49, %53 : vector<128x8xf32>
    %55 = vector.extract_strided_slice %45 {offsets = [0, 16], sizes = [128, 8], strides = [1, 1]} : vector<128x48xf32> to vector<128x8xf32>
    %56 = vector.extract_strided_slice %44 {offsets = [0, 2], sizes = [128, 1], strides = [1, 1]} : vector<128x6xf32> to vector<128x1xf32>
    %57 = vector.broadcast %56 : vector<128x1xf32> to vector<128x8xf32>
    %58 = arith.mulf %55, %57 : vector<128x8xf32>
    %59 = arith.addf %54, %58 : vector<128x8xf32>
    %60 = vector.extract_strided_slice %45 {offsets = [0, 24], sizes = [128, 8], strides = [1, 1]} : vector<128x48xf32> to vector<128x8xf32>
    %61 = vector.extract_strided_slice %44 {offsets = [0, 3], sizes = [128, 1], strides = [1, 1]} : vector<128x6xf32> to vector<128x1xf32>
    %62 = vector.broadcast %61 : vector<128x1xf32> to vector<128x8xf32>
    %63 = arith.mulf %60, %62 : vector<128x8xf32>
    %64 = arith.addf %59, %63 : vector<128x8xf32>
    %65 = vector.extract_strided_slice %45 {offsets = [0, 32], sizes = [128, 8], strides = [1, 1]} : vector<128x48xf32> to vector<128x8xf32>
    %66 = vector.extract_strided_slice %44 {offsets = [0, 4], sizes = [128, 1], strides = [1, 1]} : vector<128x6xf32> to vector<128x1xf32>
    %67 = vector.broadcast %66 : vector<128x1xf32> to vector<128x8xf32>
    %68 = arith.mulf %65, %67 : vector<128x8xf32>
    %69 = arith.addf %64, %68 : vector<128x8xf32>
    %70 = vector.extract_strided_slice %45 {offsets = [0, 40], sizes = [128, 8], strides = [1, 1]} : vector<128x48xf32> to vector<128x8xf32>
    %71 = vector.extract_strided_slice %44 {offsets = [0, 5], sizes = [128, 1], strides = [1, 1]} : vector<128x6xf32> to vector<128x1xf32>
    %72 = vector.broadcast %71 : vector<128x1xf32> to vector<128x8xf32>
    %73 = arith.mulf %70, %72 : vector<128x8xf32>
    %74 = arith.addf %69, %73 : vector<128x8xf32>
    %75 = arith.index_cast %40 : i32 to index
    %c0_8 = arith.constant 0 : index
    %76 = vector.load %arg4[%75, %c0_8] : memref<512x8xf32, #tpu.memory_space<vmem>>, vector<128x8xf32>
    tpu.vector_store %arg4[%75, %c0_8], %74 {strides = array<i32>} : memref<512x8xf32, #tpu.memory_space<vmem>>, vector<128x8xf32>,
    %c2_i32 = arith.constant 2 : i32
    %c128_i32_9 = arith.constant 128 : i32
    %77 = arith.muli %c2_i32, %c128_i32_9 : i32
    %78 = tpu.assume_multiple %77, 128 : i32
    %79 = arith.index_cast %78 : i32 to index
    %c0_10 = arith.constant 0 : index
    %80 = vector.load %arg1[%79, %c0_10] : memref<512x8xf32, #tpu.memory_space<vmem>>, vector<128x8xf32>
    %81 = arith.index_cast %78 : i32 to index
    %c0_11 = arith.constant 0 : index
    %82 = vector.load %arg2[%81, %c0_11] : memref<512x6xf32, #tpu.memory_space<vmem>>, vector<128x6xf32>
    %cst_12 = arith.constant dense<0.000000e+00> : vector<128x48xf32>
    %83 = tpu.matmul %80, %0, %cst_12 {dimension_numbers = #tpu.dot_dimension_numbers<[1], [0], [0], [1], [0, 0, 1, 1], [], []>} : vector<128x8xf32>, vector<8x48xf32>, vector<128x48xf32> -> vector<128x48xf32>
    %84 = vector.extract_strided_slice %83 {offsets = [0, 0], sizes = [128, 8], strides = [1, 1]} : vector<128x48xf32> to vector<128x8xf32>
    %85 = vector.extract_strided_slice %82 {offsets = [0, 0], sizes = [128, 1], strides = [1, 1]} : vector<128x6xf32> to vector<128x1xf32>
    %86 = vector.broadcast %85 : vector<128x1xf32> to vector<128x8xf32>
    %87 = arith.mulf %84, %86 : vector<128x8xf32>
    %88 = vector.extract_strided_slice %83 {offsets = [0, 8], sizes = [128, 8], strides = [1, 1]} : vector<128x48xf32> to vector<128x8xf32>
    %89 = vector.extract_strided_slice %82 {offsets = [0, 1], sizes = [128, 1], strides = [1, 1]} : vector<128x6xf32> to vector<128x1xf32>
    %90 = vector.broadcast %89 : vector<128x1xf32> to vector<128x8xf32>
    %91 = arith.mulf %88, %90 : vector<128x8xf32>
    %92 = arith.addf %87, %91 : vector<128x8xf32>
    %93 = vector.extract_strided_slice %83 {offsets = [0, 16], sizes = [128, 8], strides = [1, 1]} : vector<128x48xf32> to vector<128x8xf32>
    %94 = vector.extract_strided_slice %82 {offsets = [0, 2], sizes = [128, 1], strides = [1, 1]} : vector<128x6xf32> to vector<128x1xf32>
    %95 = vector.broadcast %94 : vector<128x1xf32> to vector<128x8xf32>
    %96 = arith.mulf %93, %95 : vector<128x8xf32>
    %97 = arith.addf %92, %96 : vector<128x8xf32>
    %98 = vector.extract_strided_slice %83 {offsets = [0, 24], sizes = [128, 8], strides = [1, 1]} : vector<128x48xf32> to vector<128x8xf32>
    %99 = vector.extract_strided_slice %82 {offsets = [0, 3], sizes = [128, 1], strides = [1, 1]} : vector<128x6xf32> to vector<128x1xf32>
    %100 = vector.broadcast %99 : vector<128x1xf32> to vector<128x8xf32>
    %101 = arith.mulf %98, %100 : vector<128x8xf32>
    %102 = arith.addf %97, %101 : vector<128x8xf32>
    %103 = vector.extract_strided_slice %83 {offsets = [0, 32], sizes = [128, 8], strides = [1, 1]} : vector<128x48xf32> to vector<128x8xf32>
    %104 = vector.extract_strided_slice %82 {offsets = [0, 4], sizes = [128, 1], strides = [1, 1]} : vector<128x6xf32> to vector<128x1xf32>
    %105 = vector.broadcast %104 : vector<128x1xf32> to vector<128x8xf32>
    %106 = arith.mulf %103, %105 : vector<128x8xf32>
    %107 = arith.addf %102, %106 : vector<128x8xf32>
    %108 = vector.extract_strided_slice %83 {offsets = [0, 40], sizes = [128, 8], strides = [1, 1]} : vector<128x48xf32> to vector<128x8xf32>
    %109 = vector.extract_strided_slice %82 {offsets = [0, 5], sizes = [128, 1], strides = [1, 1]} : vector<128x6xf32> to vector<128x1xf32>
    %110 = vector.broadcast %109 : vector<128x1xf32> to vector<128x8xf32>
    %111 = arith.mulf %108, %110 : vector<128x8xf32>
    %112 = arith.addf %107, %111 : vector<128x8xf32>
    %113 = arith.index_cast %78 : i32 to index
    %c0_13 = arith.constant 0 : index
    %114 = vector.load %arg4[%113, %c0_13] : memref<512x8xf32, #tpu.memory_space<vmem>>, vector<128x8xf32>
    tpu.vector_store %arg4[%113, %c0_13], %112 {strides = array<i32>} : memref<512x8xf32, #tpu.memory_space<vmem>>, vector<128x8xf32>,
    %c3_i32 = arith.constant 3 : i32
    %c128_i32_14 = arith.constant 128 : i32
    %115 = arith.muli %c3_i32, %c128_i32_14 : i32
    %116 = tpu.assume_multiple %115, 128 : i32
    %117 = arith.index_cast %116 : i32 to index
    %c0_15 = arith.constant 0 : index
    %118 = vector.load %arg1[%117, %c0_15] : memref<512x8xf32, #tpu.memory_space<vmem>>, vector<128x8xf32>
    %119 = arith.index_cast %116 : i32 to index
    %c0_16 = arith.constant 0 : index
    %120 = vector.load %arg2[%119, %c0_16] : memref<512x6xf32, #tpu.memory_space<vmem>>, vector<128x6xf32>
    %cst_17 = arith.constant dense<0.000000e+00> : vector<128x48xf32>
    %121 = tpu.matmul %118, %0, %cst_17 {dimension_numbers = #tpu.dot_dimension_numbers<[1], [0], [0], [1], [0, 0, 1, 1], [], []>} : vector<128x8xf32>, vector<8x48xf32>, vector<128x48xf32> -> vector<128x48xf32>
    %122 = vector.extract_strided_slice %121 {offsets = [0, 0], sizes = [128, 8], strides = [1, 1]} : vector<128x48xf32> to vector<128x8xf32>
    %123 = vector.extract_strided_slice %120 {offsets = [0, 0], sizes = [128, 1], strides = [1, 1]} : vector<128x6xf32> to vector<128x1xf32>
    %124 = vector.broadcast %123 : vector<128x1xf32> to vector<128x8xf32>
    %125 = arith.mulf %122, %124 : vector<128x8xf32>
    %126 = vector.extract_strided_slice %121 {offsets = [0, 8], sizes = [128, 8], strides = [1, 1]} : vector<128x48xf32> to vector<128x8xf32>
    %127 = vector.extract_strided_slice %120 {offsets = [0, 1], sizes = [128, 1], strides = [1, 1]} : vector<128x6xf32> to vector<128x1xf32>
    %128 = vector.broadcast %127 : vector<128x1xf32> to vector<128x8xf32>
    %129 = arith.mulf %126, %128 : vector<128x8xf32>
    %130 = arith.addf %125, %129 : vector<128x8xf32>
    %131 = vector.extract_strided_slice %121 {offsets = [0, 16], sizes = [128, 8], strides = [1, 1]} : vector<128x48xf32> to vector<128x8xf32>
    %132 = vector.extract_strided_slice %120 {offsets = [0, 2], sizes = [128, 1], strides = [1, 1]} : vector<128x6xf32> to vector<128x1xf32>
    %133 = vector.broadcast %132 : vector<128x1xf32> to vector<128x8xf32>
    %134 = arith.mulf %131, %133 : vector<128x8xf32>
    %135 = arith.addf %130, %134 : vector<128x8xf32>
    %136 = vector.extract_strided_slice %121 {offsets = [0, 24], sizes = [128, 8], strides = [1, 1]} : vector<128x48xf32> to vector<128x8xf32>
    %137 = vector.extract_strided_slice %120 {offsets = [0, 3], sizes = [128, 1], strides = [1, 1]} : vector<128x6xf32> to vector<128x1xf32>
    %138 = vector.broadcast %137 : vector<128x1xf32> to vector<128x8xf32>
    %139 = arith.mulf %136, %138 : vector<128x8xf32>
    %140 = arith.addf %135, %139 : vector<128x8xf32>
    %141 = vector.extract_strided_slice %121 {offsets = [0, 32], sizes = [128, 8], strides = [1, 1]} : vector<128x48xf32> to vector<128x8xf32>
    %142 = vector.extract_strided_slice %120 {offsets = [0, 4], sizes = [128, 1], strides = [1, 1]} : vector<128x6xf32> to vector<128x1xf32>
    %143 = vector.broadcast %142 : vector<128x1xf32> to vector<128x8xf32>
    %144 = arith.mulf %141, %143 : vector<128x8xf32>
    %145 = arith.addf %140, %144 : vector<128x8xf32>
    %146 = vector.extract_strided_slice %121 {offsets = [0, 40], sizes = [128, 8], strides = [1, 1]} : vector<128x48xf32> to vector<128x8xf32>
    %147 = vector.extract_strided_slice %120 {offsets = [0, 5], sizes = [128, 1], strides = [1, 1]} : vector<128x6xf32> to vector<128x1xf32>
    %148 = vector.broadcast %147 : vector<128x1xf32> to vector<128x8xf32>
    %149 = arith.mulf %146, %148 : vector<128x8xf32>
    %150 = arith.addf %145, %149 : vector<128x8xf32>
    %151 = arith.index_cast %116 : i32 to index
    %c0_18 = arith.constant 0 : index
    %152 = vector.load %arg4[%151, %c0_18] : memref<512x8xf32, #tpu.memory_space<vmem>>, vector<128x8xf32>
    tpu.vector_store %arg4[%151, %c0_18], %150 {strides = array<i32>} : memref<512x8xf32, #tpu.memory_space<vmem>>, vector<128x8xf32>,
    %c4_i32 = arith.constant 4 : i32
    return
  }
  func.func @transform_0(%arg0: i32) -> (i32, i32) {
    %c0_i32 = arith.constant 0 : i32
    %c0_i32_0 = arith.constant 0 : i32
    return %arg0, %c0_i32 : i32, i32
  }
  func.func @transform_1(%arg0: i32) -> (i32, i32) {
    %c0_i32 = arith.constant 0 : i32
    %c0_i32_0 = arith.constant 0 : i32
    return %arg0, %c0_i32 : i32, i32
  }
  func.func @transform_2(%arg0: i32) -> (i32, i32) {
    %c0_i32 = arith.constant 0 : i32
    %c0_i32_0 = arith.constant 0 : i32
    %c0_i32_1 = arith.constant 0 : i32
    return %c0_i32, %c0_i32_0 : i32, i32
  }
  func.func @transform_3(%arg0: i32) -> (i32, i32) {
    %c0_i32 = arith.constant 0 : i32
    %c0_i32_0 = arith.constant 0 : i32
    return %arg0, %c0_i32 : i32, i32
  }
}

</mosaic_0001>

<llo_original>
// kernel: tpu_custom_call.1
$region0: #{tpu_custom_call.1}
  #allocation0 [shape = 'u32[]', space=smem, size = 0x4, offset = 0x4, fixed_abs, tag = 'smem constant byte address 0x4 - core index']
  #allocation1 [shape = 'u32[144,128]{1,0:T(1,128)}', space=vmem, size = 0x12000, scoped, tag = 'internal scratch']
  %s0 = inlined_call_operand.vmem [shape: f32[1024,8], index: 0, kind: input, shape index: {}]
  %s1 = inlined_call_operand.vmem [shape: f32[1024,6], index: 1, kind: input, shape index: {}]
  %s2 = inlined_call_operand.vmem [shape: f32[8,48], index: 2, kind: input, shape index: {}]
  %s3 = inlined_call_operand.vmem [shape: f32[1024,8], index: 3, kind: output, shape index: {}]
  %s4 = sld [smem:[#allocation0]]
  $region45: #{tpu_custom_call.1} parent=0
    _
  %s6 = ssub.s32 1, %s4
  %s7 = scalar_select 0, %s6, %s4
  loop: start=0, step=1, limit=4
  $region2: #{tpu_custom_call.1} parent=0 // loop_pre_header
    _
  $region3: #{tpu_custom_call.1} parent=0 // loop_header
    %s9 = sphi 0, %s13
    %p10 = scmp.ge.s32.totalorder %s9, 4
    %s19 = sphi 0, %s21
    %s22 = sphi 0, %s19
    %s23 = sphi 0, %s22
    %s39 = sphi 0, %s23
    %s45 = sphi 0, %s47
    %s48 = sphi 0, %s45
    %s49 = sphi 0, %s48
    %s65 = sphi 0, %s49
    %s69 = sphi 0, %s69
    %s71 = sphi 0, %s69
    %s72 = sphi 0, %s71
    %s86 = sphi 0, %s72
    %s92 = sphi 0, %s94
    %s95 = sphi 0, %s92
    %s96 = sphi 0, %s95
    %s112 = sphi 0, %s96
  $region4: #{tpu_custom_call.1} parent=0 // loop_header_branch
    %12 = sbr.rel (%p10) target = $region8
  $region5: #{tpu_custom_call.1} parent=0 // loop_body
    %s14 = ssub.s32 %s9, 1
    %s15 = ssub.s32 %s9, 2
    %s16 = sadd.s32 %s9, 1
    %s17 = ssub.s32 %s9, %s16
    %p18 = scmp.eq.s32.totalorder %s17, 0
    %s20 = sadd.s32 %s19, 1
    %s21 = scalar_select %p18, %s19, %s20
    %p24 = pneg %p18
    %p25 = scmp.eq.s32.totalorder %s9, 1
    %p26 = por %p24, %p25
    %p27 = scmp.ne.s32.totalorder %s19, %s22
    %p28 = scmp.eq.s32.totalorder %s9, 0
    %p29 = por %p27, %p28
    %p30 = scmp.ne.s32.totalorder %s19, %s22
    %p31 = scmp.eq.s32.totalorder %s14, 1
    %p32 = por %p30, %p31
    %p33 = scmp.ne.s32.totalorder %s22, %s23
    %p34 = scmp.eq.s32.totalorder %s14, 0
    %p35 = por %p33, %p34
    %p36 = scmp.ne.s32.totalorder %s22, %s23
    %p37 = scmp.eq.s32.totalorder %s15, 1
    %p38 = por %p36, %p37
    %p40 = scmp.ne.s32.totalorder %s23, %s39
    %p41 = scmp.eq.s32.totalorder %s15, 0
    %p42 = por %p40, %p41
    %s43 = ssub.s32 %s9, %s16
    %p44 = scmp.eq.s32.totalorder %s43, 0
    %s46 = sadd.s32 %s45, 1
    %s47 = scalar_select %p44, %s45, %s46
    %p50 = pneg %p44
    %p51 = scmp.eq.s32.totalorder %s9, 1
    %p52 = por %p50, %p51
    %p53 = scmp.ne.s32.totalorder %s45, %s48
    %p54 = scmp.eq.s32.totalorder %s9, 0
    %p55 = por %p53, %p54
    %p56 = scmp.ne.s32.totalorder %s45, %s48
    %p57 = scmp.eq.s32.totalorder %s14, 1
    %p58 = por %p56, %p57
    %p59 = scmp.ne.s32.totalorder %s48, %s49
    %p60 = scmp.eq.s32.totalorder %s14, 0
    %p61 = por %p59, %p60
    %p62 = scmp.ne.s32.totalorder %s48, %s49
    %p63 = scmp.eq.s32.totalorder %s15, 1
    %p64 = por %p62, %p63
    %p66 = scmp.ne.s32.totalorder %s49, %s65
    %p67 = scmp.eq.s32.totalorder %s15, 0
    %p68 = por %p66, %p67
    %s70 = sadd.s32 %s69, 1
    %p73 = scmp.eq.s32.totalorder %s9, 1
    %p74 = scmp.ne.s32.totalorder %s69, %s71
    %p75 = scmp.eq.s32.totalorder %s9, 0
    %p76 = por %p74, %p75
    %p77 = scmp.ne.s32.totalorder %s69, %s71
    %p78 = scmp.eq.s32.totalorder %s14, 1
    %p79 = por %p77, %p78
    %p80 = scmp.ne.s32.totalorder %s71, %s72
    %p81 = scmp.eq.s32.totalorder %s14, 0
    %p82 = por %p80, %p81
    %p83 = scmp.ne.s32.totalorder %s71, %s72
    %p84 = scmp.eq.s32.totalorder %s15, 1
    %p85 = por %p83, %p84
    %p87 = scmp.ne.s32.totalorder %s72, %s86
    %p88 = scmp.eq.s32.totalorder %s15, 0
    %p89 = por %p87, %p88
    %s90 = ssub.s32 %s9, %s16
    %p91 = scmp.eq.s32.totalorder %s90, 0
    %s93 = sadd.s32 %s92, 1
    %s94 = scalar_select %p91, %s92, %s93
    %p97 = pneg %p91
    %p98 = scmp.eq.s32.totalorder %s9, 1
    %p99 = por %p97, %p98
    %p100 = scmp.ne.s32.totalorder %s92, %s95
    %p101 = scmp.eq.s32.totalorder %s9, 0
    %p102 = por %p100, %p101
    %p103 = scmp.ne.s32.totalorder %s92, %s95
    %p104 = scmp.eq.s32.totalorder %s14, 1
    %p105 = por %p103, %p104
    %p106 = scmp.ne.s32.totalorder %s95, %s96
    %p107 = scmp.eq.s32.totalorder %s14, 0
    %p108 = por %p106, %p107
    %p109 = scmp.ne.s32.totalorder %s95, %s96
    %p110 = scmp.eq.s32.totalorder %s15, 1
    %p111 = por %p109, %p110
    %p113 = scmp.ne.s32.totalorder %s96, %s112
    %p114 = scmp.eq.s32.totalorder %s15, 0
    %p115 = por %p113, %p114
    %p116 = scmp.le.s32.totalorder 1, %s9
    %p117 = scmp.lt.s32.totalorder %s9, 3
    %p118 = pnand %p116, %p117
    %p119 = pneg %p118
    // Predicated region
    $region9: #{tpu_custom_call.1} parent=5 // pred_check
      _
    $region10: #{tpu_custom_call.1} parent=5 // pred_check_branch
      %121 = sbr.rel (%p118) target = $region12
    $region11: #{tpu_custom_call.1} parent=5 // pred_region
      %s122 = ssub.s32 %s9, 1
      // Predicated region
      $region13: #{tpu_custom_call.1} parent=11 // pred_check
        %p123 = pneg %p82
      $region14: #{tpu_custom_call.1} parent=11 // pred_check_branch
        %125 = sbr.rel (%p123) target = $region16
      $region15: #{tpu_custom_call.1} parent=11 // pred_region
        _
      $region16: #{tpu_custom_call.1} parent=11 // pred_fallthru
        _
    $region12: #{tpu_custom_call.1} parent=5 // pred_fallthru
      _
    %p126 = scmp.lt.s32.totalorder %s9, 2
    // Predicated region
    $region17: #{tpu_custom_call.1} parent=5 // pred_check
      %p127 = pneg %p126
    $region18: #{tpu_custom_call.1} parent=5 // pred_check_branch
      %129 = sbr.rel (%p127) target = $region20
    $region19: #{tpu_custom_call.1} parent=5 // pred_region
      // Predicated region
      $region21: #{tpu_custom_call.1} parent=19 // pred_check
        %p130 = pneg %p29
      $region22: #{tpu_custom_call.1} parent=19 // pred_check_branch
        %132 = sbr.rel (%p130) target = $region24
      $region23: #{tpu_custom_call.1} parent=19 // pred_region
        %s133 = smul.u32 64, %s9
        %p134 = scmp.lt.s32.totalorder %s133, 127
        %s135 = scalar_select %p134, %s133, 127
        %s136 = smul.addr %s135, 8
        %s137 = scalar_lea.vmem %s0, %s136
        %s138 = smul.u32 64, %s9
      $region24: #{tpu_custom_call.1} parent=19 // pred_fallthru
        _
      // Predicated region
      $region25: #{tpu_custom_call.1} parent=19 // pred_check
        %p139 = pneg %p55
      $region26: #{tpu_custom_call.1} parent=19 // pred_check_branch
        %141 = sbr.rel (%p139) target = $region28
      $region27: #{tpu_custom_call.1} parent=19 // pred_region
        %s142 = smul.u32 64, %s9
        %p143 = scmp.lt.s32.totalorder %s142, 127
        %s144 = scalar_select %p143, %s142, 127
        %s145 = smul.addr %s144, 8
        %s146 = scalar_lea.vmem %s1, %s145
        %s147 = smul.u32 64, %s9
      $region28: #{tpu_custom_call.1} parent=19 // pred_fallthru
        _
    $region20: #{tpu_custom_call.1} parent=5 // pred_fallthru
      _
    %p148 = scmp.le.s32.totalorder 1, %s9
    %p149 = scmp.lt.s32.totalorder %s9, 3
    %p150 = pnand %p148, %p149
    %p151 = pneg %p150
    // Predicated region
    $region29: #{tpu_custom_call.1} parent=5 // pred_check
      _
    $region30: #{tpu_custom_call.1} parent=5 // pred_check_branch
      %153 = sbr.rel (%p150) target = $region32
    $region31: #{tpu_custom_call.1} parent=5 // pred_region
      %s154 = ssub.s32 %s9, 1
      %s155 = smul.u32 64, %s14
      %p156 = scmp.lt.s32.totalorder %s155, 127
      %s157 = scalar_select %p156, %s155, 127
      %s158 = smul.addr %s157, 8
      %s159 = scalar_lea.vmem %s0, %s158
      %p160 = pneg %p35
      %p161 = pneg %p32
      %s162 = smul.u32 64, %s14
      %p163 = scmp.lt.s32.totalorder %s162, 127
      %s164 = scalar_select %p163, %s162, 127
      %s165 = smul.addr %s164, 8
      %s166 = scalar_lea.vmem %s1, %s165
      %p167 = pneg %p61
      %p168 = pneg %p58
      %p169 = pneg %p82
      %p170 = pneg %p79
      %p171 = pneg %p108
      %p172 = pneg %p105
      %s173 = smul.u32 64, %s14
      %p174 = scmp.lt.s32.totalorder %s173, 127
      %s175 = scalar_select %p174, %s173, 127
      %s176 = smul.addr %s175, 8
      %s177 = scalar_lea.vmem %s3, %s176
      %s178 = smul.u32 64, %s14
      %p179 = scmp.lt.s32.totalorder %s178, 127
      %s180 = scalar_select %p179, %s178, 127
      %s181 = smul.addr %s180, 8
      %s182 = scalar_lea.vmem %s0, %s181
      %s183 = smul.u32 64, %s14
      %s184 = smul.u32 64, %s14
      %p185 = scmp.lt.s32.totalorder %s184, 127
      %s186 = scalar_select %p185, %s184, 127
      %s187 = smul.addr %s186, 8
      %s188 = scalar_lea.vmem %s1, %s187
      %s189 = smul.u32 64, %s14
      %s190 = smul.u32 64, %s14
      %p191 = scmp.lt.s32.totalorder %s190, 127
      %s192 = scalar_select %p191, %s190, 127
      %s193 = smul.addr %s192, 8
      %s194 = scalar_lea.vmem %s3, %s193
      %s195 = smul.u32 64, %s14
      %v196 = vld [vmem:[%s2] sm:$0xff]
      %v197 = vld [vmem:[%s182] sm:$0xff]
      %v198 = vld [vmem:[%s182 + $0x8] sm:$0xff]
      %v199 = vld [vmem:[%s182 + $0x10] sm:$0xff]
      %v200 = vld [vmem:[%s182 + $0x18] sm:$0xff]
      %v201 = vld [vmem:[%s182 + $0x20] sm:$0xff]
      %v202 = vld [vmem:[%s182 + $0x28] sm:$0xff]
      %v203 = vld [vmem:[%s182 + $0x30] sm:$0xff]
      %v204 = vld [vmem:[%s182 + $0x38] sm:$0xff]
      %v205 = vld [vmem:[%s182 + $0x40] sm:$0xff]
      %v206 = vld [vmem:[%s182 + $0x48] sm:$0xff]
      %v207 = vld [vmem:[%s182 + $0x50] sm:$0xff]
      %v208 = vld [vmem:[%s182 + $0x58] sm:$0xff]
      %v209 = vld [vmem:[%s182 + $0x60] sm:$0xff]
      %v210 = vld [vmem:[%s182 + $0x68] sm:$0xff]
      %v211 = vld [vmem:[%s182 + $0x70] sm:$0xff]
      %v212 = vld [vmem:[%s182 + $0x78] sm:$0xff]
      %v213 = vld [vmem:[%s188] sm:$0xff]
      %v214 = vld [vmem:[%s188 + $0x8] sm:$0xff]
      %v215 = vld [vmem:[%s188 + $0x10] sm:$0xff]
      %v216 = vld [vmem:[%s188 + $0x18] sm:$0xff]
      %v217 = vld [vmem:[%s188 + $0x20] sm:$0xff]
      %v218 = vld [vmem:[%s188 + $0x28] sm:$0xff]
      %v219 = vld [vmem:[%s188 + $0x30] sm:$0xff]
      %v220 = vld [vmem:[%s188 + $0x38] sm:$0xff]
      %v221 = vld [vmem:[%s188 + $0x40] sm:$0xff]
      %v222 = vld [vmem:[%s188 + $0x48] sm:$0xff]
      %v223 = vld [vmem:[%s188 + $0x50] sm:$0xff]
      %v224 = vld [vmem:[%s188 + $0x58] sm:$0xff]
      %v225 = vld [vmem:[%s188 + $0x60] sm:$0xff]
      %v226 = vld [vmem:[%s188 + $0x68] sm:$0xff]
      %v227 = vld [vmem:[%s188 + $0x70] sm:$0xff]
      %v228 = vld [vmem:[%s188 + $0x78] sm:$0xff]
      %vm229 = vcmask 64512
      %v231 = vsel %vm229, %v197, 0
      %v234 = vsel %vm229, %v198, 0
      %v237 = vsel %vm229, %v199, 0
      %v240 = vsel %vm229, %v200, 0
      %v243 = vsel %vm229, %v201, 0
      %v246 = vsel %vm229, %v202, 0
      %v249 = vsel %vm229, %v203, 0
      %v252 = vsel %vm229, %v204, 0
      %v255 = vsel %vm229, %v205, 0
      %v258 = vsel %vm229, %v206, 0
      %v261 = vsel %vm229, %v207, 0
      %v264 = vsel %vm229, %v208, 0
      %v267 = vsel %vm229, %v209, 0
      %v270 = vsel %vm229, %v210, 0
      %v273 = vsel %vm229, %v211, 0
      %v276 = vsel %vm229, %v212, 0
      %278 = vmatprep.subr.mxu0 0.0
      %279 = vmatpush1.msra.mxu0 0.0
      %280 = vmatprep.subr.mxu0 0.0
      %281 = vmatpush1.msra.mxu0 0.0
      %282 = vmatprep.subr.mxu0 0.0
      %283 = vmatpush1.msra.mxu0 0.0
      %284 = vmatprep.subr.mxu0 0.0
      %285 = vmatpush1.msra.mxu0 0.0
      %286 = vmatprep.subr.mxu0 0.0
      %287 = vmatpush1.msra.mxu0 0.0
      %288 = vmatprep.subr.mxu0 0.0
      %289 = vmatpush1.msra.mxu0 0.0
      %290 = vmatprep.subr.mxu0 0.0
      %291 = vmatpush1.msra.mxu0 0.0
      %292 = vmatprep.subr.mxu0 0.0
      %293 = vmatpush1.msra.mxu0 0.0
      %294 = vmatprep.subr.mxu0 0.0
      %295 = vmatpush1.msra.mxu0 0.0
      %296 = vmatprep.subr.mxu0 0.0
      %297 = vmatpush1.msra.mxu0 0.0
      %298 = vmatprep.subr.mxu0 0.0
      %299 = vmatpush1.msra.mxu0 0.0
      %300 = vmatprep.subr.mxu0 0.0
      %301 = vmatpush1.msra.mxu0 0.0
      %302 = vmatprep.subr.mxu0 0.0
      %303 = vmatpush1.msra.mxu0 0.0
      %304 = vmatprep.subr.mxu0 0.0
      %305 = vmatpush1.msra.mxu0 0.0
      %306 = vmatprep.subr.mxu0 0.0
      %307 = vmatpush1.msra.mxu0 0.0
      %308 = vmatprep.subr.mxu0 0.0
      %309 = vmatpush1.msra.mxu0 %v196
      %310 = vmatprep.subr.mxu0 0.0
      %311 = vmatpush2.msra.mxu0 0.0
      %312 = vmatprep.subr.mxu0 0.0
      %313 = vmatpush2.msra.mxu0 0.0
      %314 = vmatprep.subr.mxu0 0.0
      %315 = vmatpush2.msra.mxu0 0.0
      %316 = vmatprep.subr.mxu0 0.0
      %317 = vmatpush2.msra.mxu0 0.0
      %318 = vmatprep.subr.mxu0 0.0
      %319 = vmatpush2.msra.mxu0 0.0
      %320 = vmatprep.subr.mxu0 0.0
      %321 = vmatpush2.msra.mxu0 0.0
      %322 = vmatprep.subr.mxu0 0.0
      %323 = vmatpush2.msra.mxu0 0.0
      %324 = vmatprep.subr.mxu0 0.0
      %325 = vmatpush2.msra.mxu0 0.0
      %326 = vmatprep.subr.mxu0 0.0
      %327 = vmatpush2.msra.mxu0 0.0
      %328 = vmatprep.subr.mxu0 0.0
      %329 = vmatpush2.msra.mxu0 0.0
      %330 = vmatprep.subr.mxu0 0.0
      %331 = vmatpush2.msra.mxu0 0.0
      %332 = vmatprep.subr.mxu0 0.0
      %333 = vmatpush2.msra.mxu0 0.0
      %334 = vmatprep.subr.mxu0 0.0
      %335 = vmatpush2.msra.mxu0 0.0
      %336 = vmatprep.subr.mxu0 0.0
      %337 = vmatpush2.msra.mxu0 0.0
      %338 = vmatprep.subr.mxu0 0.0
      %339 = vmatpush2.msra.mxu0 0.0
      %340 = vmatprep.subr.mxu0 0.0
      %341 = vmatpush2.msra.mxu0 0.0
      %342 = vmatprep.mubr.f32.mxu0 0.0
      %343 = vmatmul.mubr.f32.gmra.mxu0 %v231
      %v344 = vpop.f32.mrf.mxu0
      %v345 = vadd.f32 0.0, %v344
      %v346 = vpop.f32.mrf.mxu0
      %347 = vmatprep.mubr.f32.mxu0 0.0
      %348 = vmatmul.mubr.f32.gmra.mxu0 %v234
      %v349 = vpop.f32.mrf.mxu0
      %v350 = vadd.f32 0.0, %v349
      %v351 = vpop.f32.mrf.mxu0
      %352 = vmatprep.mubr.f32.mxu0 0.0
      %353 = vmatmul.mubr.f32.gmra.mxu0 %v237
      %v354 = vpop.f32.mrf.mxu0
      %v355 = vadd.f32 0.0, %v354
      %v356 = vpop.f32.mrf.mxu0
      %357 = vmatprep.mubr.f32.mxu0 0.0
      %358 = vmatmul.mubr.f32.gmra.mxu0 %v240
      %v359 = vpop.f32.mrf.mxu0
      %v360 = vadd.f32 0.0, %v359
      %v361 = vpop.f32.mrf.mxu0
      %362 = vmatprep.mubr.f32.mxu0 0.0
      %363 = vmatmul.mubr.f32.gmra.mxu0 %v243
      %v364 = vpop.f32.mrf.mxu0
      %v365 = vadd.f32 0.0, %v364
      %v366 = vpop.f32.mrf.mxu0
      %367 = vmatprep.mubr.f32.mxu0 0.0
      %368 = vmatmul.mubr.f32.gmra.mxu0 %v246
      %v369 = vpop.f32.mrf.mxu0
      %v370 = vadd.f32 0.0, %v369
      %v371 = vpop.f32.mrf.mxu0
      %372 = vmatprep.mubr.f32.mxu0 0.0
      %373 = vmatmul.mubr.f32.gmra.mxu0 %v249
      %v374 = vpop.f32.mrf.mxu0
      %v375 = vadd.f32 0.0, %v374
      %v376 = vpop.f32.mrf.mxu0
      %377 = vmatprep.mubr.f32.mxu0 0.0
      %378 = vmatmul.mubr.f32.gmra.mxu0 %v252
      %v379 = vpop.f32.mrf.mxu0
      %v380 = vadd.f32 0.0, %v379
      %v381 = vpop.f32.mrf.mxu0
      %382 = vmatprep.mubr.f32.mxu0 0.0
      %383 = vmatmul.mubr.f32.gmra.mxu0 %v255
      %v384 = vpop.f32.mrf.mxu0
      %v385 = vadd.f32 0.0, %v384
      %v386 = vpop.f32.mrf.mxu0
      %387 = vmatprep.mubr.f32.mxu0 0.0
      %388 = vmatmul.mubr.f32.gmra.mxu0 %v258
      %v389 = vpop.f32.mrf.mxu0
      %v390 = vadd.f32 0.0, %v389
      %v391 = vpop.f32.mrf.mxu0
      %392 = vmatprep.mubr.f32.mxu0 0.0
      %393 = vmatmul.mubr.f32.gmra.mxu0 %v261
      %v394 = vpop.f32.mrf.mxu0
      %v395 = vadd.f32 0.0, %v394
      %v396 = vpop.f32.mrf.mxu0
      %397 = vmatprep.mubr.f32.mxu0 0.0
      %398 = vmatmul.mubr.f32.gmra.mxu0 %v264
      %v399 = vpop.f32.mrf.mxu0
      %v400 = vadd.f32 0.0, %v399
      %v401 = vpop.f32.mrf.mxu0
      %402 = vmatprep.mubr.f32.mxu0 0.0
      %403 = vmatmul.mubr.f32.gmra.mxu0 %v267
      %v404 = vpop.f32.mrf.mxu0
      %v405 = vadd.f32 0.0, %v404
      %v406 = vpop.f32.mrf.mxu0
      %407 = vmatprep.mubr.f32.mxu0 0.0
      %408 = vmatmul.mubr.f32.gmra.mxu0 %v270
      %v409 = vpop.f32.mrf.mxu0
      %v410 = vadd.f32 0.0, %v409
      %v411 = vpop.f32.mrf.mxu0
      %412 = vmatprep.mubr.f32.mxu0 0.0
      %413 = vmatmul.mubr.f32.gmra.mxu0 %v273
      %v414 = vpop.f32.mrf.mxu0
      %v415 = vadd.f32 0.0, %v414
      %v416 = vpop.f32.mrf.mxu0
      %417 = vmatprep.mubr.f32.mxu0 0.0
      %418 = vmatmul.mubr.f32.gmra.mxu0 %v276
      %v419 = vpop.f32.mrf.mxu0
      %v420 = vadd.f32 0.0, %v419
      %v421 = vpop.f32.mrf.mxu0
      %422 = vdwg.mxu0
      %424 = vset.pattern.permute.xlu0 0
      %425 = vperm.xlu0 %424, %v213
      %v426 = vpop.permute.xlu0 %425
      %429 = vset.pattern.permute.xlu0 0
      %430 = vperm.xlu0 %429, %v214
      %v431 = vpop.permute.xlu0 %430
      %434 = vset.pattern.permute.xlu0 0
      %435 = vperm.xlu0 %434, %v215
      %v436 = vpop.permute.xlu0 %435
      %439 = vset.pattern.permute.xlu0 0
      %440 = vperm.xlu0 %439, %v216
      %v441 = vpop.permute.xlu0 %440
      %444 = vset.pattern.permute.xlu0 0
      %445 = vperm.xlu0 %444, %v217
      %v446 = vpop.permute.xlu0 %445
      %449 = vset.pattern.permute.xlu0 0
      %450 = vperm.xlu0 %449, %v218
      %v451 = vpop.permute.xlu0 %450
      %454 = vset.pattern.permute.xlu0 0
      %455 = vperm.xlu0 %454, %v219
      %v456 = vpop.permute.xlu0 %455
      %459 = vset.pattern.permute.xlu0 0
      %460 = vperm.xlu0 %459, %v220
      %v461 = vpop.permute.xlu0 %460
      %464 = vset.pattern.permute.xlu0 0
      %465 = vperm.xlu0 %464, %v221
      %v466 = vpop.permute.xlu0 %465
      %469 = vset.pattern.permute.xlu0 0
      %470 = vperm.xlu0 %469, %v222
      %v471 = vpop.permute.xlu0 %470
      %474 = vset.pattern.permute.xlu0 0
      %475 = vperm.xlu0 %474, %v223
      %v476 = vpop.permute.xlu0 %475
      %479 = vset.pattern.permute.xlu0 0
      %480 = vperm.xlu0 %479, %v224
      %v481 = vpop.permute.xlu0 %480
      %484 = vset.pattern.permute.xlu0 0
      %485 = vperm.xlu0 %484, %v225
      %v486 = vpop.permute.xlu0 %485
      %489 = vset.pattern.permute.xlu0 0
      %490 = vperm.xlu0 %489, %v226
      %v491 = vpop.permute.xlu0 %490
      %494 = vset.pattern.permute.xlu0 0
      %495 = vperm.xlu0 %494, %v227
      %v496 = vpop.permute.xlu0 %495
      %499 = vset.pattern.permute.xlu0 0
      %500 = vperm.xlu0 %499, %v228
      %v501 = vpop.permute.xlu0 %500
      %v503 = vmul.f32 %v345, %v426
      %v504 = vmul.f32 %v350, %v431
      %v505 = vmul.f32 %v355, %v436
      %v506 = vmul.f32 %v360, %v441
      %v507 = vmul.f32 %v365, %v446
      %v508 = vmul.f32 %v370, %v451
      %v509 = vmul.f32 %v375, %v456
      %v510 = vmul.f32 %v380, %v461
      %v511 = vmul.f32 %v385, %v466
      %v512 = vmul.f32 %v390, %v471
      %v513 = vmul.f32 %v395, %v476
      %v514 = vmul.f32 %v400, %v481
      %v515 = vmul.f32 %v405, %v486
      %v516 = vmul.f32 %v410, %v491
      %v517 = vmul.f32 %v415, %v496
      %v518 = vmul.f32 %v420, %v501
      %519 = vset.pattern.permute.xlu0 1
      %520 = vperm.xlu0 %519, %v213
      %v521 = vpop.permute.xlu0 %520
      %523 = vset.pattern.permute.xlu0 1
      %524 = vperm.xlu0 %523, %v214
      %v525 = vpop.permute.xlu0 %524
      %527 = vset.pattern.permute.xlu0 1
      %528 = vperm.xlu0 %527, %v215
      %v529 = vpop.permute.xlu0 %528
      %531 = vset.pattern.permute.xlu0 1
      %532 = vperm.xlu0 %531, %v216
      %v533 = vpop.permute.xlu0 %532
      %535 = vset.pattern.permute.xlu0 1
      %536 = vperm.xlu0 %535, %v217
      %v537 = vpop.permute.xlu0 %536
      %539 = vset.pattern.permute.xlu0 1
      %540 = vperm.xlu0 %539, %v218
      %v541 = vpop.permute.xlu0 %540
      %543 = vset.pattern.permute.xlu0 1
      %544 = vperm.xlu0 %543, %v219
      %v545 = vpop.permute.xlu0 %544
      %547 = vset.pattern.permute.xlu0 1
      %548 = vperm.xlu0 %547, %v220
      %v549 = vpop.permute.xlu0 %548
      %551 = vset.pattern.permute.xlu0 1
      %552 = vperm.xlu0 %551, %v221
      %v553 = vpop.permute.xlu0 %552
      %555 = vset.pattern.permute.xlu0 1
      %556 = vperm.xlu0 %555, %v222
      %v557 = vpop.permute.xlu0 %556
      %559 = vset.pattern.permute.xlu0 1
      %560 = vperm.xlu0 %559, %v223
      %v561 = vpop.permute.xlu0 %560
      %563 = vset.pattern.permute.xlu0 1
      %564 = vperm.xlu0 %563, %v224
      %v565 = vpop.permute.xlu0 %564
      %567 = vset.pattern.permute.xlu0 1
      %568 = vperm.xlu0 %567, %v225
      %v569 = vpop.permute.xlu0 %568
      %571 = vset.pattern.permute.xlu0 1
      %572 = vperm.xlu0 %571, %v226
      %v573 = vpop.permute.xlu0 %572
      %575 = vset.pattern.permute.xlu0 1
      %576 = vperm.xlu0 %575, %v227
      %v577 = vpop.permute.xlu0 %576
      %579 = vset.pattern.permute.xlu0 1
      %580 = vperm.xlu0 %579, %v228
      %v581 = vpop.permute.xlu0 %580
      %v583 = vmul.f32 %v345, %v521
      %v584 = vmul.f32 %v350, %v525
      %v585 = vmul.f32 %v355, %v529
      %v586 = vmul.f32 %v360, %v533
      %v587 = vmul.f32 %v365, %v537
      %v588 = vmul.f32 %v370, %v541
      %v589 = vmul.f32 %v375, %v545
      %v590 = vmul.f32 %v380, %v549
      %v591 = vmul.f32 %v385, %v553
      %v592 = vmul.f32 %v390, %v557
      %v593 = vmul.f32 %v395, %v561
      %v594 = vmul.f32 %v400, %v565
      %v595 = vmul.f32 %v405, %v569
      %v596 = vmul.f32 %v410, %v573
      %v597 = vmul.f32 %v415, %v577
      %v598 = vmul.f32 %v420, %v581
      %615 = vrot.lane.b32.xlu0 %v583, 120
      %v616 = vpop.permute.xlu0 %615
      %617 = vrot.lane.b32.xlu0 %v584, 120
      %v618 = vpop.permute.xlu0 %617
      %619 = vrot.lane.b32.xlu0 %v585, 120
      %v620 = vpop.permute.xlu0 %619
      %621 = vrot.lane.b32.xlu0 %v586, 120
      %v622 = vpop.permute.xlu0 %621
      %623 = vrot.lane.b32.xlu0 %v587, 120
      %v624 = vpop.permute.xlu0 %623
      %625 = vrot.lane.b32.xlu0 %v588, 120
      %v626 = vpop.permute.xlu0 %625
      %627 = vrot.lane.b32.xlu0 %v589, 120
      %v628 = vpop.permute.xlu0 %627
      %629 = vrot.lane.b32.xlu0 %v590, 120
      %v630 = vpop.permute.xlu0 %629
      %631 = vrot.lane.b32.xlu0 %v591, 120
      %v632 = vpop.permute.xlu0 %631
      %633 = vrot.lane.b32.xlu0 %v592, 120
      %v634 = vpop.permute.xlu0 %633
      %635 = vrot.lane.b32.xlu0 %v593, 120
      %v636 = vpop.permute.xlu0 %635
      %637 = vrot.lane.b32.xlu0 %v594, 120
      %v638 = vpop.permute.xlu0 %637
      %639 = vrot.lane.b32.xlu0 %v595, 120
      %v640 = vpop.permute.xlu0 %639
      %641 = vrot.lane.b32.xlu0 %v596, 120
      %v642 = vpop.permute.xlu0 %641
      %643 = vrot.lane.b32.xlu0 %v597, 120
      %v644 = vpop.permute.xlu0 %643
      %645 = vrot.lane.b32.xlu0 %v598, 120
      %v646 = vpop.permute.xlu0 %645
      %v663 = vadd.f32 %v503, %v616
      %v664 = vadd.f32 %v504, %v618
      %v665 = vadd.f32 %v505, %v620
      %v666 = vadd.f32 %v506, %v622
      %v667 = vadd.f32 %v507, %v624
      %v668 = vadd.f32 %v508, %v626
      %v669 = vadd.f32 %v509, %v628
      %v670 = vadd.f32 %v510, %v630
      %v671 = vadd.f32 %v511, %v632
      %v672 = vadd.f32 %v512, %v634
      %v673 = vadd.f32 %v513, %v636
      %v674 = vadd.f32 %v514, %v638
      %v675 = vadd.f32 %v515, %v640
      %v676 = vadd.f32 %v516, %v642
      %v677 = vadd.f32 %v517, %v644
      %v678 = vadd.f32 %v518, %v646
      %679 = vset.pattern.permute.xlu0 2
      %680 = vperm.xlu0 %679, %v213
      %v681 = vpop.permute.xlu0 %680
      %683 = vset.pattern.permute.xlu0 2
      %684 = vperm.xlu0 %683, %v214
      %v685 = vpop.permute.xlu0 %684
      %687 = vset.pattern.permute.xlu0 2
      %688 = vperm.xlu0 %687, %v215
      %v689 = vpop.permute.xlu0 %688
      %691 = vset.pattern.permute.xlu0 2
      %692 = vperm.xlu0 %691, %v216
      %v693 = vpop.permute.xlu0 %692
      %695 = vset.pattern.permute.xlu0 2
      %696 = vperm.xlu0 %695, %v217
      %v697 = vpop.permute.xlu0 %696
      %699 = vset.pattern.permute.xlu0 2
      %700 = vperm.xlu0 %699, %v218
      %v701 = vpop.permute.xlu0 %700
      %703 = vset.pattern.permute.xlu0 2
      %704 = vperm.xlu0 %703, %v219
      %v705 = vpop.permute.xlu0 %704
      %707 = vset.pattern.permute.xlu0 2
      %708 = vperm.xlu0 %707, %v220
      %v709 = vpop.permute.xlu0 %708
      %711 = vset.pattern.permute.xlu0 2
      %712 = vperm.xlu0 %711, %v221
      %v713 = vpop.permute.xlu0 %712
      %715 = vset.pattern.permute.xlu0 2
      %716 = vperm.xlu0 %715, %v222
      %v717 = vpop.permute.xlu0 %716
      %719 = vset.pattern.permute.xlu0 2
      %720 = vperm.xlu0 %719, %v223
      %v721 = vpop.permute.xlu0 %720
      %723 = vset.pattern.permute.xlu0 2
      %724 = vperm.xlu0 %723, %v224
      %v725 = vpop.permute.xlu0 %724
      %727 = vset.pattern.permute.xlu0 2
      %728 = vperm.xlu0 %727, %v225
      %v729 = vpop.permute.xlu0 %728
      %731 = vset.pattern.permute.xlu0 2
      %732 = vperm.xlu0 %731, %v226
      %v733 = vpop.permute.xlu0 %732
      %735 = vset.pattern.permute.xlu0 2
      %736 = vperm.xlu0 %735, %v227
      %v737 = vpop.permute.xlu0 %736
      %739 = vset.pattern.permute.xlu0 2
      %740 = vperm.xlu0 %739, %v228
      %v741 = vpop.permute.xlu0 %740
      %v743 = vmul.f32 %v345, %v681
      %v744 = vmul.f32 %v350, %v685
      %v745 = vmul.f32 %v355, %v689
      %v746 = vmul.f32 %v360, %v693
      %v747 = vmul.f32 %v365, %v697
      %v748 = vmul.f32 %v370, %v701
      %v749 = vmul.f32 %v375, %v705
      %v750 = vmul.f32 %v380, %v709
      %v751 = vmul.f32 %v385, %v713
      %v752 = vmul.f32 %v390, %v717
      %v753 = vmul.f32 %v395, %v721
      %v754 = vmul.f32 %v400, %v725
      %v755 = vmul.f32 %v405, %v729
      %v756 = vmul.f32 %v410, %v733
      %v757 = vmul.f32 %v415, %v737
      %v758 = vmul.f32 %v420, %v741
      %775 = vrot.lane.b32.xlu0 %v743, 112
      %v776 = vpop.permute.xlu0 %775
      %777 = vrot.lane.b32.xlu0 %v744, 112
      %v778 = vpop.permute.xlu0 %777
      %779 = vrot.lane.b32.xlu0 %v745, 112
      %v780 = vpop.permute.xlu0 %779
      %781 = vrot.lane.b32.xlu0 %v746, 112
      %v782 = vpop.permute.xlu0 %781
      %783 = vrot.lane.b32.xlu0 %v747, 112
      %v784 = vpop.permute.xlu0 %783
      %785 = vrot.lane.b32.xlu0 %v748, 112
      %v786 = vpop.permute.xlu0 %785
      %787 = vrot.lane.b32.xlu0 %v749, 112
      %v788 = vpop.permute.xlu0 %787
      %789 = vrot.lane.b32.xlu0 %v750, 112
      %v790 = vpop.permute.xlu0 %789
      %791 = vrot.lane.b32.xlu0 %v751, 112
      %v792 = vpop.permute.xlu0 %791
      %793 = vrot.lane.b32.xlu0 %v752, 112
      %v794 = vpop.permute.xlu0 %793
      %795 = vrot.lane.b32.xlu0 %v753, 112
      %v796 = vpop.permute.xlu0 %795
      %797 = vrot.lane.b32.xlu0 %v754, 112
      %v798 = vpop.permute.xlu0 %797
      %799 = vrot.lane.b32.xlu0 %v755, 112
      %v800 = vpop.permute.xlu0 %799
      %801 = vrot.lane.b32.xlu0 %v756, 112
      %v802 = vpop.permute.xlu0 %801
      %803 = vrot.lane.b32.xlu0 %v757, 112
      %v804 = vpop.permute.xlu0 %803
      %805 = vrot.lane.b32.xlu0 %v758, 112
      %v806 = vpop.permute.xlu0 %805
      %v823 = vadd.f32 %v663, %v776
      %v824 = vadd.f32 %v664, %v778
      %v825 = vadd.f32 %v665, %v780
      %v826 = vadd.f32 %v666, %v782
      %v827 = vadd.f32 %v667, %v784
      %v828 = vadd.f32 %v668, %v786
      %v829 = vadd.f32 %v669, %v788
      %v830 = vadd.f32 %v670, %v790
      %v831 = vadd.f32 %v671, %v792
      %v832 = vadd.f32 %v672, %v794
      %v833 = vadd.f32 %v673, %v796
      %v834 = vadd.f32 %v674, %v798
      %v835 = vadd.f32 %v675, %v800
      %v836 = vadd.f32 %v676, %v802
      %v837 = vadd.f32 %v677, %v804
      %v838 = vadd.f32 %v678, %v806
      %839 = vset.pattern.permute.xlu0 3
      %840 = vperm.xlu0 %839, %v213
      %v841 = vpop.permute.xlu0 %840
      %843 = vset.pattern.permute.xlu0 3
      %844 = vperm.xlu0 %843, %v214
      %v845 = vpop.permute.xlu0 %844
      %847 = vset.pattern.permute.xlu0 3
      %848 = vperm.xlu0 %847, %v215
      %v849 = vpop.permute.xlu0 %848
      %851 = vset.pattern.permute.xlu0 3
      %852 = vperm.xlu0 %851, %v216
      %v853 = vpop.permute.xlu0 %852
      %855 = vset.pattern.permute.xlu0 3
      %856 = vperm.xlu0 %855, %v217
      %v857 = vpop.permute.xlu0 %856
      %859 = vset.pattern.permute.xlu0 3
      %860 = vperm.xlu0 %859, %v218
      %v861 = vpop.permute.xlu0 %860
      %863 = vset.pattern.permute.xlu0 3
      %864 = vperm.xlu0 %863, %v219
      %v865 = vpop.permute.xlu0 %864
      %867 = vset.pattern.permute.xlu0 3
      %868 = vperm.xlu0 %867, %v220
      %v869 = vpop.permute.xlu0 %868
      %871 = vset.pattern.permute.xlu0 3
      %872 = vperm.xlu0 %871, %v221
      %v873 = vpop.permute.xlu0 %872
      %875 = vset.pattern.permute.xlu0 3
      %876 = vperm.xlu0 %875, %v222
      %v877 = vpop.permute.xlu0 %876
      %879 = vset.pattern.permute.xlu0 3
      %880 = vperm.xlu0 %879, %v223
      %v881 = vpop.permute.xlu0 %880
      %883 = vset.pattern.permute.xlu0 3
      %884 = vperm.xlu0 %883, %v224
      %v885 = vpop.permute.xlu0 %884
      %887 = vset.pattern.permute.xlu0 3
      %888 = vperm.xlu0 %887, %v225
      %v889 = vpop.permute.xlu0 %888
      %891 = vset.pattern.permute.xlu0 3
      %892 = vperm.xlu0 %891, %v226
      %v893 = vpop.permute.xlu0 %892
      %895 = vset.pattern.permute.xlu0 3
      %896 = vperm.xlu0 %895, %v227
      %v897 = vpop.permute.xlu0 %896
      %899 = vset.pattern.permute.xlu0 3
      %900 = vperm.xlu0 %899, %v228
      %v901 = vpop.permute.xlu0 %900
      %v903 = vmul.f32 %v345, %v841
      %v904 = vmul.f32 %v350, %v845
      %v905 = vmul.f32 %v355, %v849
      %v906 = vmul.f32 %v360, %v853
      %v907 = vmul.f32 %v365, %v857
      %v908 = vmul.f32 %v370, %v861
      %v909 = vmul.f32 %v375, %v865
      %v910 = vmul.f32 %v380, %v869
      %v911 = vmul.f32 %v385, %v873
      %v912 = vmul.f32 %v390, %v877
      %v913 = vmul.f32 %v395, %v881
      %v914 = vmul.f32 %v400, %v885
      %v915 = vmul.f32 %v405, %v889
      %v916 = vmul.f32 %v410, %v893
      %v917 = vmul.f32 %v415, %v897
      %v918 = vmul.f32 %v420, %v901
      %935 = vrot.lane.b32.xlu0 %v903, 104
      %v936 = vpop.permute.xlu0 %935
      %937 = vrot.lane.b32.xlu0 %v904, 104
      %v938 = vpop.permute.xlu0 %937
      %939 = vrot.lane.b32.xlu0 %v905, 104
      %v940 = vpop.permute.xlu0 %939
      %941 = vrot.lane.b32.xlu0 %v906, 104
      %v942 = vpop.permute.xlu0 %941
      %943 = vrot.lane.b32.xlu0 %v907, 104
      %v944 = vpop.permute.xlu0 %943
      %945 = vrot.lane.b32.xlu0 %v908, 104
      %v946 = vpop.permute.xlu0 %945
      %947 = vrot.lane.b32.xlu0 %v909, 104
      %v948 = vpop.permute.xlu0 %947
      %949 = vrot.lane.b32.xlu0 %v910, 104
      %v950 = vpop.permute.xlu0 %949
      %951 = vrot.lane.b32.xlu0 %v911, 104
      %v952 = vpop.permute.xlu0 %951
      %953 = vrot.lane.b32.xlu0 %v912, 104
      %v954 = vpop.permute.xlu0 %953
      %955 = vrot.lane.b32.xlu0 %v913, 104
      %v956 = vpop.permute.xlu0 %955
      %957 = vrot.lane.b32.xlu0 %v914, 104
      %v958 = vpop.permute.xlu0 %957
      %959 = vrot.lane.b32.xlu0 %v915, 104
      %v960 = vpop.permute.xlu0 %959
      %961 = vrot.lane.b32.xlu0 %v916, 104
      %v962 = vpop.permute.xlu0 %961
      %963 = vrot.lane.b32.xlu0 %v917, 104
      %v964 = vpop.permute.xlu0 %963
      %965 = vrot.lane.b32.xlu0 %v918, 104
      %v966 = vpop.permute.xlu0 %965
      %v983 = vadd.f32 %v823, %v936
      %v984 = vadd.f32 %v824, %v938
      %v985 = vadd.f32 %v825, %v940
      %v986 = vadd.f32 %v826, %v942
      %v987 = vadd.f32 %v827, %v944
      %v988 = vadd.f32 %v828, %v946
      %v989 = vadd.f32 %v829, %v948
      %v990 = vadd.f32 %v830, %v950
      %v991 = vadd.f32 %v831, %v952
      %v992 = vadd.f32 %v832, %v954
      %v993 = vadd.f32 %v833, %v956
      %v994 = vadd.f32 %v834, %v958
      %v995 = vadd.f32 %v835, %v960
      %v996 = vadd.f32 %v836, %v962
      %v997 = vadd.f32 %v837, %v964
      %v998 = vadd.f32 %v838, %v966
      %999 = vset.pattern.permute.xlu0 4
      %1000 = vperm.xlu0 %999, %v213
      %v1001 = vpop.permute.xlu0 %1000
      %1003 = vset.pattern.permute.xlu0 4
      %1004 = vperm.xlu0 %1003, %v214
      %v1005 = vpop.permute.xlu0 %1004
      %1007 = vset.pattern.permute.xlu0 4
      %1008 = vperm.xlu0 %1007, %v215
      %v1009 = vpop.permute.xlu0 %1008
      %1011 = vset.pattern.permute.xlu0 4
      %1012 = vperm.xlu0 %1011, %v216
      %v1013 = vpop.permute.xlu0 %1012
      %1015 = vset.pattern.permute.xlu0 4
      %1016 = vperm.xlu0 %1015, %v217
      %v1017 = vpop.permute.xlu0 %1016
      %1019 = vset.pattern.permute.xlu0 4
      %1020 = vperm.xlu0 %1019, %v218
      %v1021 = vpop.permute.xlu0 %1020
      %1023 = vset.pattern.permute.xlu0 4
      %1024 = vperm.xlu0 %1023, %v219
      %v1025 = vpop.permute.xlu0 %1024
      %1027 = vset.pattern.permute.xlu0 4
      %1028 = vperm.xlu0 %1027, %v220
      %v1029 = vpop.permute.xlu0 %1028
      %1031 = vset.pattern.permute.xlu0 4
      %1032 = vperm.xlu0 %1031, %v221
      %v1033 = vpop.permute.xlu0 %1032
      %1035 = vset.pattern.permute.xlu0 4
      %1036 = vperm.xlu0 %1035, %v222
      %v1037 = vpop.permute.xlu0 %1036
      %1039 = vset.pattern.permute.xlu0 4
      %1040 = vperm.xlu0 %1039, %v223
      %v1041 = vpop.permute.xlu0 %1040
      %1043 = vset.pattern.permute.xlu0 4
      %1044 = vperm.xlu0 %1043, %v224
      %v1045 = vpop.permute.xlu0 %1044
      %1047 = vset.pattern.permute.xlu0 4
      %1048 = vperm.xlu0 %1047, %v225
      %v1049 = vpop.permute.xlu0 %1048
      %1051 = vset.pattern.permute.xlu0 4
      %1052 = vperm.xlu0 %1051, %v226
      %v1053 = vpop.permute.xlu0 %1052
      %1055 = vset.pattern.permute.xlu0 4
      %1056 = vperm.xlu0 %1055, %v227
      %v1057 = vpop.permute.xlu0 %1056
      %1059 = vset.pattern.permute.xlu0 4
      %1060 = vperm.xlu0 %1059, %v228
      %v1061 = vpop.permute.xlu0 %1060
      %v1063 = vmul.f32 %v345, %v1001
      %v1064 = vmul.f32 %v350, %v1005
      %v1065 = vmul.f32 %v355, %v1009
      %v1066 = vmul.f32 %v360, %v1013
      %v1067 = vmul.f32 %v365, %v1017
      %v1068 = vmul.f32 %v370, %v1021
      %v1069 = vmul.f32 %v375, %v1025
      %v1070 = vmul.f32 %v380, %v1029
      %v1071 = vmul.f32 %v385, %v1033
      %v1072 = vmul.f32 %v390, %v1037
      %v1073 = vmul.f32 %v395, %v1041
      %v1074 = vmul.f32 %v400, %v1045
      %v1075 = vmul.f32 %v405, %v1049
      %v1076 = vmul.f32 %v410, %v1053
      %v1077 = vmul.f32 %v415, %v1057
      %v1078 = vmul.f32 %v420, %v1061
      %1095 = vrot.lane.b32.xlu0 %v1063, 96
      %v1096 = vpop.permute.xlu0 %1095
      %1097 = vrot.lane.b32.xlu0 %v1064, 96
      %v1098 = vpop.permute.xlu0 %1097
      %1099 = vrot.lane.b32.xlu0 %v1065, 96
      %v1100 = vpop.permute.xlu0 %1099
      %1101 = vrot.lane.b32.xlu0 %v1066, 96
      %v1102 = vpop.permute.xlu0 %1101
      %1103 = vrot.lane.b32.xlu0 %v1067, 96
      %v1104 = vpop.permute.xlu0 %1103
      %1105 = vrot.lane.b32.xlu0 %v1068, 96
      %v1106 = vpop.permute.xlu0 %1105
      %1107 = vrot.lane.b32.xlu0 %v1069, 96
      %v1108 = vpop.permute.xlu0 %1107
      %1109 = vrot.lane.b32.xlu0 %v1070, 96
      %v1110 = vpop.permute.xlu0 %1109
      %1111 = vrot.lane.b32.xlu0 %v1071, 96
      %v1112 = vpop.permute.xlu0 %1111
      %1113 = vrot.lane.b32.xlu0 %v1072, 96
      %v1114 = vpop.permute.xlu0 %1113
      %1115 = vrot.lane.b32.xlu0 %v1073, 96
      %v1116 = vpop.permute.xlu0 %1115
      %1117 = vrot.lane.b32.xlu0 %v1074, 96
      %v1118 = vpop.permute.xlu0 %1117
      %1119 = vrot.lane.b32.xlu0 %v1075, 96
      %v1120 = vpop.permute.xlu0 %1119
      %1121 = vrot.lane.b32.xlu0 %v1076, 96
      %v1122 = vpop.permute.xlu0 %1121
      %1123 = vrot.lane.b32.xlu0 %v1077, 96
      %v1124 = vpop.permute.xlu0 %1123
      %1125 = vrot.lane.b32.xlu0 %v1078, 96
      %v1126 = vpop.permute.xlu0 %1125
      %v1143 = vadd.f32 %v983, %v1096
      %v1144 = vadd.f32 %v984, %v1098
      %v1145 = vadd.f32 %v985, %v1100
      %v1146 = vadd.f32 %v986, %v1102
      %v1147 = vadd.f32 %v987, %v1104
      %v1148 = vadd.f32 %v988, %v1106
      %v1149 = vadd.f32 %v989, %v1108
      %v1150 = vadd.f32 %v990, %v1110
      %v1151 = vadd.f32 %v991, %v1112
      %v1152 = vadd.f32 %v992, %v1114
      %v1153 = vadd.f32 %v993, %v1116
      %v1154 = vadd.f32 %v994, %v1118
      %v1155 = vadd.f32 %v995, %v1120
      %v1156 = vadd.f32 %v996, %v1122
      %v1157 = vadd.f32 %v997, %v1124
      %v1158 = vadd.f32 %v998, %v1126
      %1159 = vset.pattern.permute.xlu0 5
      %1160 = vperm.xlu0 %1159, %v213
      %v1161 = vpop.permute.xlu0 %1160
      %1163 = vset.pattern.permute.xlu0 5
      %1164 = vperm.xlu0 %1163, %v214
      %v1165 = vpop.permute.xlu0 %1164
      %1167 = vset.pattern.permute.xlu0 5
      %1168 = vperm.xlu0 %1167, %v215
      %v1169 = vpop.permute.xlu0 %1168
      %1171 = vset.pattern.permute.xlu0 5
      %1172 = vperm.xlu0 %1171, %v216
      %v1173 = vpop.permute.xlu0 %1172
      %1175 = vset.pattern.permute.xlu0 5
      %1176 = vperm.xlu0 %1175, %v217
      %v1177 = vpop.permute.xlu0 %1176
      %1179 = vset.pattern.permute.xlu0 5
      %1180 = vperm.xlu0 %1179, %v218
      %v1181 = vpop.permute.xlu0 %1180
      %1183 = vset.pattern.permute.xlu0 5
      %1184 = vperm.xlu0 %1183, %v219
      %v1185 = vpop.permute.xlu0 %1184
      %1187 = vset.pattern.permute.xlu0 5
      %1188 = vperm.xlu0 %1187, %v220
      %v1189 = vpop.permute.xlu0 %1188
      %1191 = vset.pattern.permute.xlu0 5
      %1192 = vperm.xlu0 %1191, %v221
      %v1193 = vpop.permute.xlu0 %1192
      %1195 = vset.pattern.permute.xlu0 5
      %1196 = vperm.xlu0 %1195, %v222
      %v1197 = vpop.permute.xlu0 %1196
      %1199 = vset.pattern.permute.xlu0 5
      %1200 = vperm.xlu0 %1199, %v223
      %v1201 = vpop.permute.xlu0 %1200
      %1203 = vset.pattern.permute.xlu0 5
      %1204 = vperm.xlu0 %1203, %v224
      %v1205 = vpop.permute.xlu0 %1204
      %1207 = vset.pattern.permute.xlu0 5
      %1208 = vperm.xlu0 %1207, %v225
      %v1209 = vpop.permute.xlu0 %1208
      %1211 = vset.pattern.permute.xlu0 5
      %1212 = vperm.xlu0 %1211, %v226
      %v1213 = vpop.permute.xlu0 %1212
      %1215 = vset.pattern.permute.xlu0 5
      %1216 = vperm.xlu0 %1215, %v227
      %v1217 = vpop.permute.xlu0 %1216
      %1219 = vset.pattern.permute.xlu0 5
      %1220 = vperm.xlu0 %1219, %v228
      %v1221 = vpop.permute.xlu0 %1220
      %v1223 = vmul.f32 %v345, %v1161
      %v1224 = vmul.f32 %v350, %v1165
      %v1225 = vmul.f32 %v355, %v1169
      %v1226 = vmul.f32 %v360, %v1173
      %v1227 = vmul.f32 %v365, %v1177
      %v1228 = vmul.f32 %v370, %v1181
      %v1229 = vmul.f32 %v375, %v1185
      %v1230 = vmul.f32 %v380, %v1189
      %v1231 = vmul.f32 %v385, %v1193
      %v1232 = vmul.f32 %v390, %v1197
      %v1233 = vmul.f32 %v395, %v1201
      %v1234 = vmul.f32 %v400, %v1205
      %v1235 = vmul.f32 %v405, %v1209
      %v1236 = vmul.f32 %v410, %v1213
      %v1237 = vmul.f32 %v415, %v1217
      %v1238 = vmul.f32 %v420, %v1221
      %1255 = vrot.lane.b32.xlu0 %v1223, 88
      %v1256 = vpop.permute.xlu0 %1255
      %1257 = vrot.lane.b32.xlu0 %v1224, 88
      %v1258 = vpop.permute.xlu0 %1257
      %1259 = vrot.lane.b32.xlu0 %v1225, 88
      %v1260 = vpop.permute.xlu0 %1259
      %1261 = vrot.lane.b32.xlu0 %v1226, 88
      %v1262 = vpop.permute.xlu0 %1261
      %1263 = vrot.lane.b32.xlu0 %v1227, 88
      %v1264 = vpop.permute.xlu0 %1263
      %1265 = vrot.lane.b32.xlu0 %v1228, 88
      %v1266 = vpop.permute.xlu0 %1265
      %1267 = vrot.lane.b32.xlu0 %v1229, 88
      %v1268 = vpop.permute.xlu0 %1267
      %1269 = vrot.lane.b32.xlu0 %v1230, 88
      %v1270 = vpop.permute.xlu0 %1269
      %1271 = vrot.lane.b32.xlu0 %v1231, 88
      %v1272 = vpop.permute.xlu0 %1271
      %1273 = vrot.lane.b32.xlu0 %v1232, 88
      %v1274 = vpop.permute.xlu0 %1273
      %1275 = vrot.lane.b32.xlu0 %v1233, 88
      %v1276 = vpop.permute.xlu0 %1275
      %1277 = vrot.lane.b32.xlu0 %v1234, 88
      %v1278 = vpop.permute.xlu0 %1277
      %1279 = vrot.lane.b32.xlu0 %v1235, 88
      %v1280 = vpop.permute.xlu0 %1279
      %1281 = vrot.lane.b32.xlu0 %v1236, 88
      %v1282 = vpop.permute.xlu0 %1281
      %1283 = vrot.lane.b32.xlu0 %v1237, 88
      %v1284 = vpop.permute.xlu0 %1283
      %1285 = vrot.lane.b32.xlu0 %v1238, 88
      %v1286 = vpop.permute.xlu0 %1285
      %v1303 = vadd.f32 %v1143, %v1256
      %v1304 = vadd.f32 %v1144, %v1258
      %v1305 = vadd.f32 %v1145, %v1260
      %v1306 = vadd.f32 %v1146, %v1262
      %v1307 = vadd.f32 %v1147, %v1264
      %v1308 = vadd.f32 %v1148, %v1266
      %v1309 = vadd.f32 %v1149, %v1268
      %v1310 = vadd.f32 %v1150, %v1270
      %v1311 = vadd.f32 %v1151, %v1272
      %v1312 = vadd.f32 %v1152, %v1274
      %v1313 = vadd.f32 %v1153, %v1276
      %v1314 = vadd.f32 %v1154, %v1278
      %v1315 = vadd.f32 %v1155, %v1280
      %v1316 = vadd.f32 %v1156, %v1282
      %v1317 = vadd.f32 %v1157, %v1284
      %v1318 = vadd.f32 %v1158, %v1286
      %1319 = vst.msk [vmem:[%s194] sm:$0xff] %vm229, %v1303
      %1320 = vst.msk [vmem:[%s194 + $0x8] sm:$0xff] %vm229, %v1304
      %1321 = vst.msk [vmem:[%s194 + $0x10] sm:$0xff] %vm229, %v1305
      %1322 = vst.msk [vmem:[%s194 + $0x18] sm:$0xff] %vm229, %v1306
      %1323 = vst.msk [vmem:[%s194 + $0x20] sm:$0xff] %vm229, %v1307
      %1324 = vst.msk [vmem:[%s194 + $0x28] sm:$0xff] %vm229, %v1308
      %1325 = vst.msk [vmem:[%s194 + $0x30] sm:$0xff] %vm229, %v1309
      %1326 = vst.msk [vmem:[%s194 + $0x38] sm:$0xff] %vm229, %v1310
      %1327 = vst.msk [vmem:[%s194 + $0x40] sm:$0xff] %vm229, %v1311
      %1328 = vst.msk [vmem:[%s194 + $0x48] sm:$0xff] %vm229, %v1312
      %1329 = vst.msk [vmem:[%s194 + $0x50] sm:$0xff] %vm229, %v1313
      %1330 = vst.msk [vmem:[%s194 + $0x58] sm:$0xff] %vm229, %v1314
      %1331 = vst.msk [vmem:[%s194 + $0x60] sm:$0xff] %vm229, %v1315
      %1332 = vst.msk [vmem:[%s194 + $0x68] sm:$0xff] %vm229, %v1316
      %1333 = vst.msk [vmem:[%s194 + $0x70] sm:$0xff] %vm229, %v1317
      %1334 = vst.msk [vmem:[%s194 + $0x78] sm:$0xff] %vm229, %v1318
      %s1335 = scalar_lea.vmem %s182, 128
      %v1336 = vld [vmem:[%s1335] sm:$0xff]
      %v1337 = vld [vmem:[%s1335 + $0x8] sm:$0xff]
      %v1338 = vld [vmem:[%s1335 + $0x10] sm:$0xff]
      %v1339 = vld [vmem:[%s1335 + $0x18] sm:$0xff]
      %v1340 = vld [vmem:[%s1335 + $0x20] sm:$0xff]
      %v1341 = vld [vmem:[%s1335 + $0x28] sm:$0xff]
      %v1342 = vld [vmem:[%s1335 + $0x30] sm:$0xff]
      %v1343 = vld [vmem:[%s1335 + $0x38] sm:$0xff]
      %v1344 = vld [vmem:[%s1335 + $0x40] sm:$0xff]
      %v1345 = vld [vmem:[%s1335 + $0x48] sm:$0xff]
      %v1346 = vld [vmem:[%s1335 + $0x50] sm:$0xff]
      %v1347 = vld [vmem:[%s1335 + $0x58] sm:$0xff]
      %v1348 = vld [vmem:[%s1335 + $0x60] sm:$0xff]
      %v1349 = vld [vmem:[%s1335 + $0x68] sm:$0xff]
      %v1350 = vld [vmem:[%s1335 + $0x70] sm:$0xff]
      %v1351 = vld [vmem:[%s1335 + $0x78] sm:$0xff]
      %s1352 = scalar_lea.vmem %s188, 128
      %v1353 = vld [vmem:[%s1352] sm:$0xff]
      %v1354 = vld [vmem:[%s1352 + $0x8] sm:$0xff]
      %v1355 = vld [vmem:[%s1352 + $0x10] sm:$0xff]
      %v1356 = vld [vmem:[%s1352 + $0x18] sm:$0xff]
      %v1357 = vld [vmem:[%s1352 + $0x20] sm:$0xff]
      %v1358 = vld [vmem:[%s1352 + $0x28] sm:$0xff]
      %v1359 = vld [vmem:[%s1352 + $0x30] sm:$0xff]
      %v1360 = vld [vmem:[%s1352 + $0x38] sm:$0xff]
      %v1361 = vld [vmem:[%s1352 + $0x40] sm:$0xff]
      %v1362 = vld [vmem:[%s1352 + $0x48] sm:$0xff]
      %v1363 = vld [vmem:[%s1352 + $0x50] sm:$0xff]
      %v1364 = vld [vmem:[%s1352 + $0x58] sm:$0xff]
      %v1365 = vld [vmem:[%s1352 + $0x60] sm:$0xff]
      %v1366 = vld [vmem:[%s1352 + $0x68] sm:$0xff]
      %v1367 = vld [vmem:[%s1352 + $0x70] sm:$0xff]
      %v1368 = vld [vmem:[%s1352 + $0x78] sm:$0xff]
      %v1370 = vsel %vm229, %v1336, 0
      %v1373 = vsel %vm229, %v1337, 0
      %v1376 = vsel %vm229, %v1338, 0
      %v1379 = vsel %vm229, %v1339, 0
      %v1382 = vsel %vm229, %v1340, 0
      %v1385 = vsel %vm229, %v1341, 0
      %v1388 = vsel %vm229, %v1342, 0
      %v1391 = vsel %vm229, %v1343, 0
      %v1394 = vsel %vm229, %v1344, 0
      %v1397 = vsel %vm229, %v1345, 0
      %v1400 = vsel %vm229, %v1346, 0
      %v1403 = vsel %vm229, %v1347, 0
      %v1406 = vsel %vm229, %v1348, 0
      %v1409 = vsel %vm229, %v1349, 0
      %v1412 = vsel %vm229, %v1350, 0
      %v1415 = vsel %vm229, %v1351, 0
      %1417 = vmatprep.subr.mxu0 0.0
      %1418 = vmatpush1.msra.mxu0 0.0
      %1419 = vmatprep.subr.mxu0 0.0
      %1420 = vmatpush1.msra.mxu0 0.0
      %1421 = vmatprep.subr.mxu0 0.0
      %1422 = vmatpush1.msra.mxu0 0.0
      %1423 = vmatprep.subr.mxu0 0.0
      %1424 = vmatpush1.msra.mxu0 0.0
      %1425 = vmatprep.subr.mxu0 0.0
      %1426 = vmatpush1.msra.mxu0 0.0
      %1427 = vmatprep.subr.mxu0 0.0
      %1428 = vmatpush1.msra.mxu0 0.0
      %1429 = vmatprep.subr.mxu0 0.0
      %1430 = vmatpush1.msra.mxu0 0.0
      %1431 = vmatprep.subr.mxu0 0.0
      %1432 = vmatpush1.msra.mxu0 0.0
      %1433 = vmatprep.subr.mxu0 0.0
      %1434 = vmatpush1.msra.mxu0 0.0
      %1435 = vmatprep.subr.mxu0 0.0
      %1436 = vmatpush1.msra.mxu0 0.0
      %1437 = vmatprep.subr.mxu0 0.0
      %1438 = vmatpush1.msra.mxu0 0.0
      %1439 = vmatprep.subr.mxu0 0.0
      %1440 = vmatpush1.msra.mxu0 0.0
      %1441 = vmatprep.subr.mxu0 0.0
      %1442 = vmatpush1.msra.mxu0 0.0
      %1443 = vmatprep.subr.mxu0 0.0
      %1444 = vmatpush1.msra.mxu0 0.0
      %1445 = vmatprep.subr.mxu0 0.0
      %1446 = vmatpush1.msra.mxu0 0.0
      %1447 = vmatprep.subr.mxu0 0.0
      %1448 = vmatpush1.msra.mxu0 %v196
      %1449 = vmatprep.subr.mxu0 0.0
      %1450 = vmatpush2.msra.mxu0 0.0
      %1451 = vmatprep.subr.mxu0 0.0
      %1452 = vmatpush2.msra.mxu0 0.0
      %1453 = vmatprep.subr.mxu0 0.0
      %1454 = vmatpush2.msra.mxu0 0.0
      %1455 = vmatprep.subr.mxu0 0.0
      %1456 = vmatpush2.msra.mxu0 0.0
      %1457 = vmatprep.subr.mxu0 0.0
      %1458 = vmatpush2.msra.mxu0 0.0
      %1459 = vmatprep.subr.mxu0 0.0
      %1460 = vmatpush2.msra.mxu0 0.0
      %1461 = vmatprep.subr.mxu0 0.0
      %1462 = vmatpush2.msra.mxu0 0.0
      %1463 = vmatprep.subr.mxu0 0.0
      %1464 = vmatpush2.msra.mxu0 0.0
      %1465 = vmatprep.subr.mxu0 0.0
      %1466 = vmatpush2.msra.mxu0 0.0
      %1467 = vmatprep.subr.mxu0 0.0
      %1468 = vmatpush2.msra.mxu0 0.0
      %1469 = vmatprep.subr.mxu0 0.0
      %1470 = vmatpush2.msra.mxu0 0.0
      %1471 = vmatprep.subr.mxu0 0.0
      %1472 = vmatpush2.msra.mxu0 0.0
      %1473 = vmatprep.subr.mxu0 0.0
      %1474 = vmatpush2.msra.mxu0 0.0
      %1475 = vmatprep.subr.mxu0 0.0
      %1476 = vmatpush2.msra.mxu0 0.0
      %1477 = vmatprep.subr.mxu0 0.0
      %1478 = vmatpush2.msra.mxu0 0.0
      %1479 = vmatprep.subr.mxu0 0.0
      %1480 = vmatpush2.msra.mxu0 0.0
      %1481 = vmatprep.mubr.f32.mxu0 0.0
      %1482 = vmatmul.mubr.f32.gmra.mxu0 %v1370
      %v1483 = vpop.f32.mrf.mxu0
      %v1484 = vadd.f32 0.0, %v1483
      %v1485 = vpop.f32.mrf.mxu0
      %1486 = vmatprep.mubr.f32.mxu0 0.0
      %1487 = vmatmul.mubr.f32.gmra.mxu0 %v1373
      %v1488 = vpop.f32.mrf.mxu0
      %v1489 = vadd.f32 0.0, %v1488
      %v1490 = vpop.f32.mrf.mxu0
      %1491 = vmatprep.mubr.f32.mxu0 0.0
      %1492 = vmatmul.mubr.f32.gmra.mxu0 %v1376
      %v1493 = vpop.f32.mrf.mxu0
      %v1494 = vadd.f32 0.0, %v1493
      %v1495 = vpop.f32.mrf.mxu0
      %1496 = vmatprep.mubr.f32.mxu0 0.0
      %1497 = vmatmul.mubr.f32.gmra.mxu0 %v1379
      %v1498 = vpop.f32.mrf.mxu0
      %v1499 = vadd.f32 0.0, %v1498
      %v1500 = vpop.f32.mrf.mxu0
      %1501 = vmatprep.mubr.f32.mxu0 0.0
      %1502 = vmatmul.mubr.f32.gmra.mxu0 %v1382
      %v1503 = vpop.f32.mrf.mxu0
      %v1504 = vadd.f32 0.0, %v1503
      %v1505 = vpop.f32.mrf.mxu0
      %1506 = vmatprep.mubr.f32.mxu0 0.0
      %1507 = vmatmul.mubr.f32.gmra.mxu0 %v1385
      %v1508 = vpop.f32.mrf.mxu0
      %v1509 = vadd.f32 0.0, %v1508
      %v1510 = vpop.f32.mrf.mxu0
      %1511 = vmatprep.mubr.f32.mxu0 0.0
      %1512 = vmatmul.mubr.f32.gmra.mxu0 %v1388
      %v1513 = vpop.f32.mrf.mxu0
      %v1514 = vadd.f32 0.0, %v1513
      %v1515 = vpop.f32.mrf.mxu0
      %1516 = vmatprep.mubr.f32.mxu0 0.0
      %1517 = vmatmul.mubr.f32.gmra.mxu0 %v1391
      %v1518 = vpop.f32.mrf.mxu0
      %v1519 = vadd.f32 0.0, %v1518
      %v1520 = vpop.f32.mrf.mxu0
      %1521 = vmatprep.mubr.f32.mxu0 0.0
      %1522 = vmatmul.mubr.f32.gmra.mxu0 %v1394
      %v1523 = vpop.f32.mrf.mxu0
      %v1524 = vadd.f32 0.0, %v1523
      %v1525 = vpop.f32.mrf.mxu0
      %1526 = vmatprep.mubr.f32.mxu0 0.0
      %1527 = vmatmul.mubr.f32.gmra.mxu0 %v1397
      %v1528 = vpop.f32.mrf.mxu0
      %v1529 = vadd.f32 0.0, %v1528
      %v1530 = vpop.f32.mrf.mxu0
      %1531 = vmatprep.mubr.f32.mxu0 0.0
      %1532 = vmatmul.mubr.f32.gmra.mxu0 %v1400
      %v1533 = vpop.f32.mrf.mxu0
      %v1534 = vadd.f32 0.0, %v1533
      %v1535 = vpop.f32.mrf.mxu0
      %1536 = vmatprep.mubr.f32.mxu0 0.0
      %1537 = vmatmul.mubr.f32.gmra.mxu0 %v1403
      %v1538 = vpop.f32.mrf.mxu0
      %v1539 = vadd.f32 0.0, %v1538
      %v1540 = vpop.f32.mrf.mxu0
      %1541 = vmatprep.mubr.f32.mxu0 0.0
      %1542 = vmatmul.mubr.f32.gmra.mxu0 %v1406
      %v1543 = vpop.f32.mrf.mxu0
      %v1544 = vadd.f32 0.0, %v1543
      %v1545 = vpop.f32.mrf.mxu0
      %1546 = vmatprep.mubr.f32.mxu0 0.0
      %1547 = vmatmul.mubr.f32.gmra.mxu0 %v1409
      %v1548 = vpop.f32.mrf.mxu0
      %v1549 = vadd.f32 0.0, %v1548
      %v1550 = vpop.f32.mrf.mxu0
      %1551 = vmatprep.mubr.f32.mxu0 0.0
      %1552 = vmatmul.mubr.f32.gmra.mxu0 %v1412
      %v1553 = vpop.f32.mrf.mxu0
      %v1554 = vadd.f32 0.0, %v1553
      %v1555 = vpop.f32.mrf.mxu0
      %1556 = vmatprep.mubr.f32.mxu0 0.0
      %1557 = vmatmul.mubr.f32.gmra.mxu0 %v1415
      %v1558 = vpop.f32.mrf.mxu0
      %v1559 = vadd.f32 0.0, %v1558
      %v1560 = vpop.f32.mrf.mxu0
      %1561 = vdwg.mxu0
      %1563 = vset.pattern.permute.xlu0 0
      %1564 = vperm.xlu0 %1563, %v1353
      %v1565 = vpop.permute.xlu0 %1564
      %1568 = vset.pattern.permute.xlu0 0
      %1569 = vperm.xlu0 %1568, %v1354
      %v1570 = vpop.permute.xlu0 %1569
      %1573 = vset.pattern.permute.xlu0 0
      %1574 = vperm.xlu0 %1573, %v1355
      %v1575 = vpop.permute.xlu0 %1574
      %1578 = vset.pattern.permute.xlu0 0
      %1579 = vperm.xlu0 %1578, %v1356
      %v1580 = vpop.permute.xlu0 %1579
      %1583 = vset.pattern.permute.xlu0 0
      %1584 = vperm.xlu0 %1583, %v1357
      %v1585 = vpop.permute.xlu0 %1584
      %1588 = vset.pattern.permute.xlu0 0
      %1589 = vperm.xlu0 %1588, %v1358
      %v1590 = vpop.permute.xlu0 %1589
      %1593 = vset.pattern.permute.xlu0 0
      %1594 = vperm.xlu0 %1593, %v1359
      %v1595 = vpop.permute.xlu0 %1594
      %1598 = vset.pattern.permute.xlu0 0
      %1599 = vperm.xlu0 %1598, %v1360
      %v1600 = vpop.permute.xlu0 %1599
      %1603 = vset.pattern.permute.xlu0 0
      %1604 = vperm.xlu0 %1603, %v1361
      %v1605 = vpop.permute.xlu0 %1604
      %1608 = vset.pattern.permute.xlu0 0
      %1609 = vperm.xlu0 %1608, %v1362
      %v1610 = vpop.permute.xlu0 %1609
      %1613 = vset.pattern.permute.xlu0 0
      %1614 = vperm.xlu0 %1613, %v1363
      %v1615 = vpop.permute.xlu0 %1614
      %1618 = vset.pattern.permute.xlu0 0
      %1619 = vperm.xlu0 %1618, %v1364
      %v1620 = vpop.permute.xlu0 %1619
      %1623 = vset.pattern.permute.xlu0 0
      %1624 = vperm.xlu0 %1623, %v1365
      %v1625 = vpop.permute.xlu0 %1624
      %1628 = vset.pattern.permute.xlu0 0
      %1629 = vperm.xlu0 %1628, %v1366
      %v1630 = vpop.permute.xlu0 %1629
      %1633 = vset.pattern.permute.xlu0 0
      %1634 = vperm.xlu0 %1633, %v1367
      %v1635 = vpop.permute.xlu0 %1634
      %1638 = vset.pattern.permute.xlu0 0
      %1639 = vperm.xlu0 %1638, %v1368
      %v1640 = vpop.permute.xlu0 %1639
      %v1642 = vmul.f32 %v1484, %v1565
      %v1643 = vmul.f32 %v1489, %v1570
      %v1644 = vmul.f32 %v1494, %v1575
      %v1645 = vmul.f32 %v1499, %v1580
      %v1646 = vmul.f32 %v1504, %v1585
      %v1647 = vmul.f32 %v1509, %v1590
      %v1648 = vmul.f32 %v1514, %v1595
      %v1649 = vmul.f32 %v1519, %v1600
      %v1650 = vmul.f32 %v1524, %v1605
      %v1651 = vmul.f32 %v1529, %v1610
      %v1652 = vmul.f32 %v1534, %v1615
      %v1653 = vmul.f32 %v1539, %v1620
      %v1654 = vmul.f32 %v1544, %v1625
      %v1655 = vmul.f32 %v1549, %v1630
      %v1656 = vmul.f32 %v1554, %v1635
      %v1657 = vmul.f32 %v1559, %v1640
      %1658 = vset.pattern.permute.xlu0 1
      %1659 = vperm.xlu0 %1658, %v1353
      %v1660 = vpop.permute.xlu0 %1659
      %1662 = vset.pattern.permute.xlu0 1
      %1663 = vperm.xlu0 %1662, %v1354
      %v1664 = vpop.permute.xlu0 %1663
      %1666 = vset.pattern.permute.xlu0 1
      %1667 = vperm.xlu0 %1666, %v1355
      %v1668 = vpop.permute.xlu0 %1667
      %1670 = vset.pattern.permute.xlu0 1
      %1671 = vperm.xlu0 %1670, %v1356
      %v1672 = vpop.permute.xlu0 %1671
      %1674 = vset.pattern.permute.xlu0 1
      %1675 = vperm.xlu0 %1674, %v1357
      %v1676 = vpop.permute.xlu0 %1675
      %1678 = vset.pattern.permute.xlu0 1
      %1679 = vperm.xlu0 %1678, %v1358
      %v1680 = vpop.permute.xlu0 %1679
      %1682 = vset.pattern.permute.xlu0 1
      %1683 = vperm.xlu0 %1682, %v1359
      %v1684 = vpop.permute.xlu0 %1683
      %1686 = vset.pattern.permute.xlu0 1
      %1687 = vperm.xlu0 %1686, %v1360
      %v1688 = vpop.permute.xlu0 %1687
      %1690 = vset.pattern.permute.xlu0 1
      %1691 = vperm.xlu0 %1690, %v1361
      %v1692 = vpop.permute.xlu0 %1691
      %1694 = vset.pattern.permute.xlu0 1
      %1695 = vperm.xlu0 %1694, %v1362
      %v1696 = vpop.permute.xlu0 %1695
      %1698 = vset.pattern.permute.xlu0 1
      %1699 = vperm.xlu0 %1698, %v1363
      %v1700 = vpop.permute.xlu0 %1699
      %1702 = vset.pattern.permute.xlu0 1
      %1703 = vperm.xlu0 %1702, %v1364
      %v1704 = vpop.permute.xlu0 %1703
      %1706 = vset.pattern.permute.xlu0 1
      %1707 = vperm.xlu0 %1706, %v1365
      %v1708 = vpop.permute.xlu0 %1707
      %1710 = vset.pattern.permute.xlu0 1
      %1711 = vperm.xlu0 %1710, %v1366
      %v1712 = vpop.permute.xlu0 %1711
      %1714 = vset.pattern.permute.xlu0 1
      %1715 = vperm.xlu0 %1714, %v1367
      %v1716 = vpop.permute.xlu0 %1715
      %1718 = vset.pattern.permute.xlu0 1
      %1719 = vperm.xlu0 %1718, %v1368
      %v1720 = vpop.permute.xlu0 %1719
      %v1722 = vmul.f32 %v1484, %v1660
      %v1723 = vmul.f32 %v1489, %v1664
      %v1724 = vmul.f32 %v1494, %v1668
      %v1725 = vmul.f32 %v1499, %v1672
      %v1726 = vmul.f32 %v1504, %v1676
      %v1727 = vmul.f32 %v1509, %v1680
      %v1728 = vmul.f32 %v1514, %v1684
      %v1729 = vmul.f32 %v1519, %v1688
      %v1730 = vmul.f32 %v1524, %v1692
      %v1731 = vmul.f32 %v1529, %v1696
      %v1732 = vmul.f32 %v1534, %v1700
      %v1733 = vmul.f32 %v1539, %v1704
      %v1734 = vmul.f32 %v1544, %v1708
      %v1735 = vmul.f32 %v1549, %v1712
      %v1736 = vmul.f32 %v1554, %v1716
      %v1737 = vmul.f32 %v1559, %v1720
      %1754 = vrot.lane.b32.xlu0 %v1722, 120
      %v1755 = vpop.permute.xlu0 %1754
      %1756 = vrot.lane.b32.xlu0 %v1723, 120
      %v1757 = vpop.permute.xlu0 %1756
      %1758 = vrot.lane.b32.xlu0 %v1724, 120
      %v1759 = vpop.permute.xlu0 %1758
      %1760 = vrot.lane.b32.xlu0 %v1725, 120
      %v1761 = vpop.permute.xlu0 %1760
      %1762 = vrot.lane.b32.xlu0 %v1726, 120
      %v1763 = vpop.permute.xlu0 %1762
      %1764 = vrot.lane.b32.xlu0 %v1727, 120
      %v1765 = vpop.permute.xlu0 %1764
      %1766 = vrot.lane.b32.xlu0 %v1728, 120
      %v1767 = vpop.permute.xlu0 %1766
      %1768 = vrot.lane.b32.xlu0 %v1729, 120
      %v1769 = vpop.permute.xlu0 %1768
      %1770 = vrot.lane.b32.xlu0 %v1730, 120
      %v1771 = vpop.permute.xlu0 %1770
      %1772 = vrot.lane.b32.xlu0 %v1731, 120
      %v1773 = vpop.permute.xlu0 %1772
      %1774 = vrot.lane.b32.xlu0 %v1732, 120
      %v1775 = vpop.permute.xlu0 %1774
      %1776 = vrot.lane.b32.xlu0 %v1733, 120
      %v1777 = vpop.permute.xlu0 %1776
      %1778 = vrot.lane.b32.xlu0 %v1734, 120
      %v1779 = vpop.permute.xlu0 %1778
      %1780 = vrot.lane.b32.xlu0 %v1735, 120
      %v1781 = vpop.permute.xlu0 %1780
      %1782 = vrot.lane.b32.xlu0 %v1736, 120
      %v1783 = vpop.permute.xlu0 %1782
      %1784 = vrot.lane.b32.xlu0 %v1737, 120
      %v1785 = vpop.permute.xlu0 %1784
      %v1802 = vadd.f32 %v1642, %v1755
      %v1803 = vadd.f32 %v1643, %v1757
      %v1804 = vadd.f32 %v1644, %v1759
      %v1805 = vadd.f32 %v1645, %v1761
      %v1806 = vadd.f32 %v1646, %v1763
      %v1807 = vadd.f32 %v1647, %v1765
      %v1808 = vadd.f32 %v1648, %v1767
      %v1809 = vadd.f32 %v1649, %v1769
      %v1810 = vadd.f32 %v1650, %v1771
      %v1811 = vadd.f32 %v1651, %v1773
      %v1812 = vadd.f32 %v1652, %v1775
      %v1813 = vadd.f32 %v1653, %v1777
      %v1814 = vadd.f32 %v1654, %v1779
      %v1815 = vadd.f32 %v1655, %v1781
      %v1816 = vadd.f32 %v1656, %v1783
      %v1817 = vadd.f32 %v1657, %v1785
      %1818 = vset.pattern.permute.xlu0 2
      %1819 = vperm.xlu0 %1818, %v1353
      %v1820 = vpop.permute.xlu0 %1819
      %1822 = vset.pattern.permute.xlu0 2
      %1823 = vperm.xlu0 %1822, %v1354
      %v1824 = vpop.permute.xlu0 %1823
      %1826 = vset.pattern.permute.xlu0 2
      %1827 = vperm.xlu0 %1826, %v1355
      %v1828 = vpop.permute.xlu0 %1827
      %1830 = vset.pattern.permute.xlu0 2
      %1831 = vperm.xlu0 %1830, %v1356
      %v1832 = vpop.permute.xlu0 %1831
      %1834 = vset.pattern.permute.xlu0 2
      %1835 = vperm.xlu0 %1834, %v1357
      %v1836 = vpop.permute.xlu0 %1835
      %1838 = vset.pattern.permute.xlu0 2
      %1839 = vperm.xlu0 %1838, %v1358
      %v1840 = vpop.permute.xlu0 %1839
      %1842 = vset.pattern.permute.xlu0 2
      %1843 = vperm.xlu0 %1842, %v1359
      %v1844 = vpop.permute.xlu0 %1843
      %1846 = vset.pattern.permute.xlu0 2
      %1847 = vperm.xlu0 %1846, %v1360
      %v1848 = vpop.permute.xlu0 %1847
      %1850 = vset.pattern.permute.xlu0 2
      %1851 = vperm.xlu0 %1850, %v1361
      %v1852 = vpop.permute.xlu0 %1851
      %1854 = vset.pattern.permute.xlu0 2
      %1855 = vperm.xlu0 %1854, %v1362
      %v1856 = vpop.permute.xlu0 %1855
      %1858 = vset.pattern.permute.xlu0 2
      %1859 = vperm.xlu0 %1858, %v1363
      %v1860 = vpop.permute.xlu0 %1859
      %1862 = vset.pattern.permute.xlu0 2
      %1863 = vperm.xlu0 %1862, %v1364
      %v1864 = vpop.permute.xlu0 %1863
      %1866 = vset.pattern.permute.xlu0 2
      %1867 = vperm.xlu0 %1866, %v1365
      %v1868 = vpop.permute.xlu0 %1867
      %1870 = vset.pattern.permute.xlu0 2
      %1871 = vperm.xlu0 %1870, %v1366
      %v1872 = vpop.permute.xlu0 %1871
      %1874 = vset.pattern.permute.xlu0 2
      %1875 = vperm.xlu0 %1874, %v1367
      %v1876 = vpop.permute.xlu0 %1875
      %1878 = vset.pattern.permute.xlu0 2
      %1879 = vperm.xlu0 %1878, %v1368
      %v1880 = vpop.permute.xlu0 %1879
      %v1882 = vmul.f32 %v1484, %v1820
      %v1883 = vmul.f32 %v1489, %v1824
      %v1884 = vmul.f32 %v1494, %v1828
      %v1885 = vmul.f32 %v1499, %v1832
      %v1886 = vmul.f32 %v1504, %v1836
      %v1887 = vmul.f32 %v1509, %v1840
      %v1888 = vmul.f32 %v1514, %v1844
      %v1889 = vmul.f32 %v1519, %v1848
      %v1890 = vmul.f32 %v1524, %v1852
      %v1891 = vmul.f32 %v1529, %v1856
      %v1892 = vmul.f32 %v1534, %v1860
      %v1893 = vmul.f32 %v1539, %v1864
      %v1894 = vmul.f32 %v1544, %v1868
      %v1895 = vmul.f32 %v1549, %v1872
      %v1896 = vmul.f32 %v1554, %v1876
      %v1897 = vmul.f32 %v1559, %v1880
      %1914 = vrot.lane.b32.xlu0 %v1882, 112
      %v1915 = vpop.permute.xlu0 %1914
      %1916 = vrot.lane.b32.xlu0 %v1883, 112
      %v1917 = vpop.permute.xlu0 %1916
      %1918 = vrot.lane.b32.xlu0 %v1884, 112
      %v1919 = vpop.permute.xlu0 %1918
      %1920 = vrot.lane.b32.xlu0 %v1885, 112
      %v1921 = vpop.permute.xlu0 %1920
      %1922 = vrot.lane.b32.xlu0 %v1886, 112
      %v1923 = vpop.permute.xlu0 %1922
      %1924 = vrot.lane.b32.xlu0 %v1887, 112
      %v1925 = vpop.permute.xlu0 %1924
      %1926 = vrot.lane.b32.xlu0 %v1888, 112
      %v1927 = vpop.permute.xlu0 %1926
      %1928 = vrot.lane.b32.xlu0 %v1889, 112
      %v1929 = vpop.permute.xlu0 %1928
      %1930 = vrot.lane.b32.xlu0 %v1890, 112
      %v1931 = vpop.permute.xlu0 %1930
      %1932 = vrot.lane.b32.xlu0 %v1891, 112
      %v1933 = vpop.permute.xlu0 %1932
      %1934 = vrot.lane.b32.xlu0 %v1892, 112
      %v1935 = vpop.permute.xlu0 %1934
      %1936 = vrot.lane.b32.xlu0 %v1893, 112
      %v1937 = vpop.permute.xlu0 %1936
      %1938 = vrot.lane.b32.xlu0 %v1894, 112
      %v1939 = vpop.permute.xlu0 %1938
      %1940 = vrot.lane.b32.xlu0 %v1895, 112
      %v1941 = vpop.permute.xlu0 %1940
      %1942 = vrot.lane.b32.xlu0 %v1896, 112
      %v1943 = vpop.permute.xlu0 %1942
      %1944 = vrot.lane.b32.xlu0 %v1897, 112
      %v1945 = vpop.permute.xlu0 %1944
      %v1962 = vadd.f32 %v1802, %v1915
      %v1963 = vadd.f32 %v1803, %v1917
      %v1964 = vadd.f32 %v1804, %v1919
      %v1965 = vadd.f32 %v1805, %v1921
      %v1966 = vadd.f32 %v1806, %v1923
      %v1967 = vadd.f32 %v1807, %v1925
      %v1968 = vadd.f32 %v1808, %v1927
      %v1969 = vadd.f32 %v1809, %v1929
      %v1970 = vadd.f32 %v1810, %v1931
      %v1971 = vadd.f32 %v1811, %v1933
      %v1972 = vadd.f32 %v1812, %v1935
      %v1973 = vadd.f32 %v1813, %v1937
      %v1974 = vadd.f32 %v1814, %v1939
      %v1975 = vadd.f32 %v1815, %v1941
      %v1976 = vadd.f32 %v1816, %v1943
      %v1977 = vadd.f32 %v1817, %v1945
      %1978 = vset.pattern.permute.xlu0 3
      %1979 = vperm.xlu0 %1978, %v1353
      %v1980 = vpop.permute.xlu0 %1979
      %1982 = vset.pattern.permute.xlu0 3
      %1983 = vperm.xlu0 %1982, %v1354
      %v1984 = vpop.permute.xlu0 %1983
      %1986 = vset.pattern.permute.xlu0 3
      %1987 = vperm.xlu0 %1986, %v1355
      %v1988 = vpop.permute.xlu0 %1987
      %1990 = vset.pattern.permute.xlu0 3
      %1991 = vperm.xlu0 %1990, %v1356
      %v1992 = vpop.permute.xlu0 %1991
      %1994 = vset.pattern.permute.xlu0 3
      %1995 = vperm.xlu0 %1994, %v1357
      %v1996 = vpop.permute.xlu0 %1995
      %1998 = vset.pattern.permute.xlu0 3
      %1999 = vperm.xlu0 %1998, %v1358
      %v2000 = vpop.permute.xlu0 %1999
      %2002 = vset.pattern.permute.xlu0 3
      %2003 = vperm.xlu0 %2002, %v1359
      %v2004 = vpop.permute.xlu0 %2003
      %2006 = vset.pattern.permute.xlu0 3
      %2007 = vperm.xlu0 %2006, %v1360
      %v2008 = vpop.permute.xlu0 %2007
      %2010 = vset.pattern.permute.xlu0 3
      %2011 = vperm.xlu0 %2010, %v1361
      %v2012 = vpop.permute.xlu0 %2011
      %2014 = vset.pattern.permute.xlu0 3
      %2015 = vperm.xlu0 %2014, %v1362
      %v2016 = vpop.permute.xlu0 %2015
      %2018 = vset.pattern.permute.xlu0 3
      %2019 = vperm.xlu0 %2018, %v1363
      %v2020 = vpop.permute.xlu0 %2019
      %2022 = vset.pattern.permute.xlu0 3
      %2023 = vperm.xlu0 %2022, %v1364
      %v2024 = vpop.permute.xlu0 %2023
      %2026 = vset.pattern.permute.xlu0 3
      %2027 = vperm.xlu0 %2026, %v1365
      %v2028 = vpop.permute.xlu0 %2027
      %2030 = vset.pattern.permute.xlu0 3
      %2031 = vperm.xlu0 %2030, %v1366
      %v2032 = vpop.permute.xlu0 %2031
      %2034 = vset.pattern.permute.xlu0 3
      %2035 = vperm.xlu0 %2034, %v1367
      %v2036 = vpop.permute.xlu0 %2035
      %2038 = vset.pattern.permute.xlu0 3
      %2039 = vperm.xlu0 %2038, %v1368
      %v2040 = vpop.permute.xlu0 %2039
      %v2042 = vmul.f32 %v1484, %v1980
      %v2043 = vmul.f32 %v1489, %v1984
      %v2044 = vmul.f32 %v1494, %v1988
      %v2045 = vmul.f32 %v1499, %v1992
      %v2046 = vmul.f32 %v1504, %v1996
      %v2047 = vmul.f32 %v1509, %v2000
      %v2048 = vmul.f32 %v1514, %v2004
      %v2049 = vmul.f32 %v1519, %v2008
      %v2050 = vmul.f32 %v1524, %v2012
      %v2051 = vmul.f32 %v1529, %v2016
      %v2052 = vmul.f32 %v1534, %v2020
      %v2053 = vmul.f32 %v1539, %v2024
      %v2054 = vmul.f32 %v1544, %v2028
      %v2055 = vmul.f32 %v1549, %v2032
      %v2056 = vmul.f32 %v1554, %v2036
      %v2057 = vmul.f32 %v1559, %v2040
      %2074 = vrot.lane.b32.xlu0 %v2042, 104
      %v2075 = vpop.permute.xlu0 %2074
      %2076 = vrot.lane.b32.xlu0 %v2043, 104
      %v2077 = vpop.permute.xlu0 %2076
      %2078 = vrot.lane.b32.xlu0 %v2044, 104
      %v2079 = vpop.permute.xlu0 %2078
      %2080 = vrot.lane.b32.xlu0 %v2045, 104
      %v2081 = vpop.permute.xlu0 %2080
      %2082 = vrot.lane.b32.xlu0 %v2046, 104
      %v2083 = vpop.permute.xlu0 %2082
      %2084 = vrot.lane.b32.xlu0 %v2047, 104
      %v2085 = vpop.permute.xlu0 %2084
      %2086 = vrot.lane.b32.xlu0 %v2048, 104
      %v2087 = vpop.permute.xlu0 %2086
      %2088 = vrot.lane.b32.xlu0 %v2049, 104
      %v2089 = vpop.permute.xlu0 %2088
      %2090 = vrot.lane.b32.xlu0 %v2050, 104
      %v2091 = vpop.permute.xlu0 %2090
      %2092 = vrot.lane.b32.xlu0 %v2051, 104
      %v2093 = vpop.permute.xlu0 %2092
      %2094 = vrot.lane.b32.xlu0 %v2052, 104
      %v2095 = vpop.permute.xlu0 %2094
      %2096 = vrot.lane.b32.xlu0 %v2053, 104
      %v2097 = vpop.permute.xlu0 %2096
      %2098 = vrot.lane.b32.xlu0 %v2054, 104
      %v2099 = vpop.permute.xlu0 %2098
      %2100 = vrot.lane.b32.xlu0 %v2055, 104
      %v2101 = vpop.permute.xlu0 %2100
      %2102 = vrot.lane.b32.xlu0 %v2056, 104
      %v2103 = vpop.permute.xlu0 %2102
      %2104 = vrot.lane.b32.xlu0 %v2057, 104
      %v2105 = vpop.permute.xlu0 %2104
      %v2122 = vadd.f32 %v1962, %v2075
      %v2123 = vadd.f32 %v1963, %v2077
      %v2124 = vadd.f32 %v1964, %v2079
      %v2125 = vadd.f32 %v1965, %v2081
      %v2126 = vadd.f32 %v1966, %v2083
      %v2127 = vadd.f32 %v1967, %v2085
      %v2128 = vadd.f32 %v1968, %v2087
      %v2129 = vadd.f32 %v1969, %v2089
      %v2130 = vadd.f32 %v1970, %v2091
      %v2131 = vadd.f32 %v1971, %v2093
      %v2132 = vadd.f32 %v1972, %v2095
      %v2133 = vadd.f32 %v1973, %v2097
      %v2134 = vadd.f32 %v1974, %v2099
      %v2135 = vadd.f32 %v1975, %v2101
      %v2136 = vadd.f32 %v1976, %v2103
      %v2137 = vadd.f32 %v1977, %v2105
      %2138 = vset.pattern.permute.xlu0 4
      %2139 = vperm.xlu0 %2138, %v1353
      %v2140 = vpop.permute.xlu0 %2139
      %2142 = vset.pattern.permute.xlu0 4
      %2143 = vperm.xlu0 %2142, %v1354
      %v2144 = vpop.permute.xlu0 %2143
      %2146 = vset.pattern.permute.xlu0 4
      %2147 = vperm.xlu0 %2146, %v1355
      %v2148 = vpop.permute.xlu0 %2147
      %2150 = vset.pattern.permute.xlu0 4
      %2151 = vperm.xlu0 %2150, %v1356
      %v2152 = vpop.permute.xlu0 %2151
      %2154 = vset.pattern.permute.xlu0 4
      %2155 = vperm.xlu0 %2154, %v1357
      %v2156 = vpop.permute.xlu0 %2155
      %2158 = vset.pattern.permute.xlu0 4
      %2159 = vperm.xlu0 %2158, %v1358
      %v2160 = vpop.permute.xlu0 %2159
      %2162 = vset.pattern.permute.xlu0 4
      %2163 = vperm.xlu0 %2162, %v1359
      %v2164 = vpop.permute.xlu0 %2163
      %2166 = vset.pattern.permute.xlu0 4
      %2167 = vperm.xlu0 %2166, %v1360
      %v2168 = vpop.permute.xlu0 %2167
      %2170 = vset.pattern.permute.xlu0 4
      %2171 = vperm.xlu0 %2170, %v1361
      %v2172 = vpop.permute.xlu0 %2171
      %2174 = vset.pattern.permute.xlu0 4
      %2175 = vperm.xlu0 %2174, %v1362
      %v2176 = vpop.permute.xlu0 %2175
      %2178 = vset.pattern.permute.xlu0 4
      %2179 = vperm.xlu0 %2178, %v1363
      %v2180 = vpop.permute.xlu0 %2179
      %2182 = vset.pattern.permute.xlu0 4
      %2183 = vperm.xlu0 %2182, %v1364
      %v2184 = vpop.permute.xlu0 %2183
      %2186 = vset.pattern.permute.xlu0 4
      %2187 = vperm.xlu0 %2186, %v1365
      %v2188 = vpop.permute.xlu0 %2187
      %2190 = vset.pattern.permute.xlu0 4
      %2191 = vperm.xlu0 %2190, %v1366
      %v2192 = vpop.permute.xlu0 %2191
      %2194 = vset.pattern.permute.xlu0 4
      %2195 = vperm.xlu0 %2194, %v1367
      %v2196 = vpop.permute.xlu0 %2195
      %2198 = vset.pattern.permute.xlu0 4
      %2199 = vperm.xlu0 %2198, %v1368
      %v2200 = vpop.permute.xlu0 %2199
      %v2202 = vmul.f32 %v1484, %v2140
      %v2203 = vmul.f32 %v1489, %v2144
      %v2204 = vmul.f32 %v1494, %v2148
      %v2205 = vmul.f32 %v1499, %v2152
      %v2206 = vmul.f32 %v1504, %v2156
      %v2207 = vmul.f32 %v1509, %v2160
      %v2208 = vmul.f32 %v1514, %v2164
      %v2209 = vmul.f32 %v1519, %v2168
      %v2210 = vmul.f32 %v1524, %v2172
      %v2211 = vmul.f32 %v1529, %v2176
      %v2212 = vmul.f32 %v1534, %v2180
      %v2213 = vmul.f32 %v1539, %v2184
      %v2214 = vmul.f32 %v1544, %v2188
      %v2215 = vmul.f32 %v1549, %v2192
      %v2216 = vmul.f32 %v1554, %v2196
      %v2217 = vmul.f32 %v1559, %v2200
      %2234 = vrot.lane.b32.xlu0 %v2202, 96
      %v2235 = vpop.permute.xlu0 %2234
      %2236 = vrot.lane.b32.xlu0 %v2203, 96
      %v2237 = vpop.permute.xlu0 %2236
      %2238 = vrot.lane.b32.xlu0 %v2204, 96
      %v2239 = vpop.permute.xlu0 %2238
      %2240 = vrot.lane.b32.xlu0 %v2205, 96
      %v2241 = vpop.permute.xlu0 %2240
      %2242 = vrot.lane.b32.xlu0 %v2206, 96
      %v2243 = vpop.permute.xlu0 %2242
      %2244 = vrot.lane.b32.xlu0 %v2207, 96
      %v2245 = vpop.permute.xlu0 %2244
      %2246 = vrot.lane.b32.xlu0 %v2208, 96
      %v2247 = vpop.permute.xlu0 %2246
      %2248 = vrot.lane.b32.xlu0 %v2209, 96
      %v2249 = vpop.permute.xlu0 %2248
      %2250 = vrot.lane.b32.xlu0 %v2210, 96
      %v2251 = vpop.permute.xlu0 %2250
      %2252 = vrot.lane.b32.xlu0 %v2211, 96
      %v2253 = vpop.permute.xlu0 %2252
      %2254 = vrot.lane.b32.xlu0 %v2212, 96
      %v2255 = vpop.permute.xlu0 %2254
      %2256 = vrot.lane.b32.xlu0 %v2213, 96
      %v2257 = vpop.permute.xlu0 %2256
      %2258 = vrot.lane.b32.xlu0 %v2214, 96
      %v2259 = vpop.permute.xlu0 %2258
      %2260 = vrot.lane.b32.xlu0 %v2215, 96
      %v2261 = vpop.permute.xlu0 %2260
      %2262 = vrot.lane.b32.xlu0 %v2216, 96
      %v2263 = vpop.permute.xlu0 %2262
      %2264 = vrot.lane.b32.xlu0 %v2217, 96
      %v2265 = vpop.permute.xlu0 %2264
      %v2282 = vadd.f32 %v2122, %v2235
      %v2283 = vadd.f32 %v2123, %v2237
      %v2284 = vadd.f32 %v2124, %v2239
      %v2285 = vadd.f32 %v2125, %v2241
      %v2286 = vadd.f32 %v2126, %v2243
      %v2287 = vadd.f32 %v2127, %v2245
      %v2288 = vadd.f32 %v2128, %v2247
      %v2289 = vadd.f32 %v2129, %v2249
      %v2290 = vadd.f32 %v2130, %v2251
      %v2291 = vadd.f32 %v2131, %v2253
      %v2292 = vadd.f32 %v2132, %v2255
      %v2293 = vadd.f32 %v2133, %v2257
      %v2294 = vadd.f32 %v2134, %v2259
      %v2295 = vadd.f32 %v2135, %v2261
      %v2296 = vadd.f32 %v2136, %v2263
      %v2297 = vadd.f32 %v2137, %v2265
      %2298 = vset.pattern.permute.xlu0 5
      %2299 = vperm.xlu0 %2298, %v1353
      %v2300 = vpop.permute.xlu0 %2299
      %2302 = vset.pattern.permute.xlu0 5
      %2303 = vperm.xlu0 %2302, %v1354
      %v2304 = vpop.permute.xlu0 %2303
      %2306 = vset.pattern.permute.xlu0 5
      %2307 = vperm.xlu0 %2306, %v1355
      %v2308 = vpop.permute.xlu0 %2307
      %2310 = vset.pattern.permute.xlu0 5
      %2311 = vperm.xlu0 %2310, %v1356
      %v2312 = vpop.permute.xlu0 %2311
      %2314 = vset.pattern.permute.xlu0 5
      %2315 = vperm.xlu0 %2314, %v1357
      %v2316 = vpop.permute.xlu0 %2315
      %2318 = vset.pattern.permute.xlu0 5
      %2319 = vperm.xlu0 %2318, %v1358
      %v2320 = vpop.permute.xlu0 %2319
      %2322 = vset.pattern.permute.xlu0 5
      %2323 = vperm.xlu0 %2322, %v1359
      %v2324 = vpop.permute.xlu0 %2323
      %2326 = vset.pattern.permute.xlu0 5
      %2327 = vperm.xlu0 %2326, %v1360
      %v2328 = vpop.permute.xlu0 %2327
      %2330 = vset.pattern.permute.xlu0 5
      %2331 = vperm.xlu0 %2330, %v1361
      %v2332 = vpop.permute.xlu0 %2331
      %2334 = vset.pattern.permute.xlu0 5
      %2335 = vperm.xlu0 %2334, %v1362
      %v2336 = vpop.permute.xlu0 %2335
      %2338 = vset.pattern.permute.xlu0 5
      %2339 = vperm.xlu0 %2338, %v1363
      %v2340 = vpop.permute.xlu0 %2339
      %2342 = vset.pattern.permute.xlu0 5
      %2343 = vperm.xlu0 %2342, %v1364
      %v2344 = vpop.permute.xlu0 %2343
      %2346 = vset.pattern.permute.xlu0 5
      %2347 = vperm.xlu0 %2346, %v1365
      %v2348 = vpop.permute.xlu0 %2347
      %2350 = vset.pattern.permute.xlu0 5
      %2351 = vperm.xlu0 %2350, %v1366
      %v2352 = vpop.permute.xlu0 %2351
      %2354 = vset.pattern.permute.xlu0 5
      %2355 = vperm.xlu0 %2354, %v1367
      %v2356 = vpop.permute.xlu0 %2355
      %2358 = vset.pattern.permute.xlu0 5
      %2359 = vperm.xlu0 %2358, %v1368
      %v2360 = vpop.permute.xlu0 %2359
      %v2362 = vmul.f32 %v1484, %v2300
      %v2363 = vmul.f32 %v1489, %v2304
      %v2364 = vmul.f32 %v1494, %v2308
      %v2365 = vmul.f32 %v1499, %v2312
      %v2366 = vmul.f32 %v1504, %v2316
      %v2367 = vmul.f32 %v1509, %v2320
      %v2368 = vmul.f32 %v1514, %v2324
      %v2369 = vmul.f32 %v1519, %v2328
      %v2370 = vmul.f32 %v1524, %v2332
      %v2371 = vmul.f32 %v1529, %v2336
      %v2372 = vmul.f32 %v1534, %v2340
      %v2373 = vmul.f32 %v1539, %v2344
      %v2374 = vmul.f32 %v1544, %v2348
      %v2375 = vmul.f32 %v1549, %v2352
      %v2376 = vmul.f32 %v1554, %v2356
      %v2377 = vmul.f32 %v1559, %v2360
      %2394 = vrot.lane.b32.xlu0 %v2362, 88
      %v2395 = vpop.permute.xlu0 %2394
      %2396 = vrot.lane.b32.xlu0 %v2363, 88
      %v2397 = vpop.permute.xlu0 %2396
      %2398 = vrot.lane.b32.xlu0 %v2364, 88
      %v2399 = vpop.permute.xlu0 %2398
      %2400 = vrot.lane.b32.xlu0 %v2365, 88
      %v2401 = vpop.permute.xlu0 %2400
      %2402 = vrot.lane.b32.xlu0 %v2366, 88
      %v2403 = vpop.permute.xlu0 %2402
      %2404 = vrot.lane.b32.xlu0 %v2367, 88
      %v2405 = vpop.permute.xlu0 %2404
      %2406 = vrot.lane.b32.xlu0 %v2368, 88
      %v2407 = vpop.permute.xlu0 %2406
      %2408 = vrot.lane.b32.xlu0 %v2369, 88
      %v2409 = vpop.permute.xlu0 %2408
      %2410 = vrot.lane.b32.xlu0 %v2370, 88
      %v2411 = vpop.permute.xlu0 %2410
      %2412 = vrot.lane.b32.xlu0 %v2371, 88
      %v2413 = vpop.permute.xlu0 %2412
      %2414 = vrot.lane.b32.xlu0 %v2372, 88
      %v2415 = vpop.permute.xlu0 %2414
      %2416 = vrot.lane.b32.xlu0 %v2373, 88
      %v2417 = vpop.permute.xlu0 %2416
      %2418 = vrot.lane.b32.xlu0 %v2374, 88
      %v2419 = vpop.permute.xlu0 %2418
      %2420 = vrot.lane.b32.xlu0 %v2375, 88
      %v2421 = vpop.permute.xlu0 %2420
      %2422 = vrot.lane.b32.xlu0 %v2376, 88
      %v2423 = vpop.permute.xlu0 %2422
      %2424 = vrot.lane.b32.xlu0 %v2377, 88
      %v2425 = vpop.permute.xlu0 %2424
      %v2442 = vadd.f32 %v2282, %v2395
      %v2443 = vadd.f32 %v2283, %v2397
      %v2444 = vadd.f32 %v2284, %v2399
      %v2445 = vadd.f32 %v2285, %v2401
      %v2446 = vadd.f32 %v2286, %v2403
      %v2447 = vadd.f32 %v2287, %v2405
      %v2448 = vadd.f32 %v2288, %v2407
      %v2449 = vadd.f32 %v2289, %v2409
      %v2450 = vadd.f32 %v2290, %v2411
      %v2451 = vadd.f32 %v2291, %v2413
      %v2452 = vadd.f32 %v2292, %v2415
      %v2453 = vadd.f32 %v2293, %v2417
      %v2454 = vadd.f32 %v2294, %v2419
      %v2455 = vadd.f32 %v2295, %v2421
      %v2456 = vadd.f32 %v2296, %v2423
      %v2457 = vadd.f32 %v2297, %v2425
      %s2458 = scalar_lea.vmem %s194, 128
      %2459 = vst.msk [vmem:[%s2458] sm:$0xff] %vm229, %v2442
      %2460 = vst.msk [vmem:[%s2458 + $0x8] sm:$0xff] %vm229, %v2443
      %2461 = vst.msk [vmem:[%s2458 + $0x10] sm:$0xff] %vm229, %v2444
      %2462 = vst.msk [vmem:[%s2458 + $0x18] sm:$0xff] %vm229, %v2445
      %2463 = vst.msk [vmem:[%s2458 + $0x20] sm:$0xff] %vm229, %v2446
      %2464 = vst.msk [vmem:[%s2458 + $0x28] sm:$0xff] %vm229, %v2447
      %2465 = vst.msk [vmem:[%s2458 + $0x30] sm:$0xff] %vm229, %v2448
      %2466 = vst.msk [vmem:[%s2458 + $0x38] sm:$0xff] %vm229, %v2449
      %2467 = vst.msk [vmem:[%s2458 + $0x40] sm:$0xff] %vm229, %v2450
      %2468 = vst.msk [vmem:[%s2458 + $0x48] sm:$0xff] %vm229, %v2451
      %2469 = vst.msk [vmem:[%s2458 + $0x50] sm:$0xff] %vm229, %v2452
      %2470 = vst.msk [vmem:[%s2458 + $0x58] sm:$0xff] %vm229, %v2453
      %2471 = vst.msk [vmem:[%s2458 + $0x60] sm:$0xff] %vm229, %v2454
      %2472 = vst.msk [vmem:[%s2458 + $0x68] sm:$0xff] %vm229, %v2455
      %2473 = vst.msk [vmem:[%s2458 + $0x70] sm:$0xff] %vm229, %v2456
      %2474 = vst.msk [vmem:[%s2458 + $0x78] sm:$0xff] %vm229, %v2457
      %s2475 = scalar_lea.vmem %s182, 256
      %v2476 = vld [vmem:[%s2475] sm:$0xff]
      %v2477 = vld [vmem:[%s2475 + $0x8] sm:$0xff]
      %v2478 = vld [vmem:[%s2475 + $0x10] sm:$0xff]
      %v2479 = vld [vmem:[%s2475 + $0x18] sm:$0xff]
      %v2480 = vld [vmem:[%s2475 + $0x20] sm:$0xff]
      %v2481 = vld [vmem:[%s2475 + $0x28] sm:$0xff]
      %v2482 = vld [vmem:[%s2475 + $0x30] sm:$0xff]
      %v2483 = vld [vmem:[%s2475 + $0x38] sm:$0xff]
      %v2484 = vld [vmem:[%s2475 + $0x40] sm:$0xff]
      %v2485 = vld [vmem:[%s2475 + $0x48] sm:$0xff]
      %v2486 = vld [vmem:[%s2475 + $0x50] sm:$0xff]
      %v2487 = vld [vmem:[%s2475 + $0x58] sm:$0xff]
      %v2488 = vld [vmem:[%s2475 + $0x60] sm:$0xff]
      %v2489 = vld [vmem:[%s2475 + $0x68] sm:$0xff]
      %v2490 = vld [vmem:[%s2475 + $0x70] sm:$0xff]
      %v2491 = vld [vmem:[%s2475 + $0x78] sm:$0xff]
      %s2492 = scalar_lea.vmem %s188, 256
      %v2493 = vld [vmem:[%s2492] sm:$0xff]
      %v2494 = vld [vmem:[%s2492 + $0x8] sm:$0xff]
      %v2495 = vld [vmem:[%s2492 + $0x10] sm:$0xff]
      %v2496 = vld [vmem:[%s2492 + $0x18] sm:$0xff]
      %v2497 = vld [vmem:[%s2492 + $0x20] sm:$0xff]
      %v2498 = vld [vmem:[%s2492 + $0x28] sm:$0xff]
      %v2499 = vld [vmem:[%s2492 + $0x30] sm:$0xff]
      %v2500 = vld [vmem:[%s2492 + $0x38] sm:$0xff]
      %v2501 = vld [vmem:[%s2492 + $0x40] sm:$0xff]
      %v2502 = vld [vmem:[%s2492 + $0x48] sm:$0xff]
      %v2503 = vld [vmem:[%s2492 + $0x50] sm:$0xff]
      %v2504 = vld [vmem:[%s2492 + $0x58] sm:$0xff]
      %v2505 = vld [vmem:[%s2492 + $0x60] sm:$0xff]
      %v2506 = vld [vmem:[%s2492 + $0x68] sm:$0xff]
      %v2507 = vld [vmem:[%s2492 + $0x70] sm:$0xff]
      %v2508 = vld [vmem:[%s2492 + $0x78] sm:$0xff]
      %v2510 = vsel %vm229, %v2476, 0
      %v2513 = vsel %vm229, %v2477, 0
      %v2516 = vsel %vm229, %v2478, 0
      %v2519 = vsel %vm229, %v2479, 0
      %v2522 = vsel %vm229, %v2480, 0
      %v2525 = vsel %vm229, %v2481, 0
      %v2528 = vsel %vm229, %v2482, 0
      %v2531 = vsel %vm229, %v2483, 0
      %v2534 = vsel %vm229, %v2484, 0
      %v2537 = vsel %vm229, %v2485, 0
      %v2540 = vsel %vm229, %v2486, 0
      %v2543 = vsel %vm229, %v2487, 0
      %v2546 = vsel %vm229, %v2488, 0
      %v2549 = vsel %vm229, %v2489, 0
      %v2552 = vsel %vm229, %v2490, 0
      %v2555 = vsel %vm229, %v2491, 0
      %2557 = vmatprep.subr.mxu0 0.0
      %2558 = vmatpush1.msra.mxu0 0.0
      %2559 = vmatprep.subr.mxu0 0.0
      %2560 = vmatpush1.msra.mxu0 0.0
      %2561 = vmatprep.subr.mxu0 0.0
      %2562 = vmatpush1.msra.mxu0 0.0
      %2563 = vmatprep.subr.mxu0 0.0
      %2564 = vmatpush1.msra.mxu0 0.0
      %2565 = vmatprep.subr.mxu0 0.0
      %2566 = vmatpush1.msra.mxu0 0.0
      %2567 = vmatprep.subr.mxu0 0.0
      %2568 = vmatpush1.msra.mxu0 0.0
      %2569 = vmatprep.subr.mxu0 0.0
      %2570 = vmatpush1.msra.mxu0 0.0
      %2571 = vmatprep.subr.mxu0 0.0
      %2572 = vmatpush1.msra.mxu0 0.0
      %2573 = vmatprep.subr.mxu0 0.0
      %2574 = vmatpush1.msra.mxu0 0.0
      %2575 = vmatprep.subr.mxu0 0.0
      %2576 = vmatpush1.msra.mxu0 0.0
      %2577 = vmatprep.subr.mxu0 0.0
      %2578 = vmatpush1.msra.mxu0 0.0
      %2579 = vmatprep.subr.mxu0 0.0
      %2580 = vmatpush1.msra.mxu0 0.0
      %2581 = vmatprep.subr.mxu0 0.0
      %2582 = vmatpush1.msra.mxu0 0.0
      %2583 = vmatprep.subr.mxu0 0.0
      %2584 = vmatpush1.msra.mxu0 0.0
      %2585 = vmatprep.subr.mxu0 0.0
      %2586 = vmatpush1.msra.mxu0 0.0
      %2587 = vmatprep.subr.mxu0 0.0
      %2588 = vmatpush1.msra.mxu0 %v196
      %2589 = vmatprep.subr.mxu0 0.0
      %2590 = vmatpush2.msra.mxu0 0.0
      %2591 = vmatprep.subr.mxu0 0.0
      %2592 = vmatpush2.msra.mxu0 0.0
      %2593 = vmatprep.subr.mxu0 0.0
      %2594 = vmatpush2.msra.mxu0 0.0
      %2595 = vmatprep.subr.mxu0 0.0
      %2596 = vmatpush2.msra.mxu0 0.0
      %2597 = vmatprep.subr.mxu0 0.0
      %2598 = vmatpush2.msra.mxu0 0.0
      %2599 = vmatprep.subr.mxu0 0.0
      %2600 = vmatpush2.msra.mxu0 0.0
      %2601 = vmatprep.subr.mxu0 0.0
      %2602 = vmatpush2.msra.mxu0 0.0
      %2603 = vmatprep.subr.mxu0 0.0
      %2604 = vmatpush2.msra.mxu0 0.0
      %2605 = vmatprep.subr.mxu0 0.0
      %2606 = vmatpush2.msra.mxu0 0.0
      %2607 = vmatprep.subr.mxu0 0.0
      %2608 = vmatpush2.msra.mxu0 0.0
      %2609 = vmatprep.subr.mxu0 0.0
      %2610 = vmatpush2.msra.mxu0 0.0
      %2611 = vmatprep.subr.mxu0 0.0
      %2612 = vmatpush2.msra.mxu0 0.0
      %2613 = vmatprep.subr.mxu0 0.0
      %2614 = vmatpush2.msra.mxu0 0.0
      %2615 = vmatprep.subr.mxu0 0.0
      %2616 = vmatpush2.msra.mxu0 0.0
      %2617 = vmatprep.subr.mxu0 0.0
      %2618 = vmatpush2.msra.mxu0 0.0
      %2619 = vmatprep.subr.mxu0 0.0
      %2620 = vmatpush2.msra.mxu0 0.0
      %2621 = vmatprep.mubr.f32.mxu0 0.0
      %2622 = vmatmul.mubr.f32.gmra.mxu0 %v2510
      %v2623 = vpop.f32.mrf.mxu0
      %v2624 = vadd.f32 0.0, %v2623
      %v2625 = vpop.f32.mrf.mxu0
      %2626 = vmatprep.mubr.f32.mxu0 0.0
      %2627 = vmatmul.mubr.f32.gmra.mxu0 %v2513
      %v2628 = vpop.f32.mrf.mxu0
      %v2629 = vadd.f32 0.0, %v2628
      %v2630 = vpop.f32.mrf.mxu0
      %2631 = vmatprep.mubr.f32.mxu0 0.0
      %2632 = vmatmul.mubr.f32.gmra.mxu0 %v2516
      %v2633 = vpop.f32.mrf.mxu0
      %v2634 = vadd.f32 0.0, %v2633
      %v2635 = vpop.f32.mrf.mxu0
      %2636 = vmatprep.mubr.f32.mxu0 0.0
      %2637 = vmatmul.mubr.f32.gmra.mxu0 %v2519
      %v2638 = vpop.f32.mrf.mxu0
      %v2639 = vadd.f32 0.0, %v2638
      %v2640 = vpop.f32.mrf.mxu0
      %2641 = vmatprep.mubr.f32.mxu0 0.0
      %2642 = vmatmul.mubr.f32.gmra.mxu0 %v2522
      %v2643 = vpop.f32.mrf.mxu0
      %v2644 = vadd.f32 0.0, %v2643
      %v2645 = vpop.f32.mrf.mxu0
      %2646 = vmatprep.mubr.f32.mxu0 0.0
      %2647 = vmatmul.mubr.f32.gmra.mxu0 %v2525
      %v2648 = vpop.f32.mrf.mxu0
      %v2649 = vadd.f32 0.0, %v2648
      %v2650 = vpop.f32.mrf.mxu0
      %2651 = vmatprep.mubr.f32.mxu0 0.0
      %2652 = vmatmul.mubr.f32.gmra.mxu0 %v2528
      %v2653 = vpop.f32.mrf.mxu0
      %v2654 = vadd.f32 0.0, %v2653
      %v2655 = vpop.f32.mrf.mxu0
      %2656 = vmatprep.mubr.f32.mxu0 0.0
      %2657 = vmatmul.mubr.f32.gmra.mxu0 %v2531
      %v2658 = vpop.f32.mrf.mxu0
      %v2659 = vadd.f32 0.0, %v2658
      %v2660 = vpop.f32.mrf.mxu0
      %2661 = vmatprep.mubr.f32.mxu0 0.0
      %2662 = vmatmul.mubr.f32.gmra.mxu0 %v2534
      %v2663 = vpop.f32.mrf.mxu0
      %v2664 = vadd.f32 0.0, %v2663
      %v2665 = vpop.f32.mrf.mxu0
      %2666 = vmatprep.mubr.f32.mxu0 0.0
      %2667 = vmatmul.mubr.f32.gmra.mxu0 %v2537
      %v2668 = vpop.f32.mrf.mxu0
      %v2669 = vadd.f32 0.0, %v2668
      %v2670 = vpop.f32.mrf.mxu0
      %2671 = vmatprep.mubr.f32.mxu0 0.0
      %2672 = vmatmul.mubr.f32.gmra.mxu0 %v2540
      %v2673 = vpop.f32.mrf.mxu0
      %v2674 = vadd.f32 0.0, %v2673
      %v2675 = vpop.f32.mrf.mxu0
      %2676 = vmatprep.mubr.f32.mxu0 0.0
      %2677 = vmatmul.mubr.f32.gmra.mxu0 %v2543
      %v2678 = vpop.f32.mrf.mxu0
      %v2679 = vadd.f32 0.0, %v2678
      %v2680 = vpop.f32.mrf.mxu0
      %2681 = vmatprep.mubr.f32.mxu0 0.0
      %2682 = vmatmul.mubr.f32.gmra.mxu0 %v2546
      %v2683 = vpop.f32.mrf.mxu0
      %v2684 = vadd.f32 0.0, %v2683
      %v2685 = vpop.f32.mrf.mxu0
      %2686 = vmatprep.mubr.f32.mxu0 0.0
      %2687 = vmatmul.mubr.f32.gmra.mxu0 %v2549
      %v2688 = vpop.f32.mrf.mxu0
      %v2689 = vadd.f32 0.0, %v2688
      %v2690 = vpop.f32.mrf.mxu0
      %2691 = vmatprep.mubr.f32.mxu0 0.0
      %2692 = vmatmul.mubr.f32.gmra.mxu0 %v2552
      %v2693 = vpop.f32.mrf.mxu0
      %v2694 = vadd.f32 0.0, %v2693
      %v2695 = vpop.f32.mrf.mxu0
      %2696 = vmatprep.mubr.f32.mxu0 0.0
      %2697 = vmatmul.mubr.f32.gmra.mxu0 %v2555
      %v2698 = vpop.f32.mrf.mxu0
      %v2699 = vadd.f32 0.0, %v2698
      %v2700 = vpop.f32.mrf.mxu0
      %2701 = vdwg.mxu0
      %2703 = vset.pattern.permute.xlu0 0
      %2704 = vperm.xlu0 %2703, %v2493
      %v2705 = vpop.permute.xlu0 %2704
      %2708 = vset.pattern.permute.xlu0 0
      %2709 = vperm.xlu0 %2708, %v2494
      %v2710 = vpop.permute.xlu0 %2709
      %2713 = vset.pattern.permute.xlu0 0
      %2714 = vperm.xlu0 %2713, %v2495
      %v2715 = vpop.permute.xlu0 %2714
      %2718 = vset.pattern.permute.xlu0 0
      %2719 = vperm.xlu0 %2718, %v2496
      %v2720 = vpop.permute.xlu0 %2719
      %2723 = vset.pattern.permute.xlu0 0
      %2724 = vperm.xlu0 %2723, %v2497
      %v2725 = vpop.permute.xlu0 %2724
      %2728 = vset.pattern.permute.xlu0 0
      %2729 = vperm.xlu0 %2728, %v2498
      %v2730 = vpop.permute.xlu0 %2729
      %2733 = vset.pattern.permute.xlu0 0
      %2734 = vperm.xlu0 %2733, %v2499
      %v2735 = vpop.permute.xlu0 %2734
      %2738 = vset.pattern.permute.xlu0 0
      %2739 = vperm.xlu0 %2738, %v2500
      %v2740 = vpop.permute.xlu0 %2739
      %2743 = vset.pattern.permute.xlu0 0
      %2744 = vperm.xlu0 %2743, %v2501
      %v2745 = vpop.permute.xlu0 %2744
      %2748 = vset.pattern.permute.xlu0 0
      %2749 = vperm.xlu0 %2748, %v2502
      %v2750 = vpop.permute.xlu0 %2749
      %2753 = vset.pattern.permute.xlu0 0
      %2754 = vperm.xlu0 %2753, %v2503
      %v2755 = vpop.permute.xlu0 %2754
      %2758 = vset.pattern.permute.xlu0 0
      %2759 = vperm.xlu0 %2758, %v2504
      %v2760 = vpop.permute.xlu0 %2759
      %2763 = vset.pattern.permute.xlu0 0
      %2764 = vperm.xlu0 %2763, %v2505
      %v2765 = vpop.permute.xlu0 %2764
      %2768 = vset.pattern.permute.xlu0 0
      %2769 = vperm.xlu0 %2768, %v2506
      %v2770 = vpop.permute.xlu0 %2769
      %2773 = vset.pattern.permute.xlu0 0
      %2774 = vperm.xlu0 %2773, %v2507
      %v2775 = vpop.permute.xlu0 %2774
      %2778 = vset.pattern.permute.xlu0 0
      %2779 = vperm.xlu0 %2778, %v2508
      %v2780 = vpop.permute.xlu0 %2779
      %v2782 = vmul.f32 %v2624, %v2705
      %v2783 = vmul.f32 %v2629, %v2710
      %v2784 = vmul.f32 %v2634, %v2715
      %v2785 = vmul.f32 %v2639, %v2720
      %v2786 = vmul.f32 %v2644, %v2725
      %v2787 = vmul.f32 %v2649, %v2730
      %v2788 = vmul.f32 %v2654, %v2735
      %v2789 = vmul.f32 %v2659, %v2740
      %v2790 = vmul.f32 %v2664, %v2745
      %v2791 = vmul.f32 %v2669, %v2750
      %v2792 = vmul.f32 %v2674, %v2755
      %v2793 = vmul.f32 %v2679, %v2760
      %v2794 = vmul.f32 %v2684, %v2765
      %v2795 = vmul.f32 %v2689, %v2770
      %v2796 = vmul.f32 %v2694, %v2775
      %v2797 = vmul.f32 %v2699, %v2780
      %2798 = vset.pattern.permute.xlu0 1
      %2799 = vperm.xlu0 %2798, %v2493
      %v2800 = vpop.permute.xlu0 %2799
      %2802 = vset.pattern.permute.xlu0 1
      %2803 = vperm.xlu0 %2802, %v2494
      %v2804 = vpop.permute.xlu0 %2803
      %2806 = vset.pattern.permute.xlu0 1
      %2807 = vperm.xlu0 %2806, %v2495
      %v2808 = vpop.permute.xlu0 %2807
      %2810 = vset.pattern.permute.xlu0 1
      %2811 = vperm.xlu0 %2810, %v2496
      %v2812 = vpop.permute.xlu0 %2811
      %2814 = vset.pattern.permute.xlu0 1
      %2815 = vperm.xlu0 %2814, %v2497
      %v2816 = vpop.permute.xlu0 %2815
      %2818 = vset.pattern.permute.xlu0 1
      %2819 = vperm.xlu0 %2818, %v2498
      %v2820 = vpop.permute.xlu0 %2819
      %2822 = vset.pattern.permute.xlu0 1
      %2823 = vperm.xlu0 %2822, %v2499
      %v2824 = vpop.permute.xlu0 %2823
      %2826 = vset.pattern.permute.xlu0 1
      %2827 = vperm.xlu0 %2826, %v2500
      %v2828 = vpop.permute.xlu0 %2827
      %2830 = vset.pattern.permute.xlu0 1
      %2831 = vperm.xlu0 %2830, %v2501
      %v2832 = vpop.permute.xlu0 %2831
      %2834 = vset.pattern.permute.xlu0 1
      %2835 = vperm.xlu0 %2834, %v2502
      %v2836 = vpop.permute.xlu0 %2835
      %2838 = vset.pattern.permute.xlu0 1
      %2839 = vperm.xlu0 %2838, %v2503
      %v2840 = vpop.permute.xlu0 %2839
      %2842 = vset.pattern.permute.xlu0 1
      %2843 = vperm.xlu0 %2842, %v2504
      %v2844 = vpop.permute.xlu0 %2843
      %2846 = vset.pattern.permute.xlu0 1
      %2847 = vperm.xlu0 %2846, %v2505
      %v2848 = vpop.permute.xlu0 %2847
      %2850 = vset.pattern.permute.xlu0 1
      %2851 = vperm.xlu0 %2850, %v2506
      %v2852 = vpop.permute.xlu0 %2851
      %2854 = vset.pattern.permute.xlu0 1
      %2855 = vperm.xlu0 %2854, %v2507
      %v2856 = vpop.permute.xlu0 %2855
      %2858 = vset.pattern.permute.xlu0 1
      %2859 = vperm.xlu0 %2858, %v2508
      %v2860 = vpop.permute.xlu0 %2859
      %v2862 = vmul.f32 %v2624, %v2800
      %v2863 = vmul.f32 %v2629, %v2804
      %v2864 = vmul.f32 %v2634, %v2808
      %v2865 = vmul.f32 %v2639, %v2812
      %v2866 = vmul.f32 %v2644, %v2816
      %v2867 = vmul.f32 %v2649, %v2820
      %v2868 = vmul.f32 %v2654, %v2824
      %v2869 = vmul.f32 %v2659, %v2828
      %v2870 = vmul.f32 %v2664, %v2832
      %v2871 = vmul.f32 %v2669, %v2836
      %v2872 = vmul.f32 %v2674, %v2840
      %v2873 = vmul.f32 %v2679, %v2844
      %v2874 = vmul.f32 %v2684, %v2848
      %v2875 = vmul.f32 %v2689, %v2852
      %v2876 = vmul.f32 %v2694, %v2856
      %v2877 = vmul.f32 %v2699, %v2860
      %2894 = vrot.lane.b32.xlu0 %v2862, 120
      %v2895 = vpop.permute.xlu0 %2894
      %2896 = vrot.lane.b32.xlu0 %v2863, 120
      %v2897 = vpop.permute.xlu0 %2896
      %2898 = vrot.lane.b32.xlu0 %v2864, 120
      %v2899 = vpop.permute.xlu0 %2898
      %2900 = vrot.lane.b32.xlu0 %v2865, 120
      %v2901 = vpop.permute.xlu0 %2900
      %2902 = vrot.lane.b32.xlu0 %v2866, 120
      %v2903 = vpop.permute.xlu0 %2902
      %2904 = vrot.lane.b32.xlu0 %v2867, 120
      %v2905 = vpop.permute.xlu0 %2904
      %2906 = vrot.lane.b32.xlu0 %v2868, 120
      %v2907 = vpop.permute.xlu0 %2906
      %2908 = vrot.lane.b32.xlu0 %v2869, 120
      %v2909 = vpop.permute.xlu0 %2908
      %2910 = vrot.lane.b32.xlu0 %v2870, 120
      %v2911 = vpop.permute.xlu0 %2910
      %2912 = vrot.lane.b32.xlu0 %v2871, 120
      %v2913 = vpop.permute.xlu0 %2912
      %2914 = vrot.lane.b32.xlu0 %v2872, 120
      %v2915 = vpop.permute.xlu0 %2914
      %2916 = vrot.lane.b32.xlu0 %v2873, 120
      %v2917 = vpop.permute.xlu0 %2916
      %2918 = vrot.lane.b32.xlu0 %v2874, 120
      %v2919 = vpop.permute.xlu0 %2918
      %2920 = vrot.lane.b32.xlu0 %v2875, 120
      %v2921 = vpop.permute.xlu0 %2920
      %2922 = vrot.lane.b32.xlu0 %v2876, 120
      %v2923 = vpop.permute.xlu0 %2922
      %2924 = vrot.lane.b32.xlu0 %v2877, 120
      %v2925 = vpop.permute.xlu0 %2924
      %v2942 = vadd.f32 %v2782, %v2895
      %v2943 = vadd.f32 %v2783, %v2897
      %v2944 = vadd.f32 %v2784, %v2899
      %v2945 = vadd.f32 %v2785, %v2901
      %v2946 = vadd.f32 %v2786, %v2903
      %v2947 = vadd.f32 %v2787, %v2905
      %v2948 = vadd.f32 %v2788, %v2907
      %v2949 = vadd.f32 %v2789, %v2909
      %v2950 = vadd.f32 %v2790, %v2911
      %v2951 = vadd.f32 %v2791, %v2913
      %v2952 = vadd.f32 %v2792, %v2915
      %v2953 = vadd.f32 %v2793, %v2917
      %v2954 = vadd.f32 %v2794, %v2919
      %v2955 = vadd.f32 %v2795, %v2921
      %v2956 = vadd.f32 %v2796, %v2923
      %v2957 = vadd.f32 %v2797, %v2925
      %2958 = vset.pattern.permute.xlu0 2
      %2959 = vperm.xlu0 %2958, %v2493
      %v2960 = vpop.permute.xlu0 %2959
      %2962 = vset.pattern.permute.xlu0 2
      %2963 = vperm.xlu0 %2962, %v2494
      %v2964 = vpop.permute.xlu0 %2963
      %2966 = vset.pattern.permute.xlu0 2
      %2967 = vperm.xlu0 %2966, %v2495
      %v2968 = vpop.permute.xlu0 %2967
      %2970 = vset.pattern.permute.xlu0 2
      %2971 = vperm.xlu0 %2970, %v2496
      %v2972 = vpop.permute.xlu0 %2971
      %2974 = vset.pattern.permute.xlu0 2
      %2975 = vperm.xlu0 %2974, %v2497
      %v2976 = vpop.permute.xlu0 %2975
      %2978 = vset.pattern.permute.xlu0 2
      %2979 = vperm.xlu0 %2978, %v2498
      %v2980 = vpop.permute.xlu0 %2979
      %2982 = vset.pattern.permute.xlu0 2
      %2983 = vperm.xlu0 %2982, %v2499
      %v2984 = vpop.permute.xlu0 %2983
      %2986 = vset.pattern.permute.xlu0 2
      %2987 = vperm.xlu0 %2986, %v2500
      %v2988 = vpop.permute.xlu0 %2987
      %2990 = vset.pattern.permute.xlu0 2
      %2991 = vperm.xlu0 %2990, %v2501
      %v2992 = vpop.permute.xlu0 %2991
      %2994 = vset.pattern.permute.xlu0 2
      %2995 = vperm.xlu0 %2994, %v2502
      %v2996 = vpop.permute.xlu0 %2995
      %2998 = vset.pattern.permute.xlu0 2
      %2999 = vperm.xlu0 %2998, %v2503
      %v3000 = vpop.permute.xlu0 %2999
      %3002 = vset.pattern.permute.xlu0 2
      %3003 = vperm.xlu0 %3002, %v2504
      %v3004 = vpop.permute.xlu0 %3003
      %3006 = vset.pattern.permute.xlu0 2
      %3007 = vperm.xlu0 %3006, %v2505
      %v3008 = vpop.permute.xlu0 %3007
      %3010 = vset.pattern.permute.xlu0 2
      %3011 = vperm.xlu0 %3010, %v2506
      %v3012 = vpop.permute.xlu0 %3011
      %3014 = vset.pattern.permute.xlu0 2
      %3015 = vperm.xlu0 %3014, %v2507
      %v3016 = vpop.permute.xlu0 %3015
      %3018 = vset.pattern.permute.xlu0 2
      %3019 = vperm.xlu0 %3018, %v2508
      %v3020 = vpop.permute.xlu0 %3019
      %v3022 = vmul.f32 %v2624, %v2960
      %v3023 = vmul.f32 %v2629, %v2964
      %v3024 = vmul.f32 %v2634, %v2968
      %v3025 = vmul.f32 %v2639, %v2972
      %v3026 = vmul.f32 %v2644, %v2976
      %v3027 = vmul.f32 %v2649, %v2980
      %v3028 = vmul.f32 %v2654, %v2984
      %v3029 = vmul.f32 %v2659, %v2988
      %v3030 = vmul.f32 %v2664, %v2992
      %v3031 = vmul.f32 %v2669, %v2996
      %v3032 = vmul.f32 %v2674, %v3000
      %v3033 = vmul.f32 %v2679, %v3004
      %v3034 = vmul.f32 %v2684, %v3008
      %v3035 = vmul.f32 %v2689, %v3012
      %v3036 = vmul.f32 %v2694, %v3016
      %v3037 = vmul.f32 %v2699, %v3020
      %3054 = vrot.lane.b32.xlu0 %v3022, 112
      %v3055 = vpop.permute.xlu0 %3054
      %3056 = vrot.lane.b32.xlu0 %v3023, 112
      %v3057 = vpop.permute.xlu0 %3056
      %3058 = vrot.lane.b32.xlu0 %v3024, 112
      %v3059 = vpop.permute.xlu0 %3058
      %3060 = vrot.lane.b32.xlu0 %v3025, 112
      %v3061 = vpop.permute.xlu0 %3060
      %3062 = vrot.lane.b32.xlu0 %v3026, 112
      %v3063 = vpop.permute.xlu0 %3062
      %3064 = vrot.lane.b32.xlu0 %v3027, 112
      %v3065 = vpop.permute.xlu0 %3064
      %3066 = vrot.lane.b32.xlu0 %v3028, 112
      %v3067 = vpop.permute.xlu0 %3066
      %3068 = vrot.lane.b32.xlu0 %v3029, 112
      %v3069 = vpop.permute.xlu0 %3068
      %3070 = vrot.lane.b32.xlu0 %v3030, 112
      %v3071 = vpop.permute.xlu0 %3070
      %3072 = vrot.lane.b32.xlu0 %v3031, 112
      %v3073 = vpop.permute.xlu0 %3072
      %3074 = vrot.lane.b32.xlu0 %v3032, 112
      %v3075 = vpop.permute.xlu0 %3074
      %3076 = vrot.lane.b32.xlu0 %v3033, 112
      %v3077 = vpop.permute.xlu0 %3076
      %3078 = vrot.lane.b32.xlu0 %v3034, 112
      %v3079 = vpop.permute.xlu0 %3078
      %3080 = vrot.lane.b32.xlu0 %v3035, 112
      %v3081 = vpop.permute.xlu0 %3080
      %3082 = vrot.lane.b32.xlu0 %v3036, 112
      %v3083 = vpop.permute.xlu0 %3082
      %3084 = vrot.lane.b32.xlu0 %v3037, 112
      %v3085 = vpop.permute.xlu0 %3084
      %v3102 = vadd.f32 %v2942, %v3055
      %v3103 = vadd.f32 %v2943, %v3057
      %v3104 = vadd.f32 %v2944, %v3059
      %v3105 = vadd.f32 %v2945, %v3061
      %v3106 = vadd.f32 %v2946, %v3063
      %v3107 = vadd.f32 %v2947, %v3065
      %v3108 = vadd.f32 %v2948, %v3067
      %v3109 = vadd.f32 %v2949, %v3069
      %v3110 = vadd.f32 %v2950, %v3071
      %v3111 = vadd.f32 %v2951, %v3073
      %v3112 = vadd.f32 %v2952, %v3075
      %v3113 = vadd.f32 %v2953, %v3077
      %v3114 = vadd.f32 %v2954, %v3079
      %v3115 = vadd.f32 %v2955, %v3081
      %v3116 = vadd.f32 %v2956, %v3083
      %v3117 = vadd.f32 %v2957, %v3085
      %3118 = vset.pattern.permute.xlu0 3
      %3119 = vperm.xlu0 %3118, %v2493
      %v3120 = vpop.permute.xlu0 %3119
      %3122 = vset.pattern.permute.xlu0 3
      %3123 = vperm.xlu0 %3122, %v2494
      %v3124 = vpop.permute.xlu0 %3123
      %3126 = vset.pattern.permute.xlu0 3
      %3127 = vperm.xlu0 %3126, %v2495
      %v3128 = vpop.permute.xlu0 %3127
      %3130 = vset.pattern.permute.xlu0 3
      %3131 = vperm.xlu0 %3130, %v2496
      %v3132 = vpop.permute.xlu0 %3131
      %3134 = vset.pattern.permute.xlu0 3
      %3135 = vperm.xlu0 %3134, %v2497
      %v3136 = vpop.permute.xlu0 %3135
      %3138 = vset.pattern.permute.xlu0 3
      %3139 = vperm.xlu0 %3138, %v2498
      %v3140 = vpop.permute.xlu0 %3139
      %3142 = vset.pattern.permute.xlu0 3
      %3143 = vperm.xlu0 %3142, %v2499
      %v3144 = vpop.permute.xlu0 %3143
      %3146 = vset.pattern.permute.xlu0 3
      %3147 = vperm.xlu0 %3146, %v2500
      %v3148 = vpop.permute.xlu0 %3147
      %3150 = vset.pattern.permute.xlu0 3
      %3151 = vperm.xlu0 %3150, %v2501
      %v3152 = vpop.permute.xlu0 %3151
      %3154 = vset.pattern.permute.xlu0 3
      %3155 = vperm.xlu0 %3154, %v2502
      %v3156 = vpop.permute.xlu0 %3155
      %3158 = vset.pattern.permute.xlu0 3
      %3159 = vperm.xlu0 %3158, %v2503
      %v3160 = vpop.permute.xlu0 %3159
      %3162 = vset.pattern.permute.xlu0 3
      %3163 = vperm.xlu0 %3162, %v2504
      %v3164 = vpop.permute.xlu0 %3163
      %3166 = vset.pattern.permute.xlu0 3
      %3167 = vperm.xlu0 %3166, %v2505
      %v3168 = vpop.permute.xlu0 %3167
      %3170 = vset.pattern.permute.xlu0 3
      %3171 = vperm.xlu0 %3170, %v2506
      %v3172 = vpop.permute.xlu0 %3171
      %3174 = vset.pattern.permute.xlu0 3
      %3175 = vperm.xlu0 %3174, %v2507
      %v3176 = vpop.permute.xlu0 %3175
      %3178 = vset.pattern.permute.xlu0 3
      %3179 = vperm.xlu0 %3178, %v2508
      %v3180 = vpop.permute.xlu0 %3179
      %v3182 = vmul.f32 %v2624, %v3120
      %v3183 = vmul.f32 %v2629, %v3124
      %v3184 = vmul.f32 %v2634, %v3128
      %v3185 = vmul.f32 %v2639, %v3132
      %v3186 = vmul.f32 %v2644, %v3136
      %v3187 = vmul.f32 %v2649, %v3140
      %v3188 = vmul.f32 %v2654, %v3144
      %v3189 = vmul.f32 %v2659, %v3148
      %v3190 = vmul.f32 %v2664, %v3152
      %v3191 = vmul.f32 %v2669, %v3156
      %v3192 = vmul.f32 %v2674, %v3160
      %v3193 = vmul.f32 %v2679, %v3164
      %v3194 = vmul.f32 %v2684, %v3168
      %v3195 = vmul.f32 %v2689, %v3172
      %v3196 = vmul.f32 %v2694, %v3176
      %v3197 = vmul.f32 %v2699, %v3180
      %3214 = vrot.lane.b32.xlu0 %v3182, 104
      %v3215 = vpop.permute.xlu0 %3214
      %3216 = vrot.lane.b32.xlu0 %v3183, 104
      %v3217 = vpop.permute.xlu0 %3216
      %3218 = vrot.lane.b32.xlu0 %v3184, 104
      %v3219 = vpop.permute.xlu0 %3218
      %3220 = vrot.lane.b32.xlu0 %v3185, 104
      %v3221 = vpop.permute.xlu0 %3220
      %3222 = vrot.lane.b32.xlu0 %v3186, 104
      %v3223 = vpop.permute.xlu0 %3222
      %3224 = vrot.lane.b32.xlu0 %v3187, 104
      %v3225 = vpop.permute.xlu0 %3224
      %3226 = vrot.lane.b32.xlu0 %v3188, 104
      %v3227 = vpop.permute.xlu0 %3226
      %3228 = vrot.lane.b32.xlu0 %v3189, 104
      %v3229 = vpop.permute.xlu0 %3228
      %3230 = vrot.lane.b32.xlu0 %v3190, 104
      %v3231 = vpop.permute.xlu0 %3230
      %3232 = vrot.lane.b32.xlu0 %v3191, 104
      %v3233 = vpop.permute.xlu0 %3232
      %3234 = vrot.lane.b32.xlu0 %v3192, 104
      %v3235 = vpop.permute.xlu0 %3234
      %3236 = vrot.lane.b32.xlu0 %v3193, 104
      %v3237 = vpop.permute.xlu0 %3236
      %3238 = vrot.lane.b32.xlu0 %v3194, 104
      %v3239 = vpop.permute.xlu0 %3238
      %3240 = vrot.lane.b32.xlu0 %v3195, 104
      %v3241 = vpop.permute.xlu0 %3240
      %3242 = vrot.lane.b32.xlu0 %v3196, 104
      %v3243 = vpop.permute.xlu0 %3242
      %3244 = vrot.lane.b32.xlu0 %v3197, 104
      %v3245 = vpop.permute.xlu0 %3244
      %v3262 = vadd.f32 %v3102, %v3215
      %v3263 = vadd.f32 %v3103, %v3217
      %v3264 = vadd.f32 %v3104, %v3219
      %v3265 = vadd.f32 %v3105, %v3221
      %v3266 = vadd.f32 %v3106, %v3223
      %v3267 = vadd.f32 %v3107, %v3225
      %v3268 = vadd.f32 %v3108, %v3227
      %v3269 = vadd.f32 %v3109, %v3229
      %v3270 = vadd.f32 %v3110, %v3231
      %v3271 = vadd.f32 %v3111, %v3233
      %v3272 = vadd.f32 %v3112, %v3235
      %v3273 = vadd.f32 %v3113, %v3237
      %v3274 = vadd.f32 %v3114, %v3239
      %v3275 = vadd.f32 %v3115, %v3241
      %v3276 = vadd.f32 %v3116, %v3243
      %v3277 = vadd.f32 %v3117, %v3245
      %3278 = vset.pattern.permute.xlu0 4
      %3279 = vperm.xlu0 %3278, %v2493
      %v3280 = vpop.permute.xlu0 %3279
      %3282 = vset.pattern.permute.xlu0 4
      %3283 = vperm.xlu0 %3282, %v2494
      %v3284 = vpop.permute.xlu0 %3283
      %3286 = vset.pattern.permute.xlu0 4
      %3287 = vperm.xlu0 %3286, %v2495
      %v3288 = vpop.permute.xlu0 %3287
      %3290 = vset.pattern.permute.xlu0 4
      %3291 = vperm.xlu0 %3290, %v2496
      %v3292 = vpop.permute.xlu0 %3291
      %3294 = vset.pattern.permute.xlu0 4
      %3295 = vperm.xlu0 %3294, %v2497
      %v3296 = vpop.permute.xlu0 %3295
      %3298 = vset.pattern.permute.xlu0 4
      %3299 = vperm.xlu0 %3298, %v2498
      %v3300 = vpop.permute.xlu0 %3299
      %3302 = vset.pattern.permute.xlu0 4
      %3303 = vperm.xlu0 %3302, %v2499
      %v3304 = vpop.permute.xlu0 %3303
      %3306 = vset.pattern.permute.xlu0 4
      %3307 = vperm.xlu0 %3306, %v2500
      %v3308 = vpop.permute.xlu0 %3307
      %3310 = vset.pattern.permute.xlu0 4
      %3311 = vperm.xlu0 %3310, %v2501
      %v3312 = vpop.permute.xlu0 %3311
      %3314 = vset.pattern.permute.xlu0 4
      %3315 = vperm.xlu0 %3314, %v2502
      %v3316 = vpop.permute.xlu0 %3315
      %3318 = vset.pattern.permute.xlu0 4
      %3319 = vperm.xlu0 %3318, %v2503
      %v3320 = vpop.permute.xlu0 %3319
      %3322 = vset.pattern.permute.xlu0 4
      %3323 = vperm.xlu0 %3322, %v2504
      %v3324 = vpop.permute.xlu0 %3323
      %3326 = vset.pattern.permute.xlu0 4
      %3327 = vperm.xlu0 %3326, %v2505
      %v3328 = vpop.permute.xlu0 %3327
      %3330 = vset.pattern.permute.xlu0 4
      %3331 = vperm.xlu0 %3330, %v2506
      %v3332 = vpop.permute.xlu0 %3331
      %3334 = vset.pattern.permute.xlu0 4
      %3335 = vperm.xlu0 %3334, %v2507
      %v3336 = vpop.permute.xlu0 %3335
      %3338 = vset.pattern.permute.xlu0 4
      %3339 = vperm.xlu0 %3338, %v2508
      %v3340 = vpop.permute.xlu0 %3339
      %v3342 = vmul.f32 %v2624, %v3280
      %v3343 = vmul.f32 %v2629, %v3284
      %v3344 = vmul.f32 %v2634, %v3288
      %v3345 = vmul.f32 %v2639, %v3292
      %v3346 = vmul.f32 %v2644, %v3296
      %v3347 = vmul.f32 %v2649, %v3300
      %v3348 = vmul.f32 %v2654, %v3304
      %v3349 = vmul.f32 %v2659, %v3308
      %v3350 = vmul.f32 %v2664, %v3312
      %v3351 = vmul.f32 %v2669, %v3316
      %v3352 = vmul.f32 %v2674, %v3320
      %v3353 = vmul.f32 %v2679, %v3324
      %v3354 = vmul.f32 %v2684, %v3328
      %v3355 = vmul.f32 %v2689, %v3332
      %v3356 = vmul.f32 %v2694, %v3336
      %v3357 = vmul.f32 %v2699, %v3340
      %3374 = vrot.lane.b32.xlu0 %v3342, 96
      %v3375 = vpop.permute.xlu0 %3374
      %3376 = vrot.lane.b32.xlu0 %v3343, 96
      %v3377 = vpop.permute.xlu0 %3376
      %3378 = vrot.lane.b32.xlu0 %v3344, 96
      %v3379 = vpop.permute.xlu0 %3378
      %3380 = vrot.lane.b32.xlu0 %v3345, 96
      %v3381 = vpop.permute.xlu0 %3380
      %3382 = vrot.lane.b32.xlu0 %v3346, 96
      %v3383 = vpop.permute.xlu0 %3382
      %3384 = vrot.lane.b32.xlu0 %v3347, 96
      %v3385 = vpop.permute.xlu0 %3384
      %3386 = vrot.lane.b32.xlu0 %v3348, 96
      %v3387 = vpop.permute.xlu0 %3386
      %3388 = vrot.lane.b32.xlu0 %v3349, 96
      %v3389 = vpop.permute.xlu0 %3388
      %3390 = vrot.lane.b32.xlu0 %v3350, 96
      %v3391 = vpop.permute.xlu0 %3390
      %3392 = vrot.lane.b32.xlu0 %v3351, 96
      %v3393 = vpop.permute.xlu0 %3392
      %3394 = vrot.lane.b32.xlu0 %v3352, 96
      %v3395 = vpop.permute.xlu0 %3394
      %3396 = vrot.lane.b32.xlu0 %v3353, 96
      %v3397 = vpop.permute.xlu0 %3396
      %3398 = vrot.lane.b32.xlu0 %v3354, 96
      %v3399 = vpop.permute.xlu0 %3398
      %3400 = vrot.lane.b32.xlu0 %v3355, 96
      %v3401 = vpop.permute.xlu0 %3400
      %3402 = vrot.lane.b32.xlu0 %v3356, 96
      %v3403 = vpop.permute.xlu0 %3402
      %3404 = vrot.lane.b32.xlu0 %v3357, 96
      %v3405 = vpop.permute.xlu0 %3404
      %v3422 = vadd.f32 %v3262, %v3375
      %v3423 = vadd.f32 %v3263, %v3377
      %v3424 = vadd.f32 %v3264, %v3379
      %v3425 = vadd.f32 %v3265, %v3381
      %v3426 = vadd.f32 %v3266, %v3383
      %v3427 = vadd.f32 %v3267, %v3385
      %v3428 = vadd.f32 %v3268, %v3387
      %v3429 = vadd.f32 %v3269, %v3389
      %v3430 = vadd.f32 %v3270, %v3391
      %v3431 = vadd.f32 %v3271, %v3393
      %v3432 = vadd.f32 %v3272, %v3395
      %v3433 = vadd.f32 %v3273, %v3397
      %v3434 = vadd.f32 %v3274, %v3399
      %v3435 = vadd.f32 %v3275, %v3401
      %v3436 = vadd.f32 %v3276, %v3403
      %v3437 = vadd.f32 %v3277, %v3405
      %3438 = vset.pattern.permute.xlu0 5
      %3439 = vperm.xlu0 %3438, %v2493
      %v3440 = vpop.permute.xlu0 %3439
      %3442 = vset.pattern.permute.xlu0 5
      %3443 = vperm.xlu0 %3442, %v2494
      %v3444 = vpop.permute.xlu0 %3443
      %3446 = vset.pattern.permute.xlu0 5
      %3447 = vperm.xlu0 %3446, %v2495
      %v3448 = vpop.permute.xlu0 %3447
      %3450 = vset.pattern.permute.xlu0 5
      %3451 = vperm.xlu0 %3450, %v2496
      %v3452 = vpop.permute.xlu0 %3451
      %3454 = vset.pattern.permute.xlu0 5
      %3455 = vperm.xlu0 %3454, %v2497
      %v3456 = vpop.permute.xlu0 %3455
      %3458 = vset.pattern.permute.xlu0 5
      %3459 = vperm.xlu0 %3458, %v2498
      %v3460 = vpop.permute.xlu0 %3459
      %3462 = vset.pattern.permute.xlu0 5
      %3463 = vperm.xlu0 %3462, %v2499
      %v3464 = vpop.permute.xlu0 %3463
      %3466 = vset.pattern.permute.xlu0 5
      %3467 = vperm.xlu0 %3466, %v2500
      %v3468 = vpop.permute.xlu0 %3467
      %3470 = vset.pattern.permute.xlu0 5
      %3471 = vperm.xlu0 %3470, %v2501
      %v3472 = vpop.permute.xlu0 %3471
      %3474 = vset.pattern.permute.xlu0 5
      %3475 = vperm.xlu0 %3474, %v2502
      %v3476 = vpop.permute.xlu0 %3475
      %3478 = vset.pattern.permute.xlu0 5
      %3479 = vperm.xlu0 %3478, %v2503
      %v3480 = vpop.permute.xlu0 %3479
      %3482 = vset.pattern.permute.xlu0 5
      %3483 = vperm.xlu0 %3482, %v2504
      %v3484 = vpop.permute.xlu0 %3483
      %3486 = vset.pattern.permute.xlu0 5
      %3487 = vperm.xlu0 %3486, %v2505
      %v3488 = vpop.permute.xlu0 %3487
      %3490 = vset.pattern.permute.xlu0 5
      %3491 = vperm.xlu0 %3490, %v2506
      %v3492 = vpop.permute.xlu0 %3491
      %3494 = vset.pattern.permute.xlu0 5
      %3495 = vperm.xlu0 %3494, %v2507
      %v3496 = vpop.permute.xlu0 %3495
      %3498 = vset.pattern.permute.xlu0 5
      %3499 = vperm.xlu0 %3498, %v2508
      %v3500 = vpop.permute.xlu0 %3499
      %v3502 = vmul.f32 %v2624, %v3440
      %v3503 = vmul.f32 %v2629, %v3444
      %v3504 = vmul.f32 %v2634, %v3448
      %v3505 = vmul.f32 %v2639, %v3452
      %v3506 = vmul.f32 %v2644, %v3456
      %v3507 = vmul.f32 %v2649, %v3460
      %v3508 = vmul.f32 %v2654, %v3464
      %v3509 = vmul.f32 %v2659, %v3468
      %v3510 = vmul.f32 %v2664, %v3472
      %v3511 = vmul.f32 %v2669, %v3476
      %v3512 = vmul.f32 %v2674, %v3480
      %v3513 = vmul.f32 %v2679, %v3484
      %v3514 = vmul.f32 %v2684, %v3488
      %v3515 = vmul.f32 %v2689, %v3492
      %v3516 = vmul.f32 %v2694, %v3496
      %v3517 = vmul.f32 %v2699, %v3500
      %3534 = vrot.lane.b32.xlu0 %v3502, 88
      %v3535 = vpop.permute.xlu0 %3534
      %3536 = vrot.lane.b32.xlu0 %v3503, 88
      %v3537 = vpop.permute.xlu0 %3536
      %3538 = vrot.lane.b32.xlu0 %v3504, 88
      %v3539 = vpop.permute.xlu0 %3538
      %3540 = vrot.lane.b32.xlu0 %v3505, 88
      %v3541 = vpop.permute.xlu0 %3540
      %3542 = vrot.lane.b32.xlu0 %v3506, 88
      %v3543 = vpop.permute.xlu0 %3542
      %3544 = vrot.lane.b32.xlu0 %v3507, 88
      %v3545 = vpop.permute.xlu0 %3544
      %3546 = vrot.lane.b32.xlu0 %v3508, 88
      %v3547 = vpop.permute.xlu0 %3546
      %3548 = vrot.lane.b32.xlu0 %v3509, 88
      %v3549 = vpop.permute.xlu0 %3548
      %3550 = vrot.lane.b32.xlu0 %v3510, 88
      %v3551 = vpop.permute.xlu0 %3550
      %3552 = vrot.lane.b32.xlu0 %v3511, 88
      %v3553 = vpop.permute.xlu0 %3552
      %3554 = vrot.lane.b32.xlu0 %v3512, 88
      %v3555 = vpop.permute.xlu0 %3554
      %3556 = vrot.lane.b32.xlu0 %v3513, 88
      %v3557 = vpop.permute.xlu0 %3556
      %3558 = vrot.lane.b32.xlu0 %v3514, 88
      %v3559 = vpop.permute.xlu0 %3558
      %3560 = vrot.lane.b32.xlu0 %v3515, 88
      %v3561 = vpop.permute.xlu0 %3560
      %3562 = vrot.lane.b32.xlu0 %v3516, 88
      %v3563 = vpop.permute.xlu0 %3562
      %3564 = vrot.lane.b32.xlu0 %v3517, 88
      %v3565 = vpop.permute.xlu0 %3564
      %v3582 = vadd.f32 %v3422, %v3535
      %v3583 = vadd.f32 %v3423, %v3537
      %v3584 = vadd.f32 %v3424, %v3539
      %v3585 = vadd.f32 %v3425, %v3541
      %v3586 = vadd.f32 %v3426, %v3543
      %v3587 = vadd.f32 %v3427, %v3545
      %v3588 = vadd.f32 %v3428, %v3547
      %v3589 = vadd.f32 %v3429, %v3549
      %v3590 = vadd.f32 %v3430, %v3551
      %v3591 = vadd.f32 %v3431, %v3553
      %v3592 = vadd.f32 %v3432, %v3555
      %v3593 = vadd.f32 %v3433, %v3557
      %v3594 = vadd.f32 %v3434, %v3559
      %v3595 = vadd.f32 %v3435, %v3561
      %v3596 = vadd.f32 %v3436, %v3563
      %v3597 = vadd.f32 %v3437, %v3565
      %s3598 = scalar_lea.vmem %s194, 256
      %3599 = vst.msk [vmem:[%s3598] sm:$0xff] %vm229, %v3582
      %3600 = vst.msk [vmem:[%s3598 + $0x8] sm:$0xff] %vm229, %v3583
      %3601 = vst.msk [vmem:[%s3598 + $0x10] sm:$0xff] %vm229, %v3584
      %3602 = vst.msk [vmem:[%s3598 + $0x18] sm:$0xff] %vm229, %v3585
      %3603 = vst.msk [vmem:[%s3598 + $0x20] sm:$0xff] %vm229, %v3586
      %3604 = vst.msk [vmem:[%s3598 + $0x28] sm:$0xff] %vm229, %v3587
      %3605 = vst.msk [vmem:[%s3598 + $0x30] sm:$0xff] %vm229, %v3588
      %3606 = vst.msk [vmem:[%s3598 + $0x38] sm:$0xff] %vm229, %v3589
      %3607 = vst.msk [vmem:[%s3598 + $0x40] sm:$0xff] %vm229, %v3590
      %3608 = vst.msk [vmem:[%s3598 + $0x48] sm:$0xff] %vm229, %v3591
      %3609 = vst.msk [vmem:[%s3598 + $0x50] sm:$0xff] %vm229, %v3592
      %3610 = vst.msk [vmem:[%s3598 + $0x58] sm:$0xff] %vm229, %v3593
      %3611 = vst.msk [vmem:[%s3598 + $0x60] sm:$0xff] %vm229, %v3594
      %3612 = vst.msk [vmem:[%s3598 + $0x68] sm:$0xff] %vm229, %v3595
      %3613 = vst.msk [vmem:[%s3598 + $0x70] sm:$0xff] %vm229, %v3596
      %3614 = vst.msk [vmem:[%s3598 + $0x78] sm:$0xff] %vm229, %v3597
      %s3615 = scalar_lea.vmem %s182, 384
      %v3616 = vld [vmem:[%s3615] sm:$0xff]
      %v3617 = vld [vmem:[%s3615 + $0x8] sm:$0xff]
      %v3618 = vld [vmem:[%s3615 + $0x10] sm:$0xff]
      %v3619 = vld [vmem:[%s3615 + $0x18] sm:$0xff]
      %v3620 = vld [vmem:[%s3615 + $0x20] sm:$0xff]
      %v3621 = vld [vmem:[%s3615 + $0x28] sm:$0xff]
      %v3622 = vld [vmem:[%s3615 + $0x30] sm:$0xff]
      %v3623 = vld [vmem:[%s3615 + $0x38] sm:$0xff]
      %v3624 = vld [vmem:[%s3615 + $0x40] sm:$0xff]
      %v3625 = vld [vmem:[%s3615 + $0x48] sm:$0xff]
      %v3626 = vld [vmem:[%s3615 + $0x50] sm:$0xff]
      %v3627 = vld [vmem:[%s3615 + $0x58] sm:$0xff]
      %v3628 = vld [vmem:[%s3615 + $0x60] sm:$0xff]
      %v3629 = vld [vmem:[%s3615 + $0x68] sm:$0xff]
      %v3630 = vld [vmem:[%s3615 + $0x70] sm:$0xff]
      %v3631 = vld [vmem:[%s3615 + $0x78] sm:$0xff]
      %s3632 = scalar_lea.vmem %s188, 384
      %v3633 = vld [vmem:[%s3632] sm:$0xff]
      %v3634 = vld [vmem:[%s3632 + $0x8] sm:$0xff]
      %v3635 = vld [vmem:[%s3632 + $0x10] sm:$0xff]
      %v3636 = vld [vmem:[%s3632 + $0x18] sm:$0xff]
      %v3637 = vld [vmem:[%s3632 + $0x20] sm:$0xff]
      %v3638 = vld [vmem:[%s3632 + $0x28] sm:$0xff]
      %v3639 = vld [vmem:[%s3632 + $0x30] sm:$0xff]
      %v3640 = vld [vmem:[%s3632 + $0x38] sm:$0xff]
      %v3641 = vld [vmem:[%s3632 + $0x40] sm:$0xff]
      %v3642 = vld [vmem:[%s3632 + $0x48] sm:$0xff]
      %v3643 = vld [vmem:[%s3632 + $0x50] sm:$0xff]
      %v3644 = vld [vmem:[%s3632 + $0x58] sm:$0xff]
      %v3645 = vld [vmem:[%s3632 + $0x60] sm:$0xff]
      %v3646 = vld [vmem:[%s3632 + $0x68] sm:$0xff]
      %v3647 = vld [vmem:[%s3632 + $0x70] sm:$0xff]
      %v3648 = vld [vmem:[%s3632 + $0x78] sm:$0xff]
      %v3650 = vsel %vm229, %v3616, 0
      %v3653 = vsel %vm229, %v3617, 0
      %v3656 = vsel %vm229, %v3618, 0
      %v3659 = vsel %vm229, %v3619, 0
      %v3662 = vsel %vm229, %v3620, 0
      %v3665 = vsel %vm229, %v3621, 0
      %v3668 = vsel %vm229, %v3622, 0
      %v3671 = vsel %vm229, %v3623, 0
      %v3674 = vsel %vm229, %v3624, 0
      %v3677 = vsel %vm229, %v3625, 0
      %v3680 = vsel %vm229, %v3626, 0
      %v3683 = vsel %vm229, %v3627, 0
      %v3686 = vsel %vm229, %v3628, 0
      %v3689 = vsel %vm229, %v3629, 0
      %v3692 = vsel %vm229, %v3630, 0
      %v3695 = vsel %vm229, %v3631, 0
      %3697 = vmatprep.subr.mxu0 0.0
      %3698 = vmatpush1.msra.mxu0 0.0
      %3699 = vmatprep.subr.mxu0 0.0
      %3700 = vmatpush1.msra.mxu0 0.0
      %3701 = vmatprep.subr.mxu0 0.0
      %3702 = vmatpush1.msra.mxu0 0.0
      %3703 = vmatprep.subr.mxu0 0.0
      %3704 = vmatpush1.msra.mxu0 0.0
      %3705 = vmatprep.subr.mxu0 0.0
      %3706 = vmatpush1.msra.mxu0 0.0
      %3707 = vmatprep.subr.mxu0 0.0
      %3708 = vmatpush1.msra.mxu0 0.0
      %3709 = vmatprep.subr.mxu0 0.0
      %3710 = vmatpush1.msra.mxu0 0.0
      %3711 = vmatprep.subr.mxu0 0.0
      %3712 = vmatpush1.msra.mxu0 0.0
      %3713 = vmatprep.subr.mxu0 0.0
      %3714 = vmatpush1.msra.mxu0 0.0
      %3715 = vmatprep.subr.mxu0 0.0
      %3716 = vmatpush1.msra.mxu0 0.0
      %3717 = vmatprep.subr.mxu0 0.0
      %3718 = vmatpush1.msra.mxu0 0.0
      %3719 = vmatprep.subr.mxu0 0.0
      %3720 = vmatpush1.msra.mxu0 0.0
      %3721 = vmatprep.subr.mxu0 0.0
      %3722 = vmatpush1.msra.mxu0 0.0
      %3723 = vmatprep.subr.mxu0 0.0
      %3724 = vmatpush1.msra.mxu0 0.0
      %3725 = vmatprep.subr.mxu0 0.0
      %3726 = vmatpush1.msra.mxu0 0.0
      %3727 = vmatprep.subr.mxu0 0.0
      %3728 = vmatpush1.msra.mxu0 %v196
      %3729 = vmatprep.subr.mxu0 0.0
      %3730 = vmatpush2.msra.mxu0 0.0
      %3731 = vmatprep.subr.mxu0 0.0
      %3732 = vmatpush2.msra.mxu0 0.0
      %3733 = vmatprep.subr.mxu0 0.0
      %3734 = vmatpush2.msra.mxu0 0.0
      %3735 = vmatprep.subr.mxu0 0.0
      %3736 = vmatpush2.msra.mxu0 0.0
      %3737 = vmatprep.subr.mxu0 0.0
      %3738 = vmatpush2.msra.mxu0 0.0
      %3739 = vmatprep.subr.mxu0 0.0
      %3740 = vmatpush2.msra.mxu0 0.0
      %3741 = vmatprep.subr.mxu0 0.0
      %3742 = vmatpush2.msra.mxu0 0.0
      %3743 = vmatprep.subr.mxu0 0.0
      %3744 = vmatpush2.msra.mxu0 0.0
      %3745 = vmatprep.subr.mxu0 0.0
      %3746 = vmatpush2.msra.mxu0 0.0
      %3747 = vmatprep.subr.mxu0 0.0
      %3748 = vmatpush2.msra.mxu0 0.0
      %3749 = vmatprep.subr.mxu0 0.0
      %3750 = vmatpush2.msra.mxu0 0.0
      %3751 = vmatprep.subr.mxu0 0.0
      %3752 = vmatpush2.msra.mxu0 0.0
      %3753 = vmatprep.subr.mxu0 0.0
      %3754 = vmatpush2.msra.mxu0 0.0
      %3755 = vmatprep.subr.mxu0 0.0
      %3756 = vmatpush2.msra.mxu0 0.0
      %3757 = vmatprep.subr.mxu0 0.0
      %3758 = vmatpush2.msra.mxu0 0.0
      %3759 = vmatprep.subr.mxu0 0.0
      %3760 = vmatpush2.msra.mxu0 0.0
      %3761 = vmatprep.mubr.f32.mxu0 0.0
      %3762 = vmatmul.mubr.f32.gmra.mxu0 %v3650
      %v3763 = vpop.f32.mrf.mxu0
      %v3764 = vadd.f32 0.0, %v3763
      %v3765 = vpop.f32.mrf.mxu0
      %3766 = vmatprep.mubr.f32.mxu0 0.0
      %3767 = vmatmul.mubr.f32.gmra.mxu0 %v3653
      %v3768 = vpop.f32.mrf.mxu0
      %v3769 = vadd.f32 0.0, %v3768
      %v3770 = vpop.f32.mrf.mxu0
      %3771 = vmatprep.mubr.f32.mxu0 0.0
      %3772 = vmatmul.mubr.f32.gmra.mxu0 %v3656
      %v3773 = vpop.f32.mrf.mxu0
      %v3774 = vadd.f32 0.0, %v3773
      %v3775 = vpop.f32.mrf.mxu0
      %3776 = vmatprep.mubr.f32.mxu0 0.0
      %3777 = vmatmul.mubr.f32.gmra.mxu0 %v3659
      %v3778 = vpop.f32.mrf.mxu0
      %v3779 = vadd.f32 0.0, %v3778
      %v3780 = vpop.f32.mrf.mxu0
      %3781 = vmatprep.mubr.f32.mxu0 0.0
      %3782 = vmatmul.mubr.f32.gmra.mxu0 %v3662
      %v3783 = vpop.f32.mrf.mxu0
      %v3784 = vadd.f32 0.0, %v3783
      %v3785 = vpop.f32.mrf.mxu0
      %3786 = vmatprep.mubr.f32.mxu0 0.0
      %3787 = vmatmul.mubr.f32.gmra.mxu0 %v3665
      %v3788 = vpop.f32.mrf.mxu0
      %v3789 = vadd.f32 0.0, %v3788
      %v3790 = vpop.f32.mrf.mxu0
      %3791 = vmatprep.mubr.f32.mxu0 0.0
      %3792 = vmatmul.mubr.f32.gmra.mxu0 %v3668
      %v3793 = vpop.f32.mrf.mxu0
      %v3794 = vadd.f32 0.0, %v3793
      %v3795 = vpop.f32.mrf.mxu0
      %3796 = vmatprep.mubr.f32.mxu0 0.0
      %3797 = vmatmul.mubr.f32.gmra.mxu0 %v3671
      %v3798 = vpop.f32.mrf.mxu0
      %v3799 = vadd.f32 0.0, %v3798
      %v3800 = vpop.f32.mrf.mxu0
      %3801 = vmatprep.mubr.f32.mxu0 0.0
      %3802 = vmatmul.mubr.f32.gmra.mxu0 %v3674
      %v3803 = vpop.f32.mrf.mxu0
      %v3804 = vadd.f32 0.0, %v3803
      %v3805 = vpop.f32.mrf.mxu0
      %3806 = vmatprep.mubr.f32.mxu0 0.0
      %3807 = vmatmul.mubr.f32.gmra.mxu0 %v3677
      %v3808 = vpop.f32.mrf.mxu0
      %v3809 = vadd.f32 0.0, %v3808
      %v3810 = vpop.f32.mrf.mxu0
      %3811 = vmatprep.mubr.f32.mxu0 0.0
      %3812 = vmatmul.mubr.f32.gmra.mxu0 %v3680
      %v3813 = vpop.f32.mrf.mxu0
      %v3814 = vadd.f32 0.0, %v3813
      %v3815 = vpop.f32.mrf.mxu0
      %3816 = vmatprep.mubr.f32.mxu0 0.0
      %3817 = vmatmul.mubr.f32.gmra.mxu0 %v3683
      %v3818 = vpop.f32.mrf.mxu0
      %v3819 = vadd.f32 0.0, %v3818
      %v3820 = vpop.f32.mrf.mxu0
      %3821 = vmatprep.mubr.f32.mxu0 0.0
      %3822 = vmatmul.mubr.f32.gmra.mxu0 %v3686
      %v3823 = vpop.f32.mrf.mxu0
      %v3824 = vadd.f32 0.0, %v3823
      %v3825 = vpop.f32.mrf.mxu0
      %3826 = vmatprep.mubr.f32.mxu0 0.0
      %3827 = vmatmul.mubr.f32.gmra.mxu0 %v3689
      %v3828 = vpop.f32.mrf.mxu0
      %v3829 = vadd.f32 0.0, %v3828
      %v3830 = vpop.f32.mrf.mxu0
      %3831 = vmatprep.mubr.f32.mxu0 0.0
      %3832 = vmatmul.mubr.f32.gmra.mxu0 %v3692
      %v3833 = vpop.f32.mrf.mxu0
      %v3834 = vadd.f32 0.0, %v3833
      %v3835 = vpop.f32.mrf.mxu0
      %3836 = vmatprep.mubr.f32.mxu0 0.0
      %3837 = vmatmul.mubr.f32.gmra.mxu0 %v3695
      %v3838 = vpop.f32.mrf.mxu0
      %v3839 = vadd.f32 0.0, %v3838
      %v3840 = vpop.f32.mrf.mxu0
      %3841 = vdwg.mxu0
      %3843 = vset.pattern.permute.xlu0 0
      %3844 = vperm.xlu0 %3843, %v3633
      %v3845 = vpop.permute.xlu0 %3844
      %3848 = vset.pattern.permute.xlu0 0
      %3849 = vperm.xlu0 %3848, %v3634
      %v3850 = vpop.permute.xlu0 %3849
      %3853 = vset.pattern.permute.xlu0 0
      %3854 = vperm.xlu0 %3853, %v3635
      %v3855 = vpop.permute.xlu0 %3854
      %3858 = vset.pattern.permute.xlu0 0
      %3859 = vperm.xlu0 %3858, %v3636
      %v3860 = vpop.permute.xlu0 %3859
      %3863 = vset.pattern.permute.xlu0 0
      %3864 = vperm.xlu0 %3863, %v3637
      %v3865 = vpop.permute.xlu0 %3864
      %3868 = vset.pattern.permute.xlu0 0
      %3869 = vperm.xlu0 %3868, %v3638
      %v3870 = vpop.permute.xlu0 %3869
      %3873 = vset.pattern.permute.xlu0 0
      %3874 = vperm.xlu0 %3873, %v3639
      %v3875 = vpop.permute.xlu0 %3874
      %3878 = vset.pattern.permute.xlu0 0
      %3879 = vperm.xlu0 %3878, %v3640
      %v3880 = vpop.permute.xlu0 %3879
      %3883 = vset.pattern.permute.xlu0 0
      %3884 = vperm.xlu0 %3883, %v3641
      %v3885 = vpop.permute.xlu0 %3884
      %3888 = vset.pattern.permute.xlu0 0
      %3889 = vperm.xlu0 %3888, %v3642
      %v3890 = vpop.permute.xlu0 %3889
      %3893 = vset.pattern.permute.xlu0 0
      %3894 = vperm.xlu0 %3893, %v3643
      %v3895 = vpop.permute.xlu0 %3894
      %3898 = vset.pattern.permute.xlu0 0
      %3899 = vperm.xlu0 %3898, %v3644
      %v3900 = vpop.permute.xlu0 %3899
      %3903 = vset.pattern.permute.xlu0 0
      %3904 = vperm.xlu0 %3903, %v3645
      %v3905 = vpop.permute.xlu0 %3904
      %3908 = vset.pattern.permute.xlu0 0
      %3909 = vperm.xlu0 %3908, %v3646
      %v3910 = vpop.permute.xlu0 %3909
      %3913 = vset.pattern.permute.xlu0 0
      %3914 = vperm.xlu0 %3913, %v3647
      %v3915 = vpop.permute.xlu0 %3914
      %3918 = vset.pattern.permute.xlu0 0
      %3919 = vperm.xlu0 %3918, %v3648
      %v3920 = vpop.permute.xlu0 %3919
      %v3922 = vmul.f32 %v3764, %v3845
      %v3923 = vmul.f32 %v3769, %v3850
      %v3924 = vmul.f32 %v3774, %v3855
      %v3925 = vmul.f32 %v3779, %v3860
      %v3926 = vmul.f32 %v3784, %v3865
      %v3927 = vmul.f32 %v3789, %v3870
      %v3928 = vmul.f32 %v3794, %v3875
      %v3929 = vmul.f32 %v3799, %v3880
      %v3930 = vmul.f32 %v3804, %v3885
      %v3931 = vmul.f32 %v3809, %v3890
      %v3932 = vmul.f32 %v3814, %v3895
      %v3933 = vmul.f32 %v3819, %v3900
      %v3934 = vmul.f32 %v3824, %v3905
      %v3935 = vmul.f32 %v3829, %v3910
      %v3936 = vmul.f32 %v3834, %v3915
      %v3937 = vmul.f32 %v3839, %v3920
      %3938 = vset.pattern.permute.xlu0 1
      %3939 = vperm.xlu0 %3938, %v3633
      %v3940 = vpop.permute.xlu0 %3939
      %3942 = vset.pattern.permute.xlu0 1
      %3943 = vperm.xlu0 %3942, %v3634
      %v3944 = vpop.permute.xlu0 %3943
      %3946 = vset.pattern.permute.xlu0 1
      %3947 = vperm.xlu0 %3946, %v3635
      %v3948 = vpop.permute.xlu0 %3947
      %3950 = vset.pattern.permute.xlu0 1
      %3951 = vperm.xlu0 %3950, %v3636
      %v3952 = vpop.permute.xlu0 %3951
      %3954 = vset.pattern.permute.xlu0 1
      %3955 = vperm.xlu0 %3954, %v3637
      %v3956 = vpop.permute.xlu0 %3955
      %3958 = vset.pattern.permute.xlu0 1
      %3959 = vperm.xlu0 %3958, %v3638
      %v3960 = vpop.permute.xlu0 %3959
      %3962 = vset.pattern.permute.xlu0 1
      %3963 = vperm.xlu0 %3962, %v3639
      %v3964 = vpop.permute.xlu0 %3963
      %3966 = vset.pattern.permute.xlu0 1
      %3967 = vperm.xlu0 %3966, %v3640
      %v3968 = vpop.permute.xlu0 %3967
      %3970 = vset.pattern.permute.xlu0 1
      %3971 = vperm.xlu0 %3970, %v3641
      %v3972 = vpop.permute.xlu0 %3971
      %3974 = vset.pattern.permute.xlu0 1
      %3975 = vperm.xlu0 %3974, %v3642
      %v3976 = vpop.permute.xlu0 %3975
      %3978 = vset.pattern.permute.xlu0 1
      %3979 = vperm.xlu0 %3978, %v3643
      %v3980 = vpop.permute.xlu0 %3979
      %3982 = vset.pattern.permute.xlu0 1
      %3983 = vperm.xlu0 %3982, %v3644
      %v3984 = vpop.permute.xlu0 %3983
      %3986 = vset.pattern.permute.xlu0 1
      %3987 = vperm.xlu0 %3986, %v3645
      %v3988 = vpop.permute.xlu0 %3987
      %3990 = vset.pattern.permute.xlu0 1
      %3991 = vperm.xlu0 %3990, %v3646
      %v3992 = vpop.permute.xlu0 %3991
      %3994 = vset.pattern.permute.xlu0 1
      %3995 = vperm.xlu0 %3994, %v3647
      %v3996 = vpop.permute.xlu0 %3995
      %3998 = vset.pattern.permute.xlu0 1
      %3999 = vperm.xlu0 %3998, %v3648
      %v4000 = vpop.permute.xlu0 %3999
      %v4002 = vmul.f32 %v3764, %v3940
      %v4003 = vmul.f32 %v3769, %v3944
      %v4004 = vmul.f32 %v3774, %v3948
      %v4005 = vmul.f32 %v3779, %v3952
      %v4006 = vmul.f32 %v3784, %v3956
      %v4007 = vmul.f32 %v3789, %v3960
      %v4008 = vmul.f32 %v3794, %v3964
      %v4009 = vmul.f32 %v3799, %v3968
      %v4010 = vmul.f32 %v3804, %v3972
      %v4011 = vmul.f32 %v3809, %v3976
      %v4012 = vmul.f32 %v3814, %v3980
      %v4013 = vmul.f32 %v3819, %v3984
      %v4014 = vmul.f32 %v3824, %v3988
      %v4015 = vmul.f32 %v3829, %v3992
      %v4016 = vmul.f32 %v3834, %v3996
      %v4017 = vmul.f32 %v3839, %v4000
      %4034 = vrot.lane.b32.xlu0 %v4002, 120
      %v4035 = vpop.permute.xlu0 %4034
      %4036 = vrot.lane.b32.xlu0 %v4003, 120
      %v4037 = vpop.permute.xlu0 %4036
      %4038 = vrot.lane.b32.xlu0 %v4004, 120
      %v4039 = vpop.permute.xlu0 %4038
      %4040 = vrot.lane.b32.xlu0 %v4005, 120
      %v4041 = vpop.permute.xlu0 %4040
      %4042 = vrot.lane.b32.xlu0 %v4006, 120
      %v4043 = vpop.permute.xlu0 %4042
      %4044 = vrot.lane.b32.xlu0 %v4007, 120
      %v4045 = vpop.permute.xlu0 %4044
      %4046 = vrot.lane.b32.xlu0 %v4008, 120
      %v4047 = vpop.permute.xlu0 %4046
      %4048 = vrot.lane.b32.xlu0 %v4009, 120
      %v4049 = vpop.permute.xlu0 %4048
      %4050 = vrot.lane.b32.xlu0 %v4010, 120
      %v4051 = vpop.permute.xlu0 %4050
      %4052 = vrot.lane.b32.xlu0 %v4011, 120
      %v4053 = vpop.permute.xlu0 %4052
      %4054 = vrot.lane.b32.xlu0 %v4012, 120
      %v4055 = vpop.permute.xlu0 %4054
      %4056 = vrot.lane.b32.xlu0 %v4013, 120
      %v4057 = vpop.permute.xlu0 %4056
      %4058 = vrot.lane.b32.xlu0 %v4014, 120
      %v4059 = vpop.permute.xlu0 %4058
      %4060 = vrot.lane.b32.xlu0 %v4015, 120
      %v4061 = vpop.permute.xlu0 %4060
      %4062 = vrot.lane.b32.xlu0 %v4016, 120
      %v4063 = vpop.permute.xlu0 %4062
      %4064 = vrot.lane.b32.xlu0 %v4017, 120
      %v4065 = vpop.permute.xlu0 %4064
      %v4082 = vadd.f32 %v3922, %v4035
      %v4083 = vadd.f32 %v3923, %v4037
      %v4084 = vadd.f32 %v3924, %v4039
      %v4085 = vadd.f32 %v3925, %v4041
      %v4086 = vadd.f32 %v3926, %v4043
      %v4087 = vadd.f32 %v3927, %v4045
      %v4088 = vadd.f32 %v3928, %v4047
      %v4089 = vadd.f32 %v3929, %v4049
      %v4090 = vadd.f32 %v3930, %v4051
      %v4091 = vadd.f32 %v3931, %v4053
      %v4092 = vadd.f32 %v3932, %v4055
      %v4093 = vadd.f32 %v3933, %v4057
      %v4094 = vadd.f32 %v3934, %v4059
      %v4095 = vadd.f32 %v3935, %v4061
      %v4096 = vadd.f32 %v3936, %v4063
      %v4097 = vadd.f32 %v3937, %v4065
      %4098 = vset.pattern.permute.xlu0 2
      %4099 = vperm.xlu0 %4098, %v3633
      %v4100 = vpop.permute.xlu0 %4099
      %4102 = vset.pattern.permute.xlu0 2
      %4103 = vperm.xlu0 %4102, %v3634
      %v4104 = vpop.permute.xlu0 %4103
      %4106 = vset.pattern.permute.xlu0 2
      %4107 = vperm.xlu0 %4106, %v3635
      %v4108 = vpop.permute.xlu0 %4107
      %4110 = vset.pattern.permute.xlu0 2
      %4111 = vperm.xlu0 %4110, %v3636
      %v4112 = vpop.permute.xlu0 %4111
      %4114 = vset.pattern.permute.xlu0 2
      %4115 = vperm.xlu0 %4114, %v3637
      %v4116 = vpop.permute.xlu0 %4115
      %4118 = vset.pattern.permute.xlu0 2
      %4119 = vperm.xlu0 %4118, %v3638
      %v4120 = vpop.permute.xlu0 %4119
      %4122 = vset.pattern.permute.xlu0 2
      %4123 = vperm.xlu0 %4122, %v3639
      %v4124 = vpop.permute.xlu0 %4123
      %4126 = vset.pattern.permute.xlu0 2
      %4127 = vperm.xlu0 %4126, %v3640
      %v4128 = vpop.permute.xlu0 %4127
      %4130 = vset.pattern.permute.xlu0 2
      %4131 = vperm.xlu0 %4130, %v3641
      %v4132 = vpop.permute.xlu0 %4131
      %4134 = vset.pattern.permute.xlu0 2
      %4135 = vperm.xlu0 %4134, %v3642
      %v4136 = vpop.permute.xlu0 %4135
      %4138 = vset.pattern.permute.xlu0 2
      %4139 = vperm.xlu0 %4138, %v3643
      %v4140 = vpop.permute.xlu0 %4139
      %4142 = vset.pattern.permute.xlu0 2
      %4143 = vperm.xlu0 %4142, %v3644
      %v4144 = vpop.permute.xlu0 %4143
      %4146 = vset.pattern.permute.xlu0 2
      %4147 = vperm.xlu0 %4146, %v3645
      %v4148 = vpop.permute.xlu0 %4147
      %4150 = vset.pattern.permute.xlu0 2
      %4151 = vperm.xlu0 %4150, %v3646
      %v4152 = vpop.permute.xlu0 %4151
      %4154 = vset.pattern.permute.xlu0 2
      %4155 = vperm.xlu0 %4154, %v3647
      %v4156 = vpop.permute.xlu0 %4155
      %4158 = vset.pattern.permute.xlu0 2
      %4159 = vperm.xlu0 %4158, %v3648
      %v4160 = vpop.permute.xlu0 %4159
      %v4162 = vmul.f32 %v3764, %v4100
      %v4163 = vmul.f32 %v3769, %v4104
      %v4164 = vmul.f32 %v3774, %v4108
      %v4165 = vmul.f32 %v3779, %v4112
      %v4166 = vmul.f32 %v3784, %v4116
      %v4167 = vmul.f32 %v3789, %v4120
      %v4168 = vmul.f32 %v3794, %v4124
      %v4169 = vmul.f32 %v3799, %v4128
      %v4170 = vmul.f32 %v3804, %v4132
      %v4171 = vmul.f32 %v3809, %v4136
      %v4172 = vmul.f32 %v3814, %v4140
      %v4173 = vmul.f32 %v3819, %v4144
      %v4174 = vmul.f32 %v3824, %v4148
      %v4175 = vmul.f32 %v3829, %v4152
      %v4176 = vmul.f32 %v3834, %v4156
      %v4177 = vmul.f32 %v3839, %v4160
      %4194 = vrot.lane.b32.xlu0 %v4162, 112
      %v4195 = vpop.permute.xlu0 %4194
      %4196 = vrot.lane.b32.xlu0 %v4163, 112
      %v4197 = vpop.permute.xlu0 %4196
      %4198 = vrot.lane.b32.xlu0 %v4164, 112
      %v4199 = vpop.permute.xlu0 %4198
      %4200 = vrot.lane.b32.xlu0 %v4165, 112
      %v4201 = vpop.permute.xlu0 %4200
      %4202 = vrot.lane.b32.xlu0 %v4166, 112
      %v4203 = vpop.permute.xlu0 %4202
      %4204 = vrot.lane.b32.xlu0 %v4167, 112
      %v4205 = vpop.permute.xlu0 %4204
      %4206 = vrot.lane.b32.xlu0 %v4168, 112
      %v4207 = vpop.permute.xlu0 %4206
      %4208 = vrot.lane.b32.xlu0 %v4169, 112
      %v4209 = vpop.permute.xlu0 %4208
      %4210 = vrot.lane.b32.xlu0 %v4170, 112
      %v4211 = vpop.permute.xlu0 %4210
      %4212 = vrot.lane.b32.xlu0 %v4171, 112
      %v4213 = vpop.permute.xlu0 %4212
      %4214 = vrot.lane.b32.xlu0 %v4172, 112
      %v4215 = vpop.permute.xlu0 %4214
      %4216 = vrot.lane.b32.xlu0 %v4173, 112
      %v4217 = vpop.permute.xlu0 %4216
      %4218 = vrot.lane.b32.xlu0 %v4174, 112
      %v4219 = vpop.permute.xlu0 %4218
      %4220 = vrot.lane.b32.xlu0 %v4175, 112
      %v4221 = vpop.permute.xlu0 %4220
      %4222 = vrot.lane.b32.xlu0 %v4176, 112
      %v4223 = vpop.permute.xlu0 %4222
      %4224 = vrot.lane.b32.xlu0 %v4177, 112
      %v4225 = vpop.permute.xlu0 %4224
      %v4242 = vadd.f32 %v4082, %v4195
      %v4243 = vadd.f32 %v4083, %v4197
      %v4244 = vadd.f32 %v4084, %v4199
      %v4245 = vadd.f32 %v4085, %v4201
      %v4246 = vadd.f32 %v4086, %v4203
      %v4247 = vadd.f32 %v4087, %v4205
      %v4248 = vadd.f32 %v4088, %v4207
      %v4249 = vadd.f32 %v4089, %v4209
      %v4250 = vadd.f32 %v4090, %v4211
      %v4251 = vadd.f32 %v4091, %v4213
      %v4252 = vadd.f32 %v4092, %v4215
      %v4253 = vadd.f32 %v4093, %v4217
      %v4254 = vadd.f32 %v4094, %v4219
      %v4255 = vadd.f32 %v4095, %v4221
      %v4256 = vadd.f32 %v4096, %v4223
      %v4257 = vadd.f32 %v4097, %v4225
      %4258 = vset.pattern.permute.xlu0 3
      %4259 = vperm.xlu0 %4258, %v3633
      %v4260 = vpop.permute.xlu0 %4259
      %4262 = vset.pattern.permute.xlu0 3
      %4263 = vperm.xlu0 %4262, %v3634
      %v4264 = vpop.permute.xlu0 %4263
      %4266 = vset.pattern.permute.xlu0 3
      %4267 = vperm.xlu0 %4266, %v3635
      %v4268 = vpop.permute.xlu0 %4267
      %4270 = vset.pattern.permute.xlu0 3
      %4271 = vperm.xlu0 %4270, %v3636
      %v4272 = vpop.permute.xlu0 %4271
      %4274 = vset.pattern.permute.xlu0 3
      %4275 = vperm.xlu0 %4274, %v3637
      %v4276 = vpop.permute.xlu0 %4275
      %4278 = vset.pattern.permute.xlu0 3
      %4279 = vperm.xlu0 %4278, %v3638
      %v4280 = vpop.permute.xlu0 %4279
      %4282 = vset.pattern.permute.xlu0 3
      %4283 = vperm.xlu0 %4282, %v3639
      %v4284 = vpop.permute.xlu0 %4283
      %4286 = vset.pattern.permute.xlu0 3
      %4287 = vperm.xlu0 %4286, %v3640
      %v4288 = vpop.permute.xlu0 %4287
      %4290 = vset.pattern.permute.xlu0 3
      %4291 = vperm.xlu0 %4290, %v3641
      %v4292 = vpop.permute.xlu0 %4291
      %4294 = vset.pattern.permute.xlu0 3
      %4295 = vperm.xlu0 %4294, %v3642
      %v4296 = vpop.permute.xlu0 %4295
      %4298 = vset.pattern.permute.xlu0 3
      %4299 = vperm.xlu0 %4298, %v3643
      %v4300 = vpop.permute.xlu0 %4299
      %4302 = vset.pattern.permute.xlu0 3
      %4303 = vperm.xlu0 %4302, %v3644
      %v4304 = vpop.permute.xlu0 %4303
      %4306 = vset.pattern.permute.xlu0 3
      %4307 = vperm.xlu0 %4306, %v3645
      %v4308 = vpop.permute.xlu0 %4307
      %4310 = vset.pattern.permute.xlu0 3
      %4311 = vperm.xlu0 %4310, %v3646
      %v4312 = vpop.permute.xlu0 %4311
      %4314 = vset.pattern.permute.xlu0 3
      %4315 = vperm.xlu0 %4314, %v3647
      %v4316 = vpop.permute.xlu0 %4315
      %4318 = vset.pattern.permute.xlu0 3
      %4319 = vperm.xlu0 %4318, %v3648
      %v4320 = vpop.permute.xlu0 %4319
      %v4322 = vmul.f32 %v3764, %v4260
      %v4323 = vmul.f32 %v3769, %v4264
      %v4324 = vmul.f32 %v3774, %v4268
      %v4325 = vmul.f32 %v3779, %v4272
      %v4326 = vmul.f32 %v3784, %v4276
      %v4327 = vmul.f32 %v3789, %v4280
      %v4328 = vmul.f32 %v3794, %v4284
      %v4329 = vmul.f32 %v3799, %v4288
      %v4330 = vmul.f32 %v3804, %v4292
      %v4331 = vmul.f32 %v3809, %v4296
      %v4332 = vmul.f32 %v3814, %v4300
      %v4333 = vmul.f32 %v3819, %v4304
      %v4334 = vmul.f32 %v3824, %v4308
      %v4335 = vmul.f32 %v3829, %v4312
      %v4336 = vmul.f32 %v3834, %v4316
      %v4337 = vmul.f32 %v3839, %v4320
      %4354 = vrot.lane.b32.xlu0 %v4322, 104
      %v4355 = vpop.permute.xlu0 %4354
      %4356 = vrot.lane.b32.xlu0 %v4323, 104
      %v4357 = vpop.permute.xlu0 %4356
      %4358 = vrot.lane.b32.xlu0 %v4324, 104
      %v4359 = vpop.permute.xlu0 %4358
      %4360 = vrot.lane.b32.xlu0 %v4325, 104
      %v4361 = vpop.permute.xlu0 %4360
      %4362 = vrot.lane.b32.xlu0 %v4326, 104
      %v4363 = vpop.permute.xlu0 %4362
      %4364 = vrot.lane.b32.xlu0 %v4327, 104
      %v4365 = vpop.permute.xlu0 %4364
      %4366 = vrot.lane.b32.xlu0 %v4328, 104
      %v4367 = vpop.permute.xlu0 %4366
      %4368 = vrot.lane.b32.xlu0 %v4329, 104
      %v4369 = vpop.permute.xlu0 %4368
      %4370 = vrot.lane.b32.xlu0 %v4330, 104
      %v4371 = vpop.permute.xlu0 %4370
      %4372 = vrot.lane.b32.xlu0 %v4331, 104
      %v4373 = vpop.permute.xlu0 %4372
      %4374 = vrot.lane.b32.xlu0 %v4332, 104
      %v4375 = vpop.permute.xlu0 %4374
      %4376 = vrot.lane.b32.xlu0 %v4333, 104
      %v4377 = vpop.permute.xlu0 %4376
      %4378 = vrot.lane.b32.xlu0 %v4334, 104
      %v4379 = vpop.permute.xlu0 %4378
      %4380 = vrot.lane.b32.xlu0 %v4335, 104
      %v4381 = vpop.permute.xlu0 %4380
      %4382 = vrot.lane.b32.xlu0 %v4336, 104
      %v4383 = vpop.permute.xlu0 %4382
      %4384 = vrot.lane.b32.xlu0 %v4337, 104
      %v4385 = vpop.permute.xlu0 %4384
      %v4402 = vadd.f32 %v4242, %v4355
      %v4403 = vadd.f32 %v4243, %v4357
      %v4404 = vadd.f32 %v4244, %v4359
      %v4405 = vadd.f32 %v4245, %v4361
      %v4406 = vadd.f32 %v4246, %v4363
      %v4407 = vadd.f32 %v4247, %v4365
      %v4408 = vadd.f32 %v4248, %v4367
      %v4409 = vadd.f32 %v4249, %v4369
      %v4410 = vadd.f32 %v4250, %v4371
      %v4411 = vadd.f32 %v4251, %v4373
      %v4412 = vadd.f32 %v4252, %v4375
      %v4413 = vadd.f32 %v4253, %v4377
      %v4414 = vadd.f32 %v4254, %v4379
      %v4415 = vadd.f32 %v4255, %v4381
      %v4416 = vadd.f32 %v4256, %v4383
      %v4417 = vadd.f32 %v4257, %v4385
      %4418 = vset.pattern.permute.xlu0 4
      %4419 = vperm.xlu0 %4418, %v3633
      %v4420 = vpop.permute.xlu0 %4419
      %4422 = vset.pattern.permute.xlu0 4
      %4423 = vperm.xlu0 %4422, %v3634
      %v4424 = vpop.permute.xlu0 %4423
      %4426 = vset.pattern.permute.xlu0 4
      %4427 = vperm.xlu0 %4426, %v3635
      %v4428 = vpop.permute.xlu0 %4427
      %4430 = vset.pattern.permute.xlu0 4
      %4431 = vperm.xlu0 %4430, %v3636
      %v4432 = vpop.permute.xlu0 %4431
      %4434 = vset.pattern.permute.xlu0 4
      %4435 = vperm.xlu0 %4434, %v3637
      %v4436 = vpop.permute.xlu0 %4435
      %4438 = vset.pattern.permute.xlu0 4
      %4439 = vperm.xlu0 %4438, %v3638
      %v4440 = vpop.permute.xlu0 %4439
      %4442 = vset.pattern.permute.xlu0 4
      %4443 = vperm.xlu0 %4442, %v3639
      %v4444 = vpop.permute.xlu0 %4443
      %4446 = vset.pattern.permute.xlu0 4
      %4447 = vperm.xlu0 %4446, %v3640
      %v4448 = vpop.permute.xlu0 %4447
      %4450 = vset.pattern.permute.xlu0 4
      %4451 = vperm.xlu0 %4450, %v3641
      %v4452 = vpop.permute.xlu0 %4451
      %4454 = vset.pattern.permute.xlu0 4
      %4455 = vperm.xlu0 %4454, %v3642
      %v4456 = vpop.permute.xlu0 %4455
      %4458 = vset.pattern.permute.xlu0 4
      %4459 = vperm.xlu0 %4458, %v3643
      %v4460 = vpop.permute.xlu0 %4459
      %4462 = vset.pattern.permute.xlu0 4
      %4463 = vperm.xlu0 %4462, %v3644
      %v4464 = vpop.permute.xlu0 %4463
      %4466 = vset.pattern.permute.xlu0 4
      %4467 = vperm.xlu0 %4466, %v3645
      %v4468 = vpop.permute.xlu0 %4467
      %4470 = vset.pattern.permute.xlu0 4
      %4471 = vperm.xlu0 %4470, %v3646
      %v4472 = vpop.permute.xlu0 %4471
      %4474 = vset.pattern.permute.xlu0 4
      %4475 = vperm.xlu0 %4474, %v3647
      %v4476 = vpop.permute.xlu0 %4475
      %4478 = vset.pattern.permute.xlu0 4
      %4479 = vperm.xlu0 %4478, %v3648
      %v4480 = vpop.permute.xlu0 %4479
      %v4482 = vmul.f32 %v3764, %v4420
      %v4483 = vmul.f32 %v3769, %v4424
      %v4484 = vmul.f32 %v3774, %v4428
      %v4485 = vmul.f32 %v3779, %v4432
      %v4486 = vmul.f32 %v3784, %v4436
      %v4487 = vmul.f32 %v3789, %v4440
      %v4488 = vmul.f32 %v3794, %v4444
      %v4489 = vmul.f32 %v3799, %v4448
      %v4490 = vmul.f32 %v3804, %v4452
      %v4491 = vmul.f32 %v3809, %v4456
      %v4492 = vmul.f32 %v3814, %v4460
      %v4493 = vmul.f32 %v3819, %v4464
      %v4494 = vmul.f32 %v3824, %v4468
      %v4495 = vmul.f32 %v3829, %v4472
      %v4496 = vmul.f32 %v3834, %v4476
      %v4497 = vmul.f32 %v3839, %v4480
      %4514 = vrot.lane.b32.xlu0 %v4482, 96
      %v4515 = vpop.permute.xlu0 %4514
      %4516 = vrot.lane.b32.xlu0 %v4483, 96
      %v4517 = vpop.permute.xlu0 %4516
      %4518 = vrot.lane.b32.xlu0 %v4484, 96
      %v4519 = vpop.permute.xlu0 %4518
      %4520 = vrot.lane.b32.xlu0 %v4485, 96
      %v4521 = vpop.permute.xlu0 %4520
      %4522 = vrot.lane.b32.xlu0 %v4486, 96
      %v4523 = vpop.permute.xlu0 %4522
      %4524 = vrot.lane.b32.xlu0 %v4487, 96
      %v4525 = vpop.permute.xlu0 %4524
      %4526 = vrot.lane.b32.xlu0 %v4488, 96
      %v4527 = vpop.permute.xlu0 %4526
      %4528 = vrot.lane.b32.xlu0 %v4489, 96
      %v4529 = vpop.permute.xlu0 %4528
      %4530 = vrot.lane.b32.xlu0 %v4490, 96
      %v4531 = vpop.permute.xlu0 %4530
      %4532 = vrot.lane.b32.xlu0 %v4491, 96
      %v4533 = vpop.permute.xlu0 %4532
      %4534 = vrot.lane.b32.xlu0 %v4492, 96
      %v4535 = vpop.permute.xlu0 %4534
      %4536 = vrot.lane.b32.xlu0 %v4493, 96
      %v4537 = vpop.permute.xlu0 %4536
      %4538 = vrot.lane.b32.xlu0 %v4494, 96
      %v4539 = vpop.permute.xlu0 %4538
      %4540 = vrot.lane.b32.xlu0 %v4495, 96
      %v4541 = vpop.permute.xlu0 %4540
      %4542 = vrot.lane.b32.xlu0 %v4496, 96
      %v4543 = vpop.permute.xlu0 %4542
      %4544 = vrot.lane.b32.xlu0 %v4497, 96
      %v4545 = vpop.permute.xlu0 %4544
      %v4562 = vadd.f32 %v4402, %v4515
      %v4563 = vadd.f32 %v4403, %v4517
      %v4564 = vadd.f32 %v4404, %v4519
      %v4565 = vadd.f32 %v4405, %v4521
      %v4566 = vadd.f32 %v4406, %v4523
      %v4567 = vadd.f32 %v4407, %v4525
      %v4568 = vadd.f32 %v4408, %v4527
      %v4569 = vadd.f32 %v4409, %v4529
      %v4570 = vadd.f32 %v4410, %v4531
      %v4571 = vadd.f32 %v4411, %v4533
      %v4572 = vadd.f32 %v4412, %v4535
      %v4573 = vadd.f32 %v4413, %v4537
      %v4574 = vadd.f32 %v4414, %v4539
      %v4575 = vadd.f32 %v4415, %v4541
      %v4576 = vadd.f32 %v4416, %v4543
      %v4577 = vadd.f32 %v4417, %v4545
      %4578 = vset.pattern.permute.xlu0 5
      %4579 = vperm.xlu0 %4578, %v3633
      %v4580 = vpop.permute.xlu0 %4579
      %4582 = vset.pattern.permute.xlu0 5
      %4583 = vperm.xlu0 %4582, %v3634
      %v4584 = vpop.permute.xlu0 %4583
      %4586 = vset.pattern.permute.xlu0 5
      %4587 = vperm.xlu0 %4586, %v3635
      %v4588 = vpop.permute.xlu0 %4587
      %4590 = vset.pattern.permute.xlu0 5
      %4591 = vperm.xlu0 %4590, %v3636
      %v4592 = vpop.permute.xlu0 %4591
      %4594 = vset.pattern.permute.xlu0 5
      %4595 = vperm.xlu0 %4594, %v3637
      %v4596 = vpop.permute.xlu0 %4595
      %4598 = vset.pattern.permute.xlu0 5
      %4599 = vperm.xlu0 %4598, %v3638
      %v4600 = vpop.permute.xlu0 %4599
      %4602 = vset.pattern.permute.xlu0 5
      %4603 = vperm.xlu0 %4602, %v3639
      %v4604 = vpop.permute.xlu0 %4603
      %4606 = vset.pattern.permute.xlu0 5
      %4607 = vperm.xlu0 %4606, %v3640
      %v4608 = vpop.permute.xlu0 %4607
      %4610 = vset.pattern.permute.xlu0 5
      %4611 = vperm.xlu0 %4610, %v3641
      %v4612 = vpop.permute.xlu0 %4611
      %4614 = vset.pattern.permute.xlu0 5
      %4615 = vperm.xlu0 %4614, %v3642
      %v4616 = vpop.permute.xlu0 %4615
      %4618 = vset.pattern.permute.xlu0 5
      %4619 = vperm.xlu0 %4618, %v3643
      %v4620 = vpop.permute.xlu0 %4619
      %4622 = vset.pattern.permute.xlu0 5
      %4623 = vperm.xlu0 %4622, %v3644
      %v4624 = vpop.permute.xlu0 %4623
      %4626 = vset.pattern.permute.xlu0 5
      %4627 = vperm.xlu0 %4626, %v3645
      %v4628 = vpop.permute.xlu0 %4627
      %4630 = vset.pattern.permute.xlu0 5
      %4631 = vperm.xlu0 %4630, %v3646
      %v4632 = vpop.permute.xlu0 %4631
      %4634 = vset.pattern.permute.xlu0 5
      %4635 = vperm.xlu0 %4634, %v3647
      %v4636 = vpop.permute.xlu0 %4635
      %4638 = vset.pattern.permute.xlu0 5
      %4639 = vperm.xlu0 %4638, %v3648
      %v4640 = vpop.permute.xlu0 %4639
      %v4642 = vmul.f32 %v3764, %v4580
      %v4643 = vmul.f32 %v3769, %v4584
      %v4644 = vmul.f32 %v3774, %v4588
      %v4645 = vmul.f32 %v3779, %v4592
      %v4646 = vmul.f32 %v3784, %v4596
      %v4647 = vmul.f32 %v3789, %v4600
      %v4648 = vmul.f32 %v3794, %v4604
      %v4649 = vmul.f32 %v3799, %v4608
      %v4650 = vmul.f32 %v3804, %v4612
      %v4651 = vmul.f32 %v3809, %v4616
      %v4652 = vmul.f32 %v3814, %v4620
      %v4653 = vmul.f32 %v3819, %v4624
      %v4654 = vmul.f32 %v3824, %v4628
      %v4655 = vmul.f32 %v3829, %v4632
      %v4656 = vmul.f32 %v3834, %v4636
      %v4657 = vmul.f32 %v3839, %v4640
      %4674 = vrot.lane.b32.xlu0 %v4642, 88
      %v4675 = vpop.permute.xlu0 %4674
      %4676 = vrot.lane.b32.xlu0 %v4643, 88
      %v4677 = vpop.permute.xlu0 %4676
      %4678 = vrot.lane.b32.xlu0 %v4644, 88
      %v4679 = vpop.permute.xlu0 %4678
      %4680 = vrot.lane.b32.xlu0 %v4645, 88
      %v4681 = vpop.permute.xlu0 %4680
      %4682 = vrot.lane.b32.xlu0 %v4646, 88
      %v4683 = vpop.permute.xlu0 %4682
      %4684 = vrot.lane.b32.xlu0 %v4647, 88
      %v4685 = vpop.permute.xlu0 %4684
      %4686 = vrot.lane.b32.xlu0 %v4648, 88
      %v4687 = vpop.permute.xlu0 %4686
      %4688 = vrot.lane.b32.xlu0 %v4649, 88
      %v4689 = vpop.permute.xlu0 %4688
      %4690 = vrot.lane.b32.xlu0 %v4650, 88
      %v4691 = vpop.permute.xlu0 %4690
      %4692 = vrot.lane.b32.xlu0 %v4651, 88
      %v4693 = vpop.permute.xlu0 %4692
      %4694 = vrot.lane.b32.xlu0 %v4652, 88
      %v4695 = vpop.permute.xlu0 %4694
      %4696 = vrot.lane.b32.xlu0 %v4653, 88
      %v4697 = vpop.permute.xlu0 %4696
      %4698 = vrot.lane.b32.xlu0 %v4654, 88
      %v4699 = vpop.permute.xlu0 %4698
      %4700 = vrot.lane.b32.xlu0 %v4655, 88
      %v4701 = vpop.permute.xlu0 %4700
      %4702 = vrot.lane.b32.xlu0 %v4656, 88
      %v4703 = vpop.permute.xlu0 %4702
      %4704 = vrot.lane.b32.xlu0 %v4657, 88
      %v4705 = vpop.permute.xlu0 %4704
      %v4722 = vadd.f32 %v4562, %v4675
      %v4723 = vadd.f32 %v4563, %v4677
      %v4724 = vadd.f32 %v4564, %v4679
      %v4725 = vadd.f32 %v4565, %v4681
      %v4726 = vadd.f32 %v4566, %v4683
      %v4727 = vadd.f32 %v4567, %v4685
      %v4728 = vadd.f32 %v4568, %v4687
      %v4729 = vadd.f32 %v4569, %v4689
      %v4730 = vadd.f32 %v4570, %v4691
      %v4731 = vadd.f32 %v4571, %v4693
      %v4732 = vadd.f32 %v4572, %v4695
      %v4733 = vadd.f32 %v4573, %v4697
      %v4734 = vadd.f32 %v4574, %v4699
      %v4735 = vadd.f32 %v4575, %v4701
      %v4736 = vadd.f32 %v4576, %v4703
      %v4737 = vadd.f32 %v4577, %v4705
      %s4738 = scalar_lea.vmem %s194, 384
      %4739 = vst.msk [vmem:[%s4738] sm:$0xff] %vm229, %v4722
      %4740 = vst.msk [vmem:[%s4738 + $0x8] sm:$0xff] %vm229, %v4723
      %4741 = vst.msk [vmem:[%s4738 + $0x10] sm:$0xff] %vm229, %v4724
      %4742 = vst.msk [vmem:[%s4738 + $0x18] sm:$0xff] %vm229, %v4725
      %4743 = vst.msk [vmem:[%s4738 + $0x20] sm:$0xff] %vm229, %v4726
      %4744 = vst.msk [vmem:[%s4738 + $0x28] sm:$0xff] %vm229, %v4727
      %4745 = vst.msk [vmem:[%s4738 + $0x30] sm:$0xff] %vm229, %v4728
      %4746 = vst.msk [vmem:[%s4738 + $0x38] sm:$0xff] %vm229, %v4729
      %4747 = vst.msk [vmem:[%s4738 + $0x40] sm:$0xff] %vm229, %v4730
      %4748 = vst.msk [vmem:[%s4738 + $0x48] sm:$0xff] %vm229, %v4731
      %4749 = vst.msk [vmem:[%s4738 + $0x50] sm:$0xff] %vm229, %v4732
      %4750 = vst.msk [vmem:[%s4738 + $0x58] sm:$0xff] %vm229, %v4733
      %4751 = vst.msk [vmem:[%s4738 + $0x60] sm:$0xff] %vm229, %v4734
      %4752 = vst.msk [vmem:[%s4738 + $0x68] sm:$0xff] %vm229, %v4735
      %4753 = vst.msk [vmem:[%s4738 + $0x70] sm:$0xff] %vm229, %v4736
      %4754 = vst.msk [vmem:[%s4738 + $0x78] sm:$0xff] %vm229, %v4737
      %s4755 = smul.u32 64, %s14
      %p4756 = scmp.lt.s32.totalorder %s4755, 127
      %s4757 = scalar_select %p4756, %s4755, 127
      %s4758 = smul.addr %s4757, 8
      %s4759 = scalar_lea.vmem %s3, %s4758
      // Predicated region
      $region33: #{tpu_custom_call.1} parent=31 // pred_check
        %p4760 = pneg %p105
      $region34: #{tpu_custom_call.1} parent=31 // pred_check_branch
        %4762 = sbr.rel (%p4760) target = $region36
      $region35: #{tpu_custom_call.1} parent=31 // pred_region
        %s4763 = smul.u32 64, %s14
      $region36: #{tpu_custom_call.1} parent=31 // pred_fallthru
        _
    $region32: #{tpu_custom_call.1} parent=5 // pred_fallthru
      _
    %p4764 = scmp.le.s32.totalorder 2, %s9
    // Predicated region
    $region37: #{tpu_custom_call.1} parent=5 // pred_check
      %p4765 = pneg %p4764
    $region38: #{tpu_custom_call.1} parent=5 // pred_check_branch
      %4767 = sbr.rel (%p4765) target = $region40
    $region39: #{tpu_custom_call.1} parent=5 // pred_region
      %s4768 = ssub.s32 %s9, 2
      // Predicated region
      $region41: #{tpu_custom_call.1} parent=39 // pred_check
        %p4769 = pneg %p111
      $region42: #{tpu_custom_call.1} parent=39 // pred_check_branch
        %4771 = sbr.rel (%p4769) target = $region44
      $region43: #{tpu_custom_call.1} parent=39 // pred_region
        %s4772 = smul.u32 64, %s15
        %p4773 = scmp.lt.s32.totalorder %s4772, 127
        %s4774 = scalar_select %p4773, %s4772, 127
        %s4775 = smul.addr %s4774, 8
        %s4776 = scalar_lea.vmem %s3, %s4775
      $region44: #{tpu_custom_call.1} parent=39 // pred_fallthru
        _
    $region40: #{tpu_custom_call.1} parent=5 // pred_fallthru
      _
  $region6: #{tpu_custom_call.1} parent=0 // loop_footer
    %s13 = sadd.s32 1, %s9
  $region7: #{tpu_custom_call.1} parent=0 // loop_footer_branch
    %8 = sbr.rel target = $region3
  $region8: #{tpu_custom_call.1} parent=0 // loop_exit
    _

</llo_original>
